<compile_context>
chip_gen: v5e
topology: v5e:2x2
jax: 0.10.0
libtpu: 0.0.40
codegen_flags: <defaults>
</compile_context>

<pallas_src>
import jax
import jax.numpy as jnp
from jax.experimental import pallas as pl
from jax.experimental.pallas import tpu as pltpu

BN_EPS = 1e-5


def _full_spec(shape):
    # Whole-array block (gridless pallas_call): index_map takes no grid args.
    return pl.BlockSpec(shape, lambda: (0,) * len(shape))


# ----------------------------- fused DownScale kernel -----------------------------
def _fused_downscale_kernel(x_ref, w1_ref, w2_ref, g1_ref, b1_ref, g2_ref, b2_ref,
                            o_ref, pad1_ref, col1_ref, pad2_ref, col2_ref):
    n, h, w, cin = x_ref.shape
    hp, wp = h // 2, w // 2
    mid = w1_ref.shape[1]
    cout = w2_ref.shape[1]
    m = n * hp * wp
    inv_m = 1.0 / float(m)
    cdt = col1_ref.dtype                      # bf16: MXU-native operand dtype

    # ---- MaxPool2d(kernel_size=2, stride=2), f32 ----
    x = x_ref[...]
    x = jnp.max(x.reshape(n, h, wp, 2, cin), axis=3)
    pooled = jnp.max(x.reshape(n, hp, 2, wp, cin), axis=2)       # (n, hp, wp, cin)

    # ---- conv1 "same" padding: zero ONLY the 1-px halo (4 thin slabs) ----
    zr1 = jnp.zeros((n, 1, wp + 2, cin), pad1_ref.dtype)
    zc1 = jnp.zeros((n, hp, 1, cin), pad1_ref.dtype)
    pad1_ref[:, 0:1, :, :] = zr1
    pad1_ref[:, hp + 1:hp + 2, :, :] = zr1
    pad1_ref[:, 1:hp + 1, 0:1, :] = zc1
    pad1_ref[:, 1:hp + 1, wp + 1:wp + 2, :] = zc1
    pad1_ref[:, 1:hp + 1, 1:wp + 1, :] = pooled

    # ---- conv1: ONE im2col matmul, K = 9*cin, bf16 operands, f32 accumulation ----
    for t in range(9):
        dy, dx = t // 3, t % 3
        col1_ref[:, :, :, t * cin:(t + 1) * cin] = (
            pad1_ref[:, dy:dy + hp, dx:dx + wp, :].astype(cdt))
    acc1 = jnp.dot(col1_ref[...].reshape(m, 9 * cin), w1_ref[...],
                   preferred_element_type=jnp.float32)            # (m, mid) f32

    # ---- BN1 (training-mode batch stats, single pass, f32) + ReLU ----
    mu1 = jnp.sum(acc1, axis=0, keepdims=True) * inv_m
    ex1 = jnp.sum(acc1 * acc1, axis=0, keepdims=True) * inv_m
    var1 = jnp.maximum(ex1 - mu1 * mu1, 0.0)
    sc1 = g1_ref[...] * jax.lax.rsqrt(var1 + BN_EPS)              # rsqrt -> EUP slot
    sh1 = b1_ref[...] - mu1 * sc1
    a1 = jnp.maximum(acc1 * sc1 + sh1, 0.0)                       # (m, mid) f32

    # ---- conv2 "same" padding (halo only), real mid-channel width (no 128 pad) ----
    zr2 = jnp.zeros((n, 1, wp + 2, mid), pad2_ref.dtype)
    zc2 = jnp.zeros((n, hp, 1, mid), pad2_ref.dtype)
    pad2_ref[:, 0:1, :, :] = zr2
    pad2_ref[:, hp + 1:hp + 2, :, :] = zr2
    pad2_ref[:, 1:hp + 1, 0:1, :] = zc2
    pad2_ref[:, 1:hp + 1, wp + 1:wp + 2, :] = zc2
    pad2_ref[:, 1:hp + 1, 1:wp + 1, :] = a1.reshape(n, hp, wp, mid)

    # ---- conv2: ONE im2col matmul, K = 9*mid, bf16 operands, f32 accumulation ----
    for t in range(9):
        dy, dx = t // 3, t % 3
        col2_ref[:, :, :, t * mid:(t + 1) * mid] = (
            pad2_ref[:, dy:dy + hp, dx:dx + wp, :].astype(cdt))
    acc2 = jnp.dot(col2_ref[...].reshape(m, 9 * mid), w2_ref[...],
                   preferred_element_type=jnp.float32)            # (m, cout) f32

    # ---- BN2 + ReLU, store un-inflated (m, cout) ----
    mu2 = jnp.sum(acc2, axis=0, keepdims=True) * inv_m
    ex2 = jnp.sum(acc2 * acc2, axis=0, keepdims=True) * inv_m
    var2 = jnp.maximum(ex2 - mu2 * mu2, 0.0)
    sc2 = g2_ref[...] * jax.lax.rsqrt(var2 + BN_EPS)
    sh2 = b2_ref[...] - mu2 * sc2
    o_ref[...] = jnp.maximum(acc2 * sc2 + sh2, 0.0)


# --------------------------------- wrapper / prep ---------------------------------
def make_params(w1_oihw, w2_oihw, g1, b1, g2, b2):
    """PyTorch OIHW conv weights / BN affine -> im2col-layout bf16 weights + f32 BN rows."""
    def im2col_weight(w_oihw):
        # (O, I, 3, 3) -> (3, 3, I, O) -> (9*I, O); row index = (dy*3 + dx)*I + i,
        # matching the lane order produced by the in-kernel col builds.
        o, i = int(w_oihw.shape[0]), int(w_oihw.shape[1])
        wt = jnp.transpose(w_oihw.astype(jnp.float32), (2, 3, 1, 0)).reshape(9 * i, o)
        return wt.astype(jnp.bfloat16)

    def vec(v):
        return v.astype(jnp.float32).reshape(1, -1)

    return {
        "w1": im2col_weight(w1_oihw),   # (9*in_ch,  mid_ch) bf16
        "w2": im2col_weight(w2_oihw),   # (9*mid_ch, out_ch) bf16
        "g1": vec(g1), "b1": vec(b1), "g2": vec(g2), "b2": vec(b2),
    }


def downscale_forward(x_nchw, params):
    n, cin, h, w = x_nchw.shape
    assert h % 2 == 0 and w % 2 == 0, "MaxPool2d(2): H and W must be even here"
    hp, wp = h // 2, w // 2
    mid = int(params["w1"].shape[1])
    out_ch = int(params["w2"].shape[1])
    m = n * hp * wp

    # TODO(synk): fold this NCHW->NHWC transpose (and the output transpose below)
    #             into the kernel / BlockSpecs instead of separate XLA ops.
    x = jnp.transpose(x_nchw, (0, 2, 3, 1)).astype(jnp.float32)

    in_arrays = (x, params["w1"], params["w2"],
                 params["g1"], params["b1"], params["g2"], params["b2"])
    out_shape = jax.ShapeDtypeStruct((m, out_ch), jnp.float32)

    y = pl.pallas_call(
        _fused_downscale_kernel,
        out_shape=out_shape,
        in_specs=[_full_spec(a.shape) for a in in_arrays],
        out_specs=_full_spec(out_shape.shape),
        scratch_shapes=[
            pltpu.VMEM((n, hp + 2, wp + 2, cin), jnp.float32),   # padded pooled input
            pltpu.VMEM((n, hp, wp, 9 * cin), jnp.bfloat16),      # conv1 im2col (bf16 MXU operand)
            pltpu.VMEM((n, hp + 2, wp + 2, mid), jnp.float32),   # padded conv1 activation
            pltpu.VMEM((n, hp, wp, 9 * mid), jnp.bfloat16),      # conv2 im2col (bf16 MXU operand)
        ],
    )(*in_arrays)

    # (m, out_ch) -> (n, hp, wp, out_ch) is a contiguous (free) reshape; return PyTorch NCHW.
    return jnp.transpose(y.reshape(n, hp, wp, out_ch), (0, 3, 1, 2))


# --------------------------------- pure-JAX reference ---------------------------------
def _reference_forward(x_nchw, w1, w2, g1, b1, g2, b2):
    x = jax.lax.reduce_window(x_nchw, -jnp.inf, jax.lax.max,
                              (1, 1, 2, 2), (1, 1, 2, 2), "VALID")

    def conv_bn_relu(inp, wt, g, b):
        y = jax.lax.conv_general_dilated(
            inp, wt, (1, 1), ((1, 1), (1, 1)),
            dimension_numbers=("NCHW", "OIHW", "NCHW"))
        mean = jnp.mean(y, axis=(0, 2, 3), keepdims=True)
        var = jnp.mean((y - mean) ** 2, axis=(0, 2, 3), keepdims=True)
        yh = (y - mean) / jnp.sqrt(var + BN_EPS)
        return jnp.maximum(yh * g.reshape(1, -1, 1, 1) + b.reshape(1, -1, 1, 1), 0.0)

    a1 = conv_bn_relu(x, w1, g1, b1)
    return conv_bn_relu(a1, w2, g2, b2)


# --------------------------------------- main ---------------------------------------
if __name__ == "__main__":
    key = jax.random.PRNGKey(0)
    k_x, k_w1, k_w2 = jax.random.split(key, 3)

    in_ch, out_ch = 4, 8              # DownScale(in_channel=4, out_channel=8); mid = out
    mid_ch = out_ch
    N, H, W = 2, 16, 16

    x = jax.random.normal(k_x, (N, in_ch, H, W), jnp.float32)
    w1 = 0.1 * jax.random.normal(k_w1, (mid_ch, in_ch, 3, 3), jnp.float32)
    w2 = 0.1 * jax.random.normal(k_w2, (out_ch, mid_ch, 3, 3), jnp.float32)
    g1 = jnp.ones((mid_ch,), jnp.float32)
    b1 = jnp.zeros((mid_ch,), jnp.float32)
    g2 = jnp.ones((out_ch,), jnp.float32)
    b2 = jnp.zeros((out_ch,), jnp.float32)

    params = make_params(w1, w2, g1, b1, g2, b2)

    out = downscale_forward(x, params)
    out = jax.block_until_ready(out)
    assert out.shape == (N, out_ch, H // 2, W // 2), out.shape

    ref = jax.block_until_ready(_reference_forward(x, w1, w2, g1, b1, g2, b2))
    err = float(jnp.max(jnp.abs(out - ref)))
    # bf16 matmul operands (f32 reference): expected max-abs error ~1e-2..4e-2 after two
    # BatchNorms; 1e-1 still catches any structural bug (wrong tap order / BN / pooling).
    assert err < 1e-1, f"max abs err vs reference: {err}"
    assert bool(jnp.all(jnp.isfinite(out)))

    print("KERNEL_OK")
</pallas_src>

<mosaic_0001>
module attributes {stable_mosaic.version = 11 : i64} {
  func.func @_fused_downscale_kernel(%arg0: memref<2x16x16x4xf32, #tpu.memory_space<vmem>>, %arg1: memref<36x8xbf16, #tpu.memory_space<vmem>>, %arg2: memref<72x8xbf16, #tpu.memory_space<vmem>>, %arg3: memref<1x8xf32, #tpu.memory_space<vmem>>, %arg4: memref<1x8xf32, #tpu.memory_space<vmem>>, %arg5: memref<1x8xf32, #tpu.memory_space<vmem>>, %arg6: memref<1x8xf32, #tpu.memory_space<vmem>>, %arg7: memref<128x8xf32, #tpu.memory_space<vmem>>, %arg8: memref<2x10x10x4xf32, #tpu.memory_space<vmem>>, %arg9: memref<2x8x8x36xbf16, #tpu.memory_space<vmem>>, %arg10: memref<2x10x10x8xf32, #tpu.memory_space<vmem>>, %arg11: memref<2x8x8x72xbf16, #tpu.memory_space<vmem>>) attributes {dimension_semantics = [], scalar_prefetch = 0 : i64, scratch_operands = 4 : i64, tpu.core_type = #tpu.core_type<tc>} {
    %c0 = arith.constant 0 : index
    %c0_0 = arith.constant 0 : index
    %c0_1 = arith.constant 0 : index
    %c0_2 = arith.constant 0 : index
    %0 = vector.load %arg0[%c0, %c0_0, %c0_1, %c0_2] : memref<2x16x16x4xf32, #tpu.memory_space<vmem>>, vector<2x16x16x4xf32>
    %1 = vector.shape_cast %0 : vector<2x16x16x4xf32> to vector<2x16x8x2x4xf32>
    %cst = arith.constant dense<0xFF800000> : vector<2x16x8x4xf32>
    %2 = vector.multi_reduction <maximumf>, %1, %cst [3] : vector<2x16x8x2x4xf32> to vector<2x16x8x4xf32>
    %3 = vector.shape_cast %2 : vector<2x16x8x4xf32> to vector<2x8x2x8x4xf32>
    %cst_3 = arith.constant dense<0xFF800000> : vector<2x8x8x4xf32>
    %4 = vector.multi_reduction <maximumf>, %3, %cst_3 [2] : vector<2x8x2x8x4xf32> to vector<2x8x8x4xf32>
    %cst_4 = arith.constant 0.000000e+00 : f32
    %5 = vector.broadcast %cst_4 : f32 to vector<2x1x10x4xf32>
    %cst_5 = arith.constant 0.000000e+00 : f32
    %6 = vector.broadcast %cst_5 : f32 to vector<2x8x1x4xf32>
    %c0_6 = arith.constant 0 : index
    %c0_7 = arith.constant 0 : index
    %c0_8 = arith.constant 0 : index
    %c0_9 = arith.constant 0 : index
    %7 = vector.load %arg8[%c0_6, %c0_7, %c0_8, %c0_9] : memref<2x10x10x4xf32, #tpu.memory_space<vmem>>, vector<2x1x10x4xf32>
    tpu.vector_store %arg8[%c0_6, %c0_7, %c0_8, %c0_9], %5 {strides = array<i32>} : memref<2x10x10x4xf32, #tpu.memory_space<vmem>>, vector<2x1x10x4xf32>,
    %c0_10 = arith.constant 0 : index
    %c9 = arith.constant 9 : index
    %c0_11 = arith.constant 0 : index
    %c0_12 = arith.constant 0 : index
    %8 = vector.load %arg8[%c0_10, %c9, %c0_11, %c0_12] : memref<2x10x10x4xf32, #tpu.memory_space<vmem>>, vector<2x1x10x4xf32>
    tpu.vector_store %arg8[%c0_10, %c9, %c0_11, %c0_12], %5 {strides = array<i32>} : memref<2x10x10x4xf32, #tpu.memory_space<vmem>>, vector<2x1x10x4xf32>,
    %c0_13 = arith.constant 0 : index
    %c1 = arith.constant 1 : index
    %c0_14 = arith.constant 0 : index
    %c0_15 = arith.constant 0 : index
    %9 = vector.load %arg8[%c0_13, %c1, %c0_14, %c0_15] : memref<2x10x10x4xf32, #tpu.memory_space<vmem>>, vector<2x8x1x4xf32>
    tpu.vector_store %arg8[%c0_13, %c1, %c0_14, %c0_15], %6 {strides = array<i32>} : memref<2x10x10x4xf32, #tpu.memory_space<vmem>>, vector<2x8x1x4xf32>,
    %c0_16 = arith.constant 0 : index
    %c1_17 = arith.constant 1 : index
    %c9_18 = arith.constant 9 : index
    %c0_19 = arith.constant 0 : index
    %10 = vector.load %arg8[%c0_16, %c1_17, %c9_18, %c0_19] : memref<2x10x10x4xf32, #tpu.memory_space<vmem>>, vector<2x8x1x4xf32>
    tpu.vector_store %arg8[%c0_16, %c1_17, %c9_18, %c0_19], %6 {strides = array<i32>} : memref<2x10x10x4xf32, #tpu.memory_space<vmem>>, vector<2x8x1x4xf32>,
    %c0_20 = arith.constant 0 : index
    %c1_21 = arith.constant 1 : index
    %c1_22 = arith.constant 1 : index
    %c0_23 = arith.constant 0 : index
    %11 = vector.load %arg8[%c0_20, %c1_21, %c1_22, %c0_23] : memref<2x10x10x4xf32, #tpu.memory_space<vmem>>, vector<2x8x8x4xf32>
    tpu.vector_store %arg8[%c0_20, %c1_21, %c1_22, %c0_23], %4 {strides = array<i32>} : memref<2x10x10x4xf32, #tpu.memory_space<vmem>>, vector<2x8x8x4xf32>,
    %c0_24 = arith.constant 0 : index
    %c0_25 = arith.constant 0 : index
    %c0_26 = arith.constant 0 : index
    %c0_27 = arith.constant 0 : index
    %12 = vector.load %arg8[%c0_24, %c0_25, %c0_26, %c0_27] : memref<2x10x10x4xf32, #tpu.memory_space<vmem>>, vector<2x8x8x4xf32>
    %13 = arith.truncf %12 : vector<2x8x8x4xf32> to vector<2x8x8x4xbf16>
    %c0_28 = arith.constant 0 : index
    %c0_29 = arith.constant 0 : index
    %c0_30 = arith.constant 0 : index
    %c0_31 = arith.constant 0 : index
    %14 = vector.load %arg9[%c0_28, %c0_29, %c0_30, %c0_31] : memref<2x8x8x36xbf16, #tpu.memory_space<vmem>>, vector<2x8x8x4xbf16>
    tpu.vector_store %arg9[%c0_28, %c0_29, %c0_30, %c0_31], %13 {strides = array<i32>} : memref<2x8x8x36xbf16, #tpu.memory_space<vmem>>, vector<2x8x8x4xbf16>,
    %c0_32 = arith.constant 0 : index
    %c0_33 = arith.constant 0 : index
    %c1_34 = arith.constant 1 : index
    %c0_35 = arith.constant 0 : index
    %15 = vector.load %arg8[%c0_32, %c0_33, %c1_34, %c0_35] : memref<2x10x10x4xf32, #tpu.memory_space<vmem>>, vector<2x8x8x4xf32>
    %16 = arith.truncf %15 : vector<2x8x8x4xf32> to vector<2x8x8x4xbf16>
    %c0_36 = arith.constant 0 : index
    %c0_37 = arith.constant 0 : index
    %c0_38 = arith.constant 0 : index
    %c4 = arith.constant 4 : index
    %17 = vector.load %arg9[%c0_36, %c0_37, %c0_38, %c4] : memref<2x8x8x36xbf16, #tpu.memory_space<vmem>>, vector<2x8x8x4xbf16>
    tpu.vector_store %arg9[%c0_36, %c0_37, %c0_38, %c4], %16 {strides = array<i32>} : memref<2x8x8x36xbf16, #tpu.memory_space<vmem>>, vector<2x8x8x4xbf16>,
    %c0_39 = arith.constant 0 : index
    %c0_40 = arith.constant 0 : index
    %c2 = arith.constant 2 : index
    %c0_41 = arith.constant 0 : index
    %18 = vector.load %arg8[%c0_39, %c0_40, %c2, %c0_41] : memref<2x10x10x4xf32, #tpu.memory_space<vmem>>, vector<2x8x8x4xf32>
    %19 = arith.truncf %18 : vector<2x8x8x4xf32> to vector<2x8x8x4xbf16>
    %c0_42 = arith.constant 0 : index
    %c0_43 = arith.constant 0 : index
    %c0_44 = arith.constant 0 : index
    %c8 = arith.constant 8 : index
    %20 = vector.load %arg9[%c0_42, %c0_43, %c0_44, %c8] : memref<2x8x8x36xbf16, #tpu.memory_space<vmem>>, vector<2x8x8x4xbf16>
    tpu.vector_store %arg9[%c0_42, %c0_43, %c0_44, %c8], %19 {strides = array<i32>} : memref<2x8x8x36xbf16, #tpu.memory_space<vmem>>, vector<2x8x8x4xbf16>,
    %c0_45 = arith.constant 0 : index
    %c1_46 = arith.constant 1 : index
    %c0_47 = arith.constant 0 : index
    %c0_48 = arith.constant 0 : index
    %21 = vector.load %arg8[%c0_45, %c1_46, %c0_47, %c0_48] : memref<2x10x10x4xf32, #tpu.memory_space<vmem>>, vector<2x8x8x4xf32>
    %22 = arith.truncf %21 : vector<2x8x8x4xf32> to vector<2x8x8x4xbf16>
    %c0_49 = arith.constant 0 : index
    %c0_50 = arith.constant 0 : index
    %c0_51 = arith.constant 0 : index
    %c12 = arith.constant 12 : index
    %23 = vector.load %arg9[%c0_49, %c0_50, %c0_51, %c12] : memref<2x8x8x36xbf16, #tpu.memory_space<vmem>>, vector<2x8x8x4xbf16>
    tpu.vector_store %arg9[%c0_49, %c0_50, %c0_51, %c12], %22 {strides = array<i32>} : memref<2x8x8x36xbf16, #tpu.memory_space<vmem>>, vector<2x8x8x4xbf16>,
    %c0_52 = arith.constant 0 : index
    %c1_53 = arith.constant 1 : index
    %c1_54 = arith.constant 1 : index
    %c0_55 = arith.constant 0 : index
    %24 = vector.load %arg8[%c0_52, %c1_53, %c1_54, %c0_55] : memref<2x10x10x4xf32, #tpu.memory_space<vmem>>, vector<2x8x8x4xf32>
    %25 = arith.truncf %24 : vector<2x8x8x4xf32> to vector<2x8x8x4xbf16>
    %c0_56 = arith.constant 0 : index
    %c0_57 = arith.constant 0 : index
    %c0_58 = arith.constant 0 : index
    %c16 = arith.constant 16 : index
    %26 = vector.load %arg9[%c0_56, %c0_57, %c0_58, %c16] : memref<2x8x8x36xbf16, #tpu.memory_space<vmem>>, vector<2x8x8x4xbf16>
    tpu.vector_store %arg9[%c0_56, %c0_57, %c0_58, %c16], %25 {strides = array<i32>} : memref<2x8x8x36xbf16, #tpu.memory_space<vmem>>, vector<2x8x8x4xbf16>,
    %c0_59 = arith.constant 0 : index
    %c1_60 = arith.constant 1 : index
    %c2_61 = arith.constant 2 : index
    %c0_62 = arith.constant 0 : index
    %27 = vector.load %arg8[%c0_59, %c1_60, %c2_61, %c0_62] : memref<2x10x10x4xf32, #tpu.memory_space<vmem>>, vector<2x8x8x4xf32>
    %28 = arith.truncf %27 : vector<2x8x8x4xf32> to vector<2x8x8x4xbf16>
    %c0_63 = arith.constant 0 : index
    %c0_64 = arith.constant 0 : index
    %c0_65 = arith.constant 0 : index
    %c20 = arith.constant 20 : index
    %29 = vector.load %arg9[%c0_63, %c0_64, %c0_65, %c20] : memref<2x8x8x36xbf16, #tpu.memory_space<vmem>>, vector<2x8x8x4xbf16>
    tpu.vector_store %arg9[%c0_63, %c0_64, %c0_65, %c20], %28 {strides = array<i32>} : memref<2x8x8x36xbf16, #tpu.memory_space<vmem>>, vector<2x8x8x4xbf16>,
    %c0_66 = arith.constant 0 : index
    %c2_67 = arith.constant 2 : index
    %c0_68 = arith.constant 0 : index
    %c0_69 = arith.constant 0 : index
    %30 = vector.load %arg8[%c0_66, %c2_67, %c0_68, %c0_69] : memref<2x10x10x4xf32, #tpu.memory_space<vmem>>, vector<2x8x8x4xf32>
    %31 = arith.truncf %30 : vector<2x8x8x4xf32> to vector<2x8x8x4xbf16>
    %c0_70 = arith.constant 0 : index
    %c0_71 = arith.constant 0 : index
    %c0_72 = arith.constant 0 : index
    %c24 = arith.constant 24 : index
    %32 = vector.load %arg9[%c0_70, %c0_71, %c0_72, %c24] : memref<2x8x8x36xbf16, #tpu.memory_space<vmem>>, vector<2x8x8x4xbf16>
    tpu.vector_store %arg9[%c0_70, %c0_71, %c0_72, %c24], %31 {strides = array<i32>} : memref<2x8x8x36xbf16, #tpu.memory_space<vmem>>, vector<2x8x8x4xbf16>,
    %c0_73 = arith.constant 0 : index
    %c2_74 = arith.constant 2 : index
    %c1_75 = arith.constant 1 : index
    %c0_76 = arith.constant 0 : index
    %33 = vector.load %arg8[%c0_73, %c2_74, %c1_75, %c0_76] : memref<2x10x10x4xf32, #tpu.memory_space<vmem>>, vector<2x8x8x4xf32>
    %34 = arith.truncf %33 : vector<2x8x8x4xf32> to vector<2x8x8x4xbf16>
    %c0_77 = arith.constant 0 : index
    %c0_78 = arith.constant 0 : index
    %c0_79 = arith.constant 0 : index
    %c28 = arith.constant 28 : index
    %35 = vector.load %arg9[%c0_77, %c0_78, %c0_79, %c28] : memref<2x8x8x36xbf16, #tpu.memory_space<vmem>>, vector<2x8x8x4xbf16>
    tpu.vector_store %arg9[%c0_77, %c0_78, %c0_79, %c28], %34 {strides = array<i32>} : memref<2x8x8x36xbf16, #tpu.memory_space<vmem>>, vector<2x8x8x4xbf16>,
    %c0_80 = arith.constant 0 : index
    %c2_81 = arith.constant 2 : index
    %c2_82 = arith.constant 2 : index
    %c0_83 = arith.constant 0 : index
    %36 = vector.load %arg8[%c0_80, %c2_81, %c2_82, %c0_83] : memref<2x10x10x4xf32, #tpu.memory_space<vmem>>, vector<2x8x8x4xf32>
    %37 = arith.truncf %36 : vector<2x8x8x4xf32> to vector<2x8x8x4xbf16>
    %c0_84 = arith.constant 0 : index
    %c0_85 = arith.constant 0 : index
    %c0_86 = arith.constant 0 : index
    %c32 = arith.constant 32 : index
    %38 = vector.load %arg9[%c0_84, %c0_85, %c0_86, %c32] : memref<2x8x8x36xbf16, #tpu.memory_space<vmem>>, vector<2x8x8x4xbf16>
    tpu.vector_store %arg9[%c0_84, %c0_85, %c0_86, %c32], %37 {strides = array<i32>} : memref<2x8x8x36xbf16, #tpu.memory_space<vmem>>, vector<2x8x8x4xbf16>,
    %c0_87 = arith.constant 0 : index
    %c0_88 = arith.constant 0 : index
    %c0_89 = arith.constant 0 : index
    %c0_90 = arith.constant 0 : index
    %39 = vector.load %arg9[%c0_87, %c0_88, %c0_89, %c0_90] : memref<2x8x8x36xbf16, #tpu.memory_space<vmem>>, vector<2x8x8x36xbf16>
    %40 = vector.shape_cast %39 : vector<2x8x8x36xbf16> to vector<128x36xbf16>
    %c0_91 = arith.constant 0 : index
    %c0_92 = arith.constant 0 : index
    %41 = vector.load %arg1[%c0_91, %c0_92] : memref<36x8xbf16, #tpu.memory_space<vmem>>, vector<36x8xbf16>
    %cst_93 = arith.constant dense<0.000000e+00> : vector<128x8xf32>
    %42 = tpu.matmul %40, %41, %cst_93 {dimension_numbers = #tpu.dot_dimension_numbers<[1], [0], [0], [1], [0, 0, 1, 1], [], []>} : vector<128x36xbf16>, vector<36x8xbf16>, vector<128x8xf32> -> vector<128x8xf32>
    %cst_94 = arith.constant dense<0.000000e+00> : vector<8xf32>
    %43 = vector.multi_reduction <add>, %42, %cst_94 [0] : vector<128x8xf32> to vector<8xf32>
    %44 = vector.shape_cast %43 : vector<8xf32> to vector<1x8xf32>
    %cst_95 = arith.constant 7.812500e-03 : f32
    %45 = vector.broadcast %cst_95 : f32 to vector<1x8xf32>
    %46 = arith.mulf %44, %45 : vector<1x8xf32>
    %47 = arith.mulf %42, %42 : vector<128x8xf32>
    %cst_96 = arith.constant dense<0.000000e+00> : vector<8xf32>
    %48 = vector.multi_reduction <add>, %47, %cst_96 [0] : vector<128x8xf32> to vector<8xf32>
    %49 = vector.shape_cast %48 : vector<8xf32> to vector<1x8xf32>
    %cst_97 = arith.constant 7.812500e-03 : f32
    %50 = vector.broadcast %cst_97 : f32 to vector<1x8xf32>
    %51 = arith.mulf %49, %50 : vector<1x8xf32>
    %52 = arith.mulf %46, %46 : vector<1x8xf32>
    %53 = arith.subf %51, %52 : vector<1x8xf32>
    %cst_98 = arith.constant 0.000000e+00 : f32
    %54 = vector.broadcast %cst_98 : f32 to vector<1x8xf32>
    %55 = arith.maximumf %53, %54 : vector<1x8xf32>
    %c0_99 = arith.constant 0 : index
    %c0_100 = arith.constant 0 : index
    %56 = vector.load %arg3[%c0_99, %c0_100] : memref<1x8xf32, #tpu.memory_space<vmem>>, vector<1x8xf32>
    %cst_101 = arith.constant 9.99999974E-6 : f32
    %57 = vector.broadcast %cst_101 : f32 to vector<1x8xf32>
    %58 = arith.addf %55, %57 : vector<1x8xf32>
    %59 = math.rsqrt %58 : vector<1x8xf32>
    %60 = arith.mulf %56, %59 : vector<1x8xf32>
    %c0_102 = arith.constant 0 : index
    %c0_103 = arith.constant 0 : index
    %61 = vector.load %arg4[%c0_102, %c0_103] : memref<1x8xf32, #tpu.memory_space<vmem>>, vector<1x8xf32>
    %62 = arith.mulf %46, %60 : vector<1x8xf32>
    %63 = arith.subf %61, %62 : vector<1x8xf32>
    %64 = vector.broadcast %60 : vector<1x8xf32> to vector<128x8xf32>
    %65 = arith.mulf %42, %64 : vector<128x8xf32>
    %66 = vector.broadcast %63 : vector<1x8xf32> to vector<128x8xf32>
    %67 = arith.addf %65, %66 : vector<128x8xf32>
    %cst_104 = arith.constant 0.000000e+00 : f32
    %68 = vector.broadcast %cst_104 : f32 to vector<128x8xf32>
    %69 = arith.maximumf %67, %68 : vector<128x8xf32>
    %cst_105 = arith.constant 0.000000e+00 : f32
    %70 = vector.broadcast %cst_105 : f32 to vector<2x1x10x8xf32>
    %cst_106 = arith.constant 0.000000e+00 : f32
    %71 = vector.broadcast %cst_106 : f32 to vector<2x8x1x8xf32>
    %c0_107 = arith.constant 0 : index
    %c0_108 = arith.constant 0 : index
    %c0_109 = arith.constant 0 : index
    %c0_110 = arith.constant 0 : index
    %72 = vector.load %arg10[%c0_107, %c0_108, %c0_109, %c0_110] : memref<2x10x10x8xf32, #tpu.memory_space<vmem>>, vector<2x1x10x8xf32>
    tpu.vector_store %arg10[%c0_107, %c0_108, %c0_109, %c0_110], %70 {strides = array<i32>} : memref<2x10x10x8xf32, #tpu.memory_space<vmem>>, vector<2x1x10x8xf32>,
    %c0_111 = arith.constant 0 : index
    %c9_112 = arith.constant 9 : index
    %c0_113 = arith.constant 0 : index
    %c0_114 = arith.constant 0 : index
    %73 = vector.load %arg10[%c0_111, %c9_112, %c0_113, %c0_114] : memref<2x10x10x8xf32, #tpu.memory_space<vmem>>, vector<2x1x10x8xf32>
    tpu.vector_store %arg10[%c0_111, %c9_112, %c0_113, %c0_114], %70 {strides = array<i32>} : memref<2x10x10x8xf32, #tpu.memory_space<vmem>>, vector<2x1x10x8xf32>,
    %c0_115 = arith.constant 0 : index
    %c1_116 = arith.constant 1 : index
    %c0_117 = arith.constant 0 : index
    %c0_118 = arith.constant 0 : index
    %74 = vector.load %arg10[%c0_115, %c1_116, %c0_117, %c0_118] : memref<2x10x10x8xf32, #tpu.memory_space<vmem>>, vector<2x8x1x8xf32>
    tpu.vector_store %arg10[%c0_115, %c1_116, %c0_117, %c0_118], %71 {strides = array<i32>} : memref<2x10x10x8xf32, #tpu.memory_space<vmem>>, vector<2x8x1x8xf32>,
    %c0_119 = arith.constant 0 : index
    %c1_120 = arith.constant 1 : index
    %c9_121 = arith.constant 9 : index
    %c0_122 = arith.constant 0 : index
    %75 = vector.load %arg10[%c0_119, %c1_120, %c9_121, %c0_122] : memref<2x10x10x8xf32, #tpu.memory_space<vmem>>, vector<2x8x1x8xf32>
    tpu.vector_store %arg10[%c0_119, %c1_120, %c9_121, %c0_122], %71 {strides = array<i32>} : memref<2x10x10x8xf32, #tpu.memory_space<vmem>>, vector<2x8x1x8xf32>,
    %76 = vector.shape_cast %69 : vector<128x8xf32> to vector<2x8x8x8xf32>
    %c0_123 = arith.constant 0 : index
    %c1_124 = arith.constant 1 : index
    %c1_125 = arith.constant 1 : index
    %c0_126 = arith.constant 0 : index
    %77 = vector.load %arg10[%c0_123, %c1_124, %c1_125, %c0_126] : memref<2x10x10x8xf32, #tpu.memory_space<vmem>>, vector<2x8x8x8xf32>
    tpu.vector_store %arg10[%c0_123, %c1_124, %c1_125, %c0_126], %76 {strides = array<i32>} : memref<2x10x10x8xf32, #tpu.memory_space<vmem>>, vector<2x8x8x8xf32>,
    %c0_127 = arith.constant 0 : index
    %c0_128 = arith.constant 0 : index
    %c0_129 = arith.constant 0 : index
    %c0_130 = arith.constant 0 : index
    %78 = vector.load %arg10[%c0_127, %c0_128, %c0_129, %c0_130] : memref<2x10x10x8xf32, #tpu.memory_space<vmem>>, vector<2x8x8x8xf32>
    %79 = arith.truncf %78 : vector<2x8x8x8xf32> to vector<2x8x8x8xbf16>
    %c0_131 = arith.constant 0 : index
    %c0_132 = arith.constant 0 : index
    %c0_133 = arith.constant 0 : index
    %c0_134 = arith.constant 0 : index
    %80 = vector.load %arg11[%c0_131, %c0_132, %c0_133, %c0_134] : memref<2x8x8x72xbf16, #tpu.memory_space<vmem>>, vector<2x8x8x8xbf16>
    tpu.vector_store %arg11[%c0_131, %c0_132, %c0_133, %c0_134], %79 {strides = array<i32>} : memref<2x8x8x72xbf16, #tpu.memory_space<vmem>>, vector<2x8x8x8xbf16>,
    %c0_135 = arith.constant 0 : index
    %c0_136 = arith.constant 0 : index
    %c1_137 = arith.constant 1 : index
    %c0_138 = arith.constant 0 : index
    %81 = vector.load %arg10[%c0_135, %c0_136, %c1_137, %c0_138] : memref<2x10x10x8xf32, #tpu.memory_space<vmem>>, vector<2x8x8x8xf32>
    %82 = arith.truncf %81 : vector<2x8x8x8xf32> to vector<2x8x8x8xbf16>
    %c0_139 = arith.constant 0 : index
    %c0_140 = arith.constant 0 : index
    %c0_141 = arith.constant 0 : index
    %c8_142 = arith.constant 8 : index
    %83 = vector.load %arg11[%c0_139, %c0_140, %c0_141, %c8_142] : memref<2x8x8x72xbf16, #tpu.memory_space<vmem>>, vector<2x8x8x8xbf16>
    tpu.vector_store %arg11[%c0_139, %c0_140, %c0_141, %c8_142], %82 {strides = array<i32>} : memref<2x8x8x72xbf16, #tpu.memory_space<vmem>>, vector<2x8x8x8xbf16>,
    %c0_143 = arith.constant 0 : index
    %c0_144 = arith.constant 0 : index
    %c2_145 = arith.constant 2 : index
    %c0_146 = arith.constant 0 : index
    %84 = vector.load %arg10[%c0_143, %c0_144, %c2_145, %c0_146] : memref<2x10x10x8xf32, #tpu.memory_space<vmem>>, vector<2x8x8x8xf32>
    %85 = arith.truncf %84 : vector<2x8x8x8xf32> to vector<2x8x8x8xbf16>
    %c0_147 = arith.constant 0 : index
    %c0_148 = arith.constant 0 : index
    %c0_149 = arith.constant 0 : index
    %c16_150 = arith.constant 16 : index
    %86 = vector.load %arg11[%c0_147, %c0_148, %c0_149, %c16_150] : memref<2x8x8x72xbf16, #tpu.memory_space<vmem>>, vector<2x8x8x8xbf16>
    tpu.vector_store %arg11[%c0_147, %c0_148, %c0_149, %c16_150], %85 {strides = array<i32>} : memref<2x8x8x72xbf16, #tpu.memory_space<vmem>>, vector<2x8x8x8xbf16>,
    %c0_151 = arith.constant 0 : index
    %c1_152 = arith.constant 1 : index
    %c0_153 = arith.constant 0 : index
    %c0_154 = arith.constant 0 : index
    %87 = vector.load %arg10[%c0_151, %c1_152, %c0_153, %c0_154] : memref<2x10x10x8xf32, #tpu.memory_space<vmem>>, vector<2x8x8x8xf32>
    %88 = arith.truncf %87 : vector<2x8x8x8xf32> to vector<2x8x8x8xbf16>
    %c0_155 = arith.constant 0 : index
    %c0_156 = arith.constant 0 : index
    %c0_157 = arith.constant 0 : index
    %c24_158 = arith.constant 24 : index
    %89 = vector.load %arg11[%c0_155, %c0_156, %c0_157, %c24_158] : memref<2x8x8x72xbf16, #tpu.memory_space<vmem>>, vector<2x8x8x8xbf16>
    tpu.vector_store %arg11[%c0_155, %c0_156, %c0_157, %c24_158], %88 {strides = array<i32>} : memref<2x8x8x72xbf16, #tpu.memory_space<vmem>>, vector<2x8x8x8xbf16>,
    %c0_159 = arith.constant 0 : index
    %c1_160 = arith.constant 1 : index
    %c1_161 = arith.constant 1 : index
    %c0_162 = arith.constant 0 : index
    %90 = vector.load %arg10[%c0_159, %c1_160, %c1_161, %c0_162] : memref<2x10x10x8xf32, #tpu.memory_space<vmem>>, vector<2x8x8x8xf32>
    %91 = arith.truncf %90 : vector<2x8x8x8xf32> to vector<2x8x8x8xbf16>
    %c0_163 = arith.constant 0 : index
    %c0_164 = arith.constant 0 : index
    %c0_165 = arith.constant 0 : index
    %c32_166 = arith.constant 32 : index
    %92 = vector.load %arg11[%c0_163, %c0_164, %c0_165, %c32_166] : memref<2x8x8x72xbf16, #tpu.memory_space<vmem>>, vector<2x8x8x8xbf16>
    tpu.vector_store %arg11[%c0_163, %c0_164, %c0_165, %c32_166], %91 {strides = array<i32>} : memref<2x8x8x72xbf16, #tpu.memory_space<vmem>>, vector<2x8x8x8xbf16>,
    %c0_167 = arith.constant 0 : index
    %c1_168 = arith.constant 1 : index
    %c2_169 = arith.constant 2 : index
    %c0_170 = arith.constant 0 : index
    %93 = vector.load %arg10[%c0_167, %c1_168, %c2_169, %c0_170] : memref<2x10x10x8xf32, #tpu.memory_space<vmem>>, vector<2x8x8x8xf32>
    %94 = arith.truncf %93 : vector<2x8x8x8xf32> to vector<2x8x8x8xbf16>
    %c0_171 = arith.constant 0 : index
    %c0_172 = arith.constant 0 : index
    %c0_173 = arith.constant 0 : index
    %c40 = arith.constant 40 : index
    %95 = vector.load %arg11[%c0_171, %c0_172, %c0_173, %c40] : memref<2x8x8x72xbf16, #tpu.memory_space<vmem>>, vector<2x8x8x8xbf16>
    tpu.vector_store %arg11[%c0_171, %c0_172, %c0_173, %c40], %94 {strides = array<i32>} : memref<2x8x8x72xbf16, #tpu.memory_space<vmem>>, vector<2x8x8x8xbf16>,
    %c0_174 = arith.constant 0 : index
    %c2_175 = arith.constant 2 : index
    %c0_176 = arith.constant 0 : index
    %c0_177 = arith.constant 0 : index
    %96 = vector.load %arg10[%c0_174, %c2_175, %c0_176, %c0_177] : memref<2x10x10x8xf32, #tpu.memory_space<vmem>>, vector<2x8x8x8xf32>
    %97 = arith.truncf %96 : vector<2x8x8x8xf32> to vector<2x8x8x8xbf16>
    %c0_178 = arith.constant 0 : index
    %c0_179 = arith.constant 0 : index
    %c0_180 = arith.constant 0 : index
    %c48 = arith.constant 48 : index
    %98 = vector.load %arg11[%c0_178, %c0_179, %c0_180, %c48] : memref<2x8x8x72xbf16, #tpu.memory_space<vmem>>, vector<2x8x8x8xbf16>
    tpu.vector_store %arg11[%c0_178, %c0_179, %c0_180, %c48], %97 {strides = array<i32>} : memref<2x8x8x72xbf16, #tpu.memory_space<vmem>>, vector<2x8x8x8xbf16>,
    %c0_181 = arith.constant 0 : index
    %c2_182 = arith.constant 2 : index
    %c1_183 = arith.constant 1 : index
    %c0_184 = arith.constant 0 : index
    %99 = vector.load %arg10[%c0_181, %c2_182, %c1_183, %c0_184] : memref<2x10x10x8xf32, #tpu.memory_space<vmem>>, vector<2x8x8x8xf32>
    %100 = arith.truncf %99 : vector<2x8x8x8xf32> to vector<2x8x8x8xbf16>
    %c0_185 = arith.constant 0 : index
    %c0_186 = arith.constant 0 : index
    %c0_187 = arith.constant 0 : index
    %c56 = arith.constant 56 : index
    %101 = vector.load %arg11[%c0_185, %c0_186, %c0_187, %c56] : memref<2x8x8x72xbf16, #tpu.memory_space<vmem>>, vector<2x8x8x8xbf16>
    tpu.vector_store %arg11[%c0_185, %c0_186, %c0_187, %c56], %100 {strides = array<i32>} : memref<2x8x8x72xbf16, #tpu.memory_space<vmem>>, vector<2x8x8x8xbf16>,
    %c0_188 = arith.constant 0 : index
    %c2_189 = arith.constant 2 : index
    %c2_190 = arith.constant 2 : index
    %c0_191 = arith.constant 0 : index
    %102 = vector.load %arg10[%c0_188, %c2_189, %c2_190, %c0_191] : memref<2x10x10x8xf32, #tpu.memory_space<vmem>>, vector<2x8x8x8xf32>
    %103 = arith.truncf %102 : vector<2x8x8x8xf32> to vector<2x8x8x8xbf16>
    %c0_192 = arith.constant 0 : index
    %c0_193 = arith.constant 0 : index
    %c0_194 = arith.constant 0 : index
    %c64 = arith.constant 64 : index
    %104 = vector.load %arg11[%c0_192, %c0_193, %c0_194, %c64] : memref<2x8x8x72xbf16, #tpu.memory_space<vmem>>, vector<2x8x8x8xbf16>
    tpu.vector_store %arg11[%c0_192, %c0_193, %c0_194, %c64], %103 {strides = array<i32>} : memref<2x8x8x72xbf16, #tpu.memory_space<vmem>>, vector<2x8x8x8xbf16>,
    %c0_195 = arith.constant 0 : index
    %c0_196 = arith.constant 0 : index
    %c0_197 = arith.constant 0 : index
    %c0_198 = arith.constant 0 : index
    %105 = vector.load %arg11[%c0_195, %c0_196, %c0_197, %c0_198] : memref<2x8x8x72xbf16, #tpu.memory_space<vmem>>, vector<2x8x8x72xbf16>
    %106 = vector.shape_cast %105 : vector<2x8x8x72xbf16> to vector<128x72xbf16>
    %c0_199 = arith.constant 0 : index
    %c0_200 = arith.constant 0 : index
    %107 = vector.load %arg2[%c0_199, %c0_200] : memref<72x8xbf16, #tpu.memory_space<vmem>>, vector<72x8xbf16>
    %cst_201 = arith.constant dense<0.000000e+00> : vector<128x8xf32>
    %108 = tpu.matmul %106, %107, %cst_201 {dimension_numbers = #tpu.dot_dimension_numbers<[1], [0], [0], [1], [0, 0, 1, 1], [], []>} : vector<128x72xbf16>, vector<72x8xbf16>, vector<128x8xf32> -> vector<128x8xf32>
    %cst_202 = arith.constant dense<0.000000e+00> : vector<8xf32>
    %109 = vector.multi_reduction <add>, %108, %cst_202 [0] : vector<128x8xf32> to vector<8xf32>
    %110 = vector.shape_cast %109 : vector<8xf32> to vector<1x8xf32>
    %cst_203 = arith.constant 7.812500e-03 : f32
    %111 = vector.broadcast %cst_203 : f32 to vector<1x8xf32>
    %112 = arith.mulf %110, %111 : vector<1x8xf32>
    %113 = arith.mulf %108, %108 : vector<128x8xf32>
    %cst_204 = arith.constant dense<0.000000e+00> : vector<8xf32>
    %114 = vector.multi_reduction <add>, %113, %cst_204 [0] : vector<128x8xf32> to vector<8xf32>
    %115 = vector.shape_cast %114 : vector<8xf32> to vector<1x8xf32>
    %cst_205 = arith.constant 7.812500e-03 : f32
    %116 = vector.broadcast %cst_205 : f32 to vector<1x8xf32>
    %117 = arith.mulf %115, %116 : vector<1x8xf32>
    %118 = arith.mulf %112, %112 : vector<1x8xf32>
    %119 = arith.subf %117, %118 : vector<1x8xf32>
    %cst_206 = arith.constant 0.000000e+00 : f32
    %120 = vector.broadcast %cst_206 : f32 to vector<1x8xf32>
    %121 = arith.maximumf %119, %120 : vector<1x8xf32>
    %c0_207 = arith.constant 0 : index
    %c0_208 = arith.constant 0 : index
    %122 = vector.load %arg5[%c0_207, %c0_208] : memref<1x8xf32, #tpu.memory_space<vmem>>, vector<1x8xf32>
    %cst_209 = arith.constant 9.99999974E-6 : f32
    %123 = vector.broadcast %cst_209 : f32 to vector<1x8xf32>
    %124 = arith.addf %121, %123 : vector<1x8xf32>
    %125 = math.rsqrt %124 : vector<1x8xf32>
    %126 = arith.mulf %122, %125 : vector<1x8xf32>
    %c0_210 = arith.constant 0 : index
    %c0_211 = arith.constant 0 : index
    %127 = vector.load %arg6[%c0_210, %c0_211] : memref<1x8xf32, #tpu.memory_space<vmem>>, vector<1x8xf32>
    %128 = arith.mulf %112, %126 : vector<1x8xf32>
    %129 = arith.subf %127, %128 : vector<1x8xf32>
    %130 = vector.broadcast %126 : vector<1x8xf32> to vector<128x8xf32>
    %131 = arith.mulf %108, %130 : vector<128x8xf32>
    %132 = vector.broadcast %129 : vector<1x8xf32> to vector<128x8xf32>
    %133 = arith.addf %131, %132 : vector<128x8xf32>
    %cst_212 = arith.constant 0.000000e+00 : f32
    %134 = vector.broadcast %cst_212 : f32 to vector<128x8xf32>
    %135 = arith.maximumf %133, %134 : vector<128x8xf32>
    %c0_213 = arith.constant 0 : index
    %c0_214 = arith.constant 0 : index
    %136 = vector.load %arg7[%c0_213, %c0_214] : memref<128x8xf32, #tpu.memory_space<vmem>>, vector<128x8xf32>
    tpu.vector_store %arg7[%c0_213, %c0_214], %135 {strides = array<i32>} : memref<128x8xf32, #tpu.memory_space<vmem>>, vector<128x8xf32>,
    return
  }
}

</mosaic_0001>

<llo_original>
// kernel: tpu_custom_call.1
$region0: #{tpu_custom_call.1}
  #allocation0 [shape = 'u32[]', space=smem, size = 0x4, offset = 0x4, fixed_abs, tag = 'smem constant byte address 0x4 - core index']
  #allocation1 [shape = 'u32[72,128]{1,0:T(1,128)}', space=vmem, size = 0x9000, scoped, tag = 'internal scratch']
  #allocation2 [shape = 'f32[2,10,10,4]{3,2,1,0:T(8,128)}', space=vmem, size = 0x28000, scoped, tag = 'scratch operand']
  #allocation3 [shape = 'bf16[2,8,8,36]{3,2,1,0:T(8,128)(2,1)}', space=vmem, size = 0x8000, scoped, tag = 'scratch operand']
  #allocation4 [shape = 'f32[2,10,10,8]{3,2,1,0:T(8,128)}', space=vmem, size = 0x28000, scoped, tag = 'scratch operand']
  #allocation5 [shape = 'bf16[2,8,8,72]{3,2,1,0:T(8,128)(2,1)}', space=vmem, size = 0x8000, scoped, tag = 'scratch operand']
  %s0 = inlined_call_operand.vmem [shape: f32[2,16,16,4], index: 0, kind: input, shape index: {}]
  %s1 = inlined_call_operand.vmem [shape: bf16[36,8], index: 1, kind: input, shape index: {}]
  %s2 = inlined_call_operand.vmem [shape: bf16[72,8], index: 2, kind: input, shape index: {}]
  %s3 = inlined_call_operand.vmem [shape: f32[1,8], index: 3, kind: input, shape index: {}]
  %s4 = inlined_call_operand.vmem [shape: f32[1,8], index: 4, kind: input, shape index: {}]
  %s5 = inlined_call_operand.vmem [shape: f32[1,8], index: 5, kind: input, shape index: {}]
  %s6 = inlined_call_operand.vmem [shape: f32[1,8], index: 6, kind: input, shape index: {}]
  %s7 = inlined_call_operand.vmem [shape: f32[128,8], index: 7, kind: output, shape index: {}]
  %s8 = sld [smem:[#allocation0]]
  $region38: #{tpu_custom_call.1} parent=0
    _
  %s10 = ssub.s32 1, %s8
  %s11 = scalar_select 0, %s10, %s8
  // Predicated region
  $region2: #{tpu_custom_call.1} parent=0 // pred_check
    _
  $region3: #{tpu_custom_call.1} parent=0 // pred_check_branch
    %13 = sbr.rel (0) target = $region5
  $region4: #{tpu_custom_call.1} parent=0 // pred_region
    _
  $region5: #{tpu_custom_call.1} parent=0 // pred_fallthru
    _
  // Predicated region
  $region6: #{tpu_custom_call.1} parent=0 // pred_check
    _
  $region7: #{tpu_custom_call.1} parent=0 // pred_check_branch
    %15 = sbr.rel (0) target = $region9
  $region8: #{tpu_custom_call.1} parent=0 // pred_region
    _
  $region9: #{tpu_custom_call.1} parent=0 // pred_fallthru
    _
  // Predicated region
  $region10: #{tpu_custom_call.1} parent=0 // pred_check
    _
  $region11: #{tpu_custom_call.1} parent=0 // pred_check_branch
    %17 = sbr.rel (0) target = $region13
  $region12: #{tpu_custom_call.1} parent=0 // pred_region
    _
  $region13: #{tpu_custom_call.1} parent=0 // pred_fallthru
    _
  // Predicated region
  $region14: #{tpu_custom_call.1} parent=0 // pred_check
    _
  $region15: #{tpu_custom_call.1} parent=0 // pred_check_branch
    %19 = sbr.rel (0) target = $region17
  $region16: #{tpu_custom_call.1} parent=0 // pred_region
    _
  $region17: #{tpu_custom_call.1} parent=0 // pred_fallthru
    _
  // Predicated region
  $region18: #{tpu_custom_call.1} parent=0 // pred_check
    _
  $region19: #{tpu_custom_call.1} parent=0 // pred_check_branch
    %21 = sbr.rel (0) target = $region21
  $region20: #{tpu_custom_call.1} parent=0 // pred_region
    _
  $region21: #{tpu_custom_call.1} parent=0 // pred_fallthru
    _
  // Predicated region
  $region22: #{tpu_custom_call.1} parent=0 // pred_check
    _
  $region23: #{tpu_custom_call.1} parent=0 // pred_check_branch
    %23 = sbr.rel (0) target = $region25
  $region24: #{tpu_custom_call.1} parent=0 // pred_region
    _
  $region25: #{tpu_custom_call.1} parent=0 // pred_fallthru
    _
  // Predicated region
  $region26: #{tpu_custom_call.1} parent=0 // pred_check
    _
  $region27: #{tpu_custom_call.1} parent=0 // pred_check_branch
    %25 = sbr.rel (0) target = $region29
  $region28: #{tpu_custom_call.1} parent=0 // pred_region
    _
  $region29: #{tpu_custom_call.1} parent=0 // pred_fallthru
    _
  %v27 = vld [vmem:[%s0] sm:$0xff]
  %v28 = vld [vmem:[%s0 + $0x8] sm:$0xff]
  %v29 = vld [vmem:[%s0 + $0x10] sm:$0xff]
  %v30 = vld [vmem:[%s0 + $0x18] sm:$0xff]
  %v31 = vld [vmem:[%s0 + $0x20] sm:$0xff]
  %v32 = vld [vmem:[%s0 + $0x28] sm:$0xff]
  %v33 = vld [vmem:[%s0 + $0x30] sm:$0xff]
  %v34 = vld [vmem:[%s0 + $0x38] sm:$0xff]
  %v35 = vld [vmem:[%s0 + $0x40] sm:$0xff]
  %v36 = vld [vmem:[%s0 + $0x48] sm:$0xff]
  %v37 = vld [vmem:[%s0 + $0x50] sm:$0xff]
  %v38 = vld [vmem:[%s0 + $0x58] sm:$0xff]
  %v39 = vld [vmem:[%s0 + $0x60] sm:$0xff]
  %v40 = vld [vmem:[%s0 + $0x68] sm:$0xff]
  %v41 = vld [vmem:[%s0 + $0x70] sm:$0xff]
  %v42 = vld [vmem:[%s0 + $0x78] sm:$0xff]
  %v43 = vld [vmem:[%s0 + $0x80] sm:$0xff]
  %v44 = vld [vmem:[%s0 + $0x88] sm:$0xff]
  %v45 = vld [vmem:[%s0 + $0x90] sm:$0xff]
  %v46 = vld [vmem:[%s0 + $0x98] sm:$0xff]
  %v47 = vld [vmem:[%s0 + $0xa0] sm:$0xff]
  %v48 = vld [vmem:[%s0 + $0xa8] sm:$0xff]
  %v49 = vld [vmem:[%s0 + $0xb0] sm:$0xff]
  %v50 = vld [vmem:[%s0 + $0xb8] sm:$0xff]
  %v51 = vld [vmem:[%s0 + $0xc0] sm:$0xff]
  %v52 = vld [vmem:[%s0 + $0xc8] sm:$0xff]
  %v53 = vld [vmem:[%s0 + $0xd0] sm:$0xff]
  %v54 = vld [vmem:[%s0 + $0xd8] sm:$0xff]
  %v55 = vld [vmem:[%s0 + $0xe0] sm:$0xff]
  %v56 = vld [vmem:[%s0 + $0xe8] sm:$0xff]
  %v57 = vld [vmem:[%s0 + $0xf0] sm:$0xff]
  %v58 = vld [vmem:[%s0 + $0xf8] sm:$0xff]
  %v59 = vld [vmem:[%s0 + $0x100] sm:$0xff]
  %v60 = vld [vmem:[%s0 + $0x108] sm:$0xff]
  %v61 = vld [vmem:[%s0 + $0x110] sm:$0xff]
  %v62 = vld [vmem:[%s0 + $0x118] sm:$0xff]
  %v63 = vld [vmem:[%s0 + $0x120] sm:$0xff]
  %v64 = vld [vmem:[%s0 + $0x128] sm:$0xff]
  %v65 = vld [vmem:[%s0 + $0x130] sm:$0xff]
  %v66 = vld [vmem:[%s0 + $0x138] sm:$0xff]
  %v67 = vld [vmem:[%s0 + $0x140] sm:$0xff]
  %v68 = vld [vmem:[%s0 + $0x148] sm:$0xff]
  %v69 = vld [vmem:[%s0 + $0x150] sm:$0xff]
  %v70 = vld [vmem:[%s0 + $0x158] sm:$0xff]
  %v71 = vld [vmem:[%s0 + $0x160] sm:$0xff]
  %v72 = vld [vmem:[%s0 + $0x168] sm:$0xff]
  %v73 = vld [vmem:[%s0 + $0x170] sm:$0xff]
  %v74 = vld [vmem:[%s0 + $0x178] sm:$0xff]
  %v75 = vld [vmem:[%s0 + $0x180] sm:$0xff]
  %v76 = vld [vmem:[%s0 + $0x188] sm:$0xff]
  %v77 = vld [vmem:[%s0 + $0x190] sm:$0xff]
  %v78 = vld [vmem:[%s0 + $0x198] sm:$0xff]
  %v79 = vld [vmem:[%s0 + $0x1a0] sm:$0xff]
  %v80 = vld [vmem:[%s0 + $0x1a8] sm:$0xff]
  %v81 = vld [vmem:[%s0 + $0x1b0] sm:$0xff]
  %v82 = vld [vmem:[%s0 + $0x1b8] sm:$0xff]
  %v83 = vld [vmem:[%s0 + $0x1c0] sm:$0xff]
  %v84 = vld [vmem:[%s0 + $0x1c8] sm:$0xff]
  %v85 = vld [vmem:[%s0 + $0x1d0] sm:$0xff]
  %v86 = vld [vmem:[%s0 + $0x1d8] sm:$0xff]
  %v87 = vld [vmem:[%s0 + $0x1e0] sm:$0xff]
  %v88 = vld [vmem:[%s0 + $0x1e8] sm:$0xff]
  %v89 = vld [vmem:[%s0 + $0x1f0] sm:$0xff]
  %v90 = vld [vmem:[%s0 + $0x1f8] sm:$0xff]
  %v155 = vrot.slane %v27, 2
  %v156 = vrot.slane %v27, 4
  %v157 = vrot.slane %v27, 6
  %v158 = vrot.slane %v28, 2
  %v159 = vrot.slane %v28, 4
  %v160 = vrot.slane %v28, 6
  %v161 = vrot.slane %v29, 2
  %v162 = vrot.slane %v29, 4
  %v163 = vrot.slane %v29, 6
  %v164 = vrot.slane %v30, 2
  %v165 = vrot.slane %v30, 4
  %v166 = vrot.slane %v30, 6
  %v167 = vrot.slane %v31, 2
  %v168 = vrot.slane %v31, 4
  %v169 = vrot.slane %v31, 6
  %v170 = vrot.slane %v32, 2
  %v171 = vrot.slane %v32, 4
  %v172 = vrot.slane %v32, 6
  %v173 = vrot.slane %v33, 2
  %v174 = vrot.slane %v33, 4
  %v175 = vrot.slane %v33, 6
  %v176 = vrot.slane %v34, 2
  %v177 = vrot.slane %v34, 4
  %v178 = vrot.slane %v34, 6
  %v179 = vrot.slane %v35, 2
  %v180 = vrot.slane %v35, 4
  %v181 = vrot.slane %v35, 6
  %v182 = vrot.slane %v36, 2
  %v183 = vrot.slane %v36, 4
  %v184 = vrot.slane %v36, 6
  %v185 = vrot.slane %v37, 2
  %v186 = vrot.slane %v37, 4
  %v187 = vrot.slane %v37, 6
  %v188 = vrot.slane %v38, 2
  %v189 = vrot.slane %v38, 4
  %v190 = vrot.slane %v38, 6
  %v191 = vrot.slane %v39, 2
  %v192 = vrot.slane %v39, 4
  %v193 = vrot.slane %v39, 6
  %v194 = vrot.slane %v40, 2
  %v195 = vrot.slane %v40, 4
  %v196 = vrot.slane %v40, 6
  %v197 = vrot.slane %v41, 2
  %v198 = vrot.slane %v41, 4
  %v199 = vrot.slane %v41, 6
  %v200 = vrot.slane %v42, 2
  %v201 = vrot.slane %v42, 4
  %v202 = vrot.slane %v42, 6
  %v203 = vrot.slane %v43, 2
  %v204 = vrot.slane %v43, 4
  %v205 = vrot.slane %v43, 6
  %v206 = vrot.slane %v44, 2
  %v207 = vrot.slane %v44, 4
  %v208 = vrot.slane %v44, 6
  %v209 = vrot.slane %v45, 2
  %v210 = vrot.slane %v45, 4
  %v211 = vrot.slane %v45, 6
  %v212 = vrot.slane %v46, 2
  %v213 = vrot.slane %v46, 4
  %v214 = vrot.slane %v46, 6
  %v215 = vrot.slane %v47, 2
  %v216 = vrot.slane %v47, 4
  %v217 = vrot.slane %v47, 6
  %v218 = vrot.slane %v48, 2
  %v219 = vrot.slane %v48, 4
  %v220 = vrot.slane %v48, 6
  %v221 = vrot.slane %v49, 2
  %v222 = vrot.slane %v49, 4
  %v223 = vrot.slane %v49, 6
  %v224 = vrot.slane %v50, 2
  %v225 = vrot.slane %v50, 4
  %v226 = vrot.slane %v50, 6
  %v227 = vrot.slane %v51, 2
  %v228 = vrot.slane %v51, 4
  %v229 = vrot.slane %v51, 6
  %v230 = vrot.slane %v52, 2
  %v231 = vrot.slane %v52, 4
  %v232 = vrot.slane %v52, 6
  %v233 = vrot.slane %v53, 2
  %v234 = vrot.slane %v53, 4
  %v235 = vrot.slane %v53, 6
  %v236 = vrot.slane %v54, 2
  %v237 = vrot.slane %v54, 4
  %v238 = vrot.slane %v54, 6
  %v239 = vrot.slane %v55, 2
  %v240 = vrot.slane %v55, 4
  %v241 = vrot.slane %v55, 6
  %v242 = vrot.slane %v56, 2
  %v243 = vrot.slane %v56, 4
  %v244 = vrot.slane %v56, 6
  %v245 = vrot.slane %v57, 2
  %v246 = vrot.slane %v57, 4
  %v247 = vrot.slane %v57, 6
  %v248 = vrot.slane %v58, 2
  %v249 = vrot.slane %v58, 4
  %v250 = vrot.slane %v58, 6
  %v251 = vrot.slane %v59, 2
  %v252 = vrot.slane %v59, 4
  %v253 = vrot.slane %v59, 6
  %v254 = vrot.slane %v60, 2
  %v255 = vrot.slane %v60, 4
  %v256 = vrot.slane %v60, 6
  %v257 = vrot.slane %v61, 2
  %v258 = vrot.slane %v61, 4
  %v259 = vrot.slane %v61, 6
  %v260 = vrot.slane %v62, 2
  %v261 = vrot.slane %v62, 4
  %v262 = vrot.slane %v62, 6
  %v263 = vrot.slane %v63, 2
  %v264 = vrot.slane %v63, 4
  %v265 = vrot.slane %v63, 6
  %v266 = vrot.slane %v64, 2
  %v267 = vrot.slane %v64, 4
  %v268 = vrot.slane %v64, 6
  %v269 = vrot.slane %v65, 2
  %v270 = vrot.slane %v65, 4
  %v271 = vrot.slane %v65, 6
  %v272 = vrot.slane %v66, 2
  %v273 = vrot.slane %v66, 4
  %v274 = vrot.slane %v66, 6
  %v275 = vrot.slane %v67, 2
  %v276 = vrot.slane %v67, 4
  %v277 = vrot.slane %v67, 6
  %v278 = vrot.slane %v68, 2
  %v279 = vrot.slane %v68, 4
  %v280 = vrot.slane %v68, 6
  %v281 = vrot.slane %v69, 2
  %v282 = vrot.slane %v69, 4
  %v283 = vrot.slane %v69, 6
  %v284 = vrot.slane %v70, 2
  %v285 = vrot.slane %v70, 4
  %v286 = vrot.slane %v70, 6
  %v287 = vrot.slane %v71, 2
  %v288 = vrot.slane %v71, 4
  %v289 = vrot.slane %v71, 6
  %v290 = vrot.slane %v72, 2
  %v291 = vrot.slane %v72, 4
  %v292 = vrot.slane %v72, 6
  %v293 = vrot.slane %v73, 2
  %v294 = vrot.slane %v73, 4
  %v295 = vrot.slane %v73, 6
  %v296 = vrot.slane %v74, 2
  %v297 = vrot.slane %v74, 4
  %v298 = vrot.slane %v74, 6
  %v299 = vrot.slane %v75, 2
  %v300 = vrot.slane %v75, 4
  %v301 = vrot.slane %v75, 6
  %v302 = vrot.slane %v76, 2
  %v303 = vrot.slane %v76, 4
  %v304 = vrot.slane %v76, 6
  %v305 = vrot.slane %v77, 2
  %v306 = vrot.slane %v77, 4
  %v307 = vrot.slane %v77, 6
  %v308 = vrot.slane %v78, 2
  %v309 = vrot.slane %v78, 4
  %v310 = vrot.slane %v78, 6
  %v311 = vrot.slane %v79, 2
  %v312 = vrot.slane %v79, 4
  %v313 = vrot.slane %v79, 6
  %v314 = vrot.slane %v80, 2
  %v315 = vrot.slane %v80, 4
  %v316 = vrot.slane %v80, 6
  %v317 = vrot.slane %v81, 2
  %v318 = vrot.slane %v81, 4
  %v319 = vrot.slane %v81, 6
  %v320 = vrot.slane %v82, 2
  %v321 = vrot.slane %v82, 4
  %v322 = vrot.slane %v82, 6
  %v323 = vrot.slane %v83, 2
  %v324 = vrot.slane %v83, 4
  %v325 = vrot.slane %v83, 6
  %v326 = vrot.slane %v84, 2
  %v327 = vrot.slane %v84, 4
  %v328 = vrot.slane %v84, 6
  %v329 = vrot.slane %v85, 2
  %v330 = vrot.slane %v85, 4
  %v331 = vrot.slane %v85, 6
  %v332 = vrot.slane %v86, 2
  %v333 = vrot.slane %v86, 4
  %v334 = vrot.slane %v86, 6
  %v335 = vrot.slane %v87, 2
  %v336 = vrot.slane %v87, 4
  %v337 = vrot.slane %v87, 6
  %v338 = vrot.slane %v88, 2
  %v339 = vrot.slane %v88, 4
  %v340 = vrot.slane %v88, 6
  %v341 = vrot.slane %v89, 2
  %v342 = vrot.slane %v89, 4
  %v343 = vrot.slane %v89, 6
  %v344 = vrot.slane %v90, 2
  %v345 = vrot.slane %v90, 4
  %v346 = vrot.slane %v90, 6
  %vm539 = vcmask 25600
  %v540 = vsel %vm539, %v27, -inf
  %v541 = vrot.slane %v540, 4
  %v542 = vmax.f32 %v540, %v541
  %v543 = vrot.slane %v542, 2
  %v544 = vmax.f32 %v542, %v543
  %v545 = vrot.slane %v544, 1
  %v546 = vmax.f32 %v544, %v545
  %v547 = vsel %vm539, %v155, -inf
  %v548 = vrot.slane %v547, 4
  %v549 = vmax.f32 %v547, %v548
  %v550 = vrot.slane %v549, 2
  %v551 = vmax.f32 %v549, %v550
  %v552 = vrot.slane %v551, 1
  %v553 = vmax.f32 %v551, %v552
  %v554 = vsel %vm539, %v156, -inf
  %v555 = vrot.slane %v554, 4
  %v556 = vmax.f32 %v554, %v555
  %v557 = vrot.slane %v556, 2
  %v558 = vmax.f32 %v556, %v557
  %v559 = vrot.slane %v558, 1
  %v560 = vmax.f32 %v558, %v559
  %v561 = vsel %vm539, %v157, -inf
  %v562 = vrot.slane %v561, 4
  %v563 = vmax.f32 %v561, %v562
  %v564 = vrot.slane %v563, 2
  %v565 = vmax.f32 %v563, %v564
  %v566 = vrot.slane %v565, 1
  %v567 = vmax.f32 %v565, %v566
  %v568 = vsel %vm539, %v28, -inf
  %v569 = vrot.slane %v568, 4
  %v570 = vmax.f32 %v568, %v569
  %v571 = vrot.slane %v570, 2
  %v572 = vmax.f32 %v570, %v571
  %v573 = vrot.slane %v572, 1
  %v574 = vmax.f32 %v572, %v573
  %v575 = vsel %vm539, %v158, -inf
  %v576 = vrot.slane %v575, 4
  %v577 = vmax.f32 %v575, %v576
  %v578 = vrot.slane %v577, 2
  %v579 = vmax.f32 %v577, %v578
  %v580 = vrot.slane %v579, 1
  %v581 = vmax.f32 %v579, %v580
  %v582 = vsel %vm539, %v159, -inf
  %v583 = vrot.slane %v582, 4
  %v584 = vmax.f32 %v582, %v583
  %v585 = vrot.slane %v584, 2
  %v586 = vmax.f32 %v584, %v585
  %v587 = vrot.slane %v586, 1
  %v588 = vmax.f32 %v586, %v587
  %v589 = vsel %vm539, %v160, -inf
  %v590 = vrot.slane %v589, 4
  %v591 = vmax.f32 %v589, %v590
  %v592 = vrot.slane %v591, 2
  %v593 = vmax.f32 %v591, %v592
  %v594 = vrot.slane %v593, 1
  %v595 = vmax.f32 %v593, %v594
  %v596 = vsel %vm539, %v29, -inf
  %v597 = vrot.slane %v596, 4
  %v598 = vmax.f32 %v596, %v597
  %v599 = vrot.slane %v598, 2
  %v600 = vmax.f32 %v598, %v599
  %v601 = vrot.slane %v600, 1
  %v602 = vmax.f32 %v600, %v601
  %v603 = vsel %vm539, %v161, -inf
  %v604 = vrot.slane %v603, 4
  %v605 = vmax.f32 %v603, %v604
  %v606 = vrot.slane %v605, 2
  %v607 = vmax.f32 %v605, %v606
  %v608 = vrot.slane %v607, 1
  %v609 = vmax.f32 %v607, %v608
  %v610 = vsel %vm539, %v162, -inf
  %v611 = vrot.slane %v610, 4
  %v612 = vmax.f32 %v610, %v611
  %v613 = vrot.slane %v612, 2
  %v614 = vmax.f32 %v612, %v613
  %v615 = vrot.slane %v614, 1
  %v616 = vmax.f32 %v614, %v615
  %v617 = vsel %vm539, %v163, -inf
  %v618 = vrot.slane %v617, 4
  %v619 = vmax.f32 %v617, %v618
  %v620 = vrot.slane %v619, 2
  %v621 = vmax.f32 %v619, %v620
  %v622 = vrot.slane %v621, 1
  %v623 = vmax.f32 %v621, %v622
  %v624 = vsel %vm539, %v30, -inf
  %v625 = vrot.slane %v624, 4
  %v626 = vmax.f32 %v624, %v625
  %v627 = vrot.slane %v626, 2
  %v628 = vmax.f32 %v626, %v627
  %v629 = vrot.slane %v628, 1
  %v630 = vmax.f32 %v628, %v629
  %v631 = vsel %vm539, %v164, -inf
  %v632 = vrot.slane %v631, 4
  %v633 = vmax.f32 %v631, %v632
  %v634 = vrot.slane %v633, 2
  %v635 = vmax.f32 %v633, %v634
  %v636 = vrot.slane %v635, 1
  %v637 = vmax.f32 %v635, %v636
  %v638 = vsel %vm539, %v165, -inf
  %v639 = vrot.slane %v638, 4
  %v640 = vmax.f32 %v638, %v639
  %v641 = vrot.slane %v640, 2
  %v642 = vmax.f32 %v640, %v641
  %v643 = vrot.slane %v642, 1
  %v644 = vmax.f32 %v642, %v643
  %v645 = vsel %vm539, %v166, -inf
  %v646 = vrot.slane %v645, 4
  %v647 = vmax.f32 %v645, %v646
  %v648 = vrot.slane %v647, 2
  %v649 = vmax.f32 %v647, %v648
  %v650 = vrot.slane %v649, 1
  %v651 = vmax.f32 %v649, %v650
  %v652 = vsel %vm539, %v31, -inf
  %v653 = vrot.slane %v652, 4
  %v654 = vmax.f32 %v652, %v653
  %v655 = vrot.slane %v654, 2
  %v656 = vmax.f32 %v654, %v655
  %v657 = vrot.slane %v656, 1
  %v658 = vmax.f32 %v656, %v657
  %v659 = vsel %vm539, %v167, -inf
  %v660 = vrot.slane %v659, 4
  %v661 = vmax.f32 %v659, %v660
  %v662 = vrot.slane %v661, 2
  %v663 = vmax.f32 %v661, %v662
  %v664 = vrot.slane %v663, 1
  %v665 = vmax.f32 %v663, %v664
  %v666 = vsel %vm539, %v168, -inf
  %v667 = vrot.slane %v666, 4
  %v668 = vmax.f32 %v666, %v667
  %v669 = vrot.slane %v668, 2
  %v670 = vmax.f32 %v668, %v669
  %v671 = vrot.slane %v670, 1
  %v672 = vmax.f32 %v670, %v671
  %v673 = vsel %vm539, %v169, -inf
  %v674 = vrot.slane %v673, 4
  %v675 = vmax.f32 %v673, %v674
  %v676 = vrot.slane %v675, 2
  %v677 = vmax.f32 %v675, %v676
  %v678 = vrot.slane %v677, 1
  %v679 = vmax.f32 %v677, %v678
  %v680 = vsel %vm539, %v32, -inf
  %v681 = vrot.slane %v680, 4
  %v682 = vmax.f32 %v680, %v681
  %v683 = vrot.slane %v682, 2
  %v684 = vmax.f32 %v682, %v683
  %v685 = vrot.slane %v684, 1
  %v686 = vmax.f32 %v684, %v685
  %v687 = vsel %vm539, %v170, -inf
  %v688 = vrot.slane %v687, 4
  %v689 = vmax.f32 %v687, %v688
  %v690 = vrot.slane %v689, 2
  %v691 = vmax.f32 %v689, %v690
  %v692 = vrot.slane %v691, 1
  %v693 = vmax.f32 %v691, %v692
  %v694 = vsel %vm539, %v171, -inf
  %v695 = vrot.slane %v694, 4
  %v696 = vmax.f32 %v694, %v695
  %v697 = vrot.slane %v696, 2
  %v698 = vmax.f32 %v696, %v697
  %v699 = vrot.slane %v698, 1
  %v700 = vmax.f32 %v698, %v699
  %v701 = vsel %vm539, %v172, -inf
  %v702 = vrot.slane %v701, 4
  %v703 = vmax.f32 %v701, %v702
  %v704 = vrot.slane %v703, 2
  %v705 = vmax.f32 %v703, %v704
  %v706 = vrot.slane %v705, 1
  %v707 = vmax.f32 %v705, %v706
  %v708 = vsel %vm539, %v33, -inf
  %v709 = vrot.slane %v708, 4
  %v710 = vmax.f32 %v708, %v709
  %v711 = vrot.slane %v710, 2
  %v712 = vmax.f32 %v710, %v711
  %v713 = vrot.slane %v712, 1
  %v714 = vmax.f32 %v712, %v713
  %v715 = vsel %vm539, %v173, -inf
  %v716 = vrot.slane %v715, 4
  %v717 = vmax.f32 %v715, %v716
  %v718 = vrot.slane %v717, 2
  %v719 = vmax.f32 %v717, %v718
  %v720 = vrot.slane %v719, 1
  %v721 = vmax.f32 %v719, %v720
  %v722 = vsel %vm539, %v174, -inf
  %v723 = vrot.slane %v722, 4
  %v724 = vmax.f32 %v722, %v723
  %v725 = vrot.slane %v724, 2
  %v726 = vmax.f32 %v724, %v725
  %v727 = vrot.slane %v726, 1
  %v728 = vmax.f32 %v726, %v727
  %v729 = vsel %vm539, %v175, -inf
  %v730 = vrot.slane %v729, 4
  %v731 = vmax.f32 %v729, %v730
  %v732 = vrot.slane %v731, 2
  %v733 = vmax.f32 %v731, %v732
  %v734 = vrot.slane %v733, 1
  %v735 = vmax.f32 %v733, %v734
  %v736 = vsel %vm539, %v34, -inf
  %v737 = vrot.slane %v736, 4
  %v738 = vmax.f32 %v736, %v737
  %v739 = vrot.slane %v738, 2
  %v740 = vmax.f32 %v738, %v739
  %v741 = vrot.slane %v740, 1
  %v742 = vmax.f32 %v740, %v741
  %v743 = vsel %vm539, %v176, -inf
  %v744 = vrot.slane %v743, 4
  %v745 = vmax.f32 %v743, %v744
  %v746 = vrot.slane %v745, 2
  %v747 = vmax.f32 %v745, %v746
  %v748 = vrot.slane %v747, 1
  %v749 = vmax.f32 %v747, %v748
  %v750 = vsel %vm539, %v177, -inf
  %v751 = vrot.slane %v750, 4
  %v752 = vmax.f32 %v750, %v751
  %v753 = vrot.slane %v752, 2
  %v754 = vmax.f32 %v752, %v753
  %v755 = vrot.slane %v754, 1
  %v756 = vmax.f32 %v754, %v755
  %v757 = vsel %vm539, %v178, -inf
  %v758 = vrot.slane %v757, 4
  %v759 = vmax.f32 %v757, %v758
  %v760 = vrot.slane %v759, 2
  %v761 = vmax.f32 %v759, %v760
  %v762 = vrot.slane %v761, 1
  %v763 = vmax.f32 %v761, %v762
  %v764 = vsel %vm539, %v35, -inf
  %v765 = vrot.slane %v764, 4
  %v766 = vmax.f32 %v764, %v765
  %v767 = vrot.slane %v766, 2
  %v768 = vmax.f32 %v766, %v767
  %v769 = vrot.slane %v768, 1
  %v770 = vmax.f32 %v768, %v769
  %v771 = vsel %vm539, %v179, -inf
  %v772 = vrot.slane %v771, 4
  %v773 = vmax.f32 %v771, %v772
  %v774 = vrot.slane %v773, 2
  %v775 = vmax.f32 %v773, %v774
  %v776 = vrot.slane %v775, 1
  %v777 = vmax.f32 %v775, %v776
  %v778 = vsel %vm539, %v180, -inf
  %v779 = vrot.slane %v778, 4
  %v780 = vmax.f32 %v778, %v779
  %v781 = vrot.slane %v780, 2
  %v782 = vmax.f32 %v780, %v781
  %v783 = vrot.slane %v782, 1
  %v784 = vmax.f32 %v782, %v783
  %v785 = vsel %vm539, %v181, -inf
  %v786 = vrot.slane %v785, 4
  %v787 = vmax.f32 %v785, %v786
  %v788 = vrot.slane %v787, 2
  %v789 = vmax.f32 %v787, %v788
  %v790 = vrot.slane %v789, 1
  %v791 = vmax.f32 %v789, %v790
  %v792 = vsel %vm539, %v36, -inf
  %v793 = vrot.slane %v792, 4
  %v794 = vmax.f32 %v792, %v793
  %v795 = vrot.slane %v794, 2
  %v796 = vmax.f32 %v794, %v795
  %v797 = vrot.slane %v796, 1
  %v798 = vmax.f32 %v796, %v797
  %v799 = vsel %vm539, %v182, -inf
  %v800 = vrot.slane %v799, 4
  %v801 = vmax.f32 %v799, %v800
  %v802 = vrot.slane %v801, 2
  %v803 = vmax.f32 %v801, %v802
  %v804 = vrot.slane %v803, 1
  %v805 = vmax.f32 %v803, %v804
  %v806 = vsel %vm539, %v183, -inf
  %v807 = vrot.slane %v806, 4
  %v808 = vmax.f32 %v806, %v807
  %v809 = vrot.slane %v808, 2
  %v810 = vmax.f32 %v808, %v809
  %v811 = vrot.slane %v810, 1
  %v812 = vmax.f32 %v810, %v811
  %v813 = vsel %vm539, %v184, -inf
  %v814 = vrot.slane %v813, 4
  %v815 = vmax.f32 %v813, %v814
  %v816 = vrot.slane %v815, 2
  %v817 = vmax.f32 %v815, %v816
  %v818 = vrot.slane %v817, 1
  %v819 = vmax.f32 %v817, %v818
  %v820 = vsel %vm539, %v37, -inf
  %v821 = vrot.slane %v820, 4
  %v822 = vmax.f32 %v820, %v821
  %v823 = vrot.slane %v822, 2
  %v824 = vmax.f32 %v822, %v823
  %v825 = vrot.slane %v824, 1
  %v826 = vmax.f32 %v824, %v825
  %v827 = vsel %vm539, %v185, -inf
  %v828 = vrot.slane %v827, 4
  %v829 = vmax.f32 %v827, %v828
  %v830 = vrot.slane %v829, 2
  %v831 = vmax.f32 %v829, %v830
  %v832 = vrot.slane %v831, 1
  %v833 = vmax.f32 %v831, %v832
  %v834 = vsel %vm539, %v186, -inf
  %v835 = vrot.slane %v834, 4
  %v836 = vmax.f32 %v834, %v835
  %v837 = vrot.slane %v836, 2
  %v838 = vmax.f32 %v836, %v837
  %v839 = vrot.slane %v838, 1
  %v840 = vmax.f32 %v838, %v839
  %v841 = vsel %vm539, %v187, -inf
  %v842 = vrot.slane %v841, 4
  %v843 = vmax.f32 %v841, %v842
  %v844 = vrot.slane %v843, 2
  %v845 = vmax.f32 %v843, %v844
  %v846 = vrot.slane %v845, 1
  %v847 = vmax.f32 %v845, %v846
  %v848 = vsel %vm539, %v38, -inf
  %v849 = vrot.slane %v848, 4
  %v850 = vmax.f32 %v848, %v849
  %v851 = vrot.slane %v850, 2
  %v852 = vmax.f32 %v850, %v851
  %v853 = vrot.slane %v852, 1
  %v854 = vmax.f32 %v852, %v853
  %v855 = vsel %vm539, %v188, -inf
  %v856 = vrot.slane %v855, 4
  %v857 = vmax.f32 %v855, %v856
  %v858 = vrot.slane %v857, 2
  %v859 = vmax.f32 %v857, %v858
  %v860 = vrot.slane %v859, 1
  %v861 = vmax.f32 %v859, %v860
  %v862 = vsel %vm539, %v189, -inf
  %v863 = vrot.slane %v862, 4
  %v864 = vmax.f32 %v862, %v863
  %v865 = vrot.slane %v864, 2
  %v866 = vmax.f32 %v864, %v865
  %v867 = vrot.slane %v866, 1
  %v868 = vmax.f32 %v866, %v867
  %v869 = vsel %vm539, %v190, -inf
  %v870 = vrot.slane %v869, 4
  %v871 = vmax.f32 %v869, %v870
  %v872 = vrot.slane %v871, 2
  %v873 = vmax.f32 %v871, %v872
  %v874 = vrot.slane %v873, 1
  %v875 = vmax.f32 %v873, %v874
  %v876 = vsel %vm539, %v39, -inf
  %v877 = vrot.slane %v876, 4
  %v878 = vmax.f32 %v876, %v877
  %v879 = vrot.slane %v878, 2
  %v880 = vmax.f32 %v878, %v879
  %v881 = vrot.slane %v880, 1
  %v882 = vmax.f32 %v880, %v881
  %v883 = vsel %vm539, %v191, -inf
  %v884 = vrot.slane %v883, 4
  %v885 = vmax.f32 %v883, %v884
  %v886 = vrot.slane %v885, 2
  %v887 = vmax.f32 %v885, %v886
  %v888 = vrot.slane %v887, 1
  %v889 = vmax.f32 %v887, %v888
  %v890 = vsel %vm539, %v192, -inf
  %v891 = vrot.slane %v890, 4
  %v892 = vmax.f32 %v890, %v891
  %v893 = vrot.slane %v892, 2
  %v894 = vmax.f32 %v892, %v893
  %v895 = vrot.slane %v894, 1
  %v896 = vmax.f32 %v894, %v895
  %v897 = vsel %vm539, %v193, -inf
  %v898 = vrot.slane %v897, 4
  %v899 = vmax.f32 %v897, %v898
  %v900 = vrot.slane %v899, 2
  %v901 = vmax.f32 %v899, %v900
  %v902 = vrot.slane %v901, 1
  %v903 = vmax.f32 %v901, %v902
  %v904 = vsel %vm539, %v40, -inf
  %v905 = vrot.slane %v904, 4
  %v906 = vmax.f32 %v904, %v905
  %v907 = vrot.slane %v906, 2
  %v908 = vmax.f32 %v906, %v907
  %v909 = vrot.slane %v908, 1
  %v910 = vmax.f32 %v908, %v909
  %v911 = vsel %vm539, %v194, -inf
  %v912 = vrot.slane %v911, 4
  %v913 = vmax.f32 %v911, %v912
  %v914 = vrot.slane %v913, 2
  %v915 = vmax.f32 %v913, %v914
  %v916 = vrot.slane %v915, 1
  %v917 = vmax.f32 %v915, %v916
  %v918 = vsel %vm539, %v195, -inf
  %v919 = vrot.slane %v918, 4
  %v920 = vmax.f32 %v918, %v919
  %v921 = vrot.slane %v920, 2
  %v922 = vmax.f32 %v920, %v921
  %v923 = vrot.slane %v922, 1
  %v924 = vmax.f32 %v922, %v923
  %v925 = vsel %vm539, %v196, -inf
  %v926 = vrot.slane %v925, 4
  %v927 = vmax.f32 %v925, %v926
  %v928 = vrot.slane %v927, 2
  %v929 = vmax.f32 %v927, %v928
  %v930 = vrot.slane %v929, 1
  %v931 = vmax.f32 %v929, %v930
  %v932 = vsel %vm539, %v41, -inf
  %v933 = vrot.slane %v932, 4
  %v934 = vmax.f32 %v932, %v933
  %v935 = vrot.slane %v934, 2
  %v936 = vmax.f32 %v934, %v935
  %v937 = vrot.slane %v936, 1
  %v938 = vmax.f32 %v936, %v937
  %v939 = vsel %vm539, %v197, -inf
  %v940 = vrot.slane %v939, 4
  %v941 = vmax.f32 %v939, %v940
  %v942 = vrot.slane %v941, 2
  %v943 = vmax.f32 %v941, %v942
  %v944 = vrot.slane %v943, 1
  %v945 = vmax.f32 %v943, %v944
  %v946 = vsel %vm539, %v198, -inf
  %v947 = vrot.slane %v946, 4
  %v948 = vmax.f32 %v946, %v947
  %v949 = vrot.slane %v948, 2
  %v950 = vmax.f32 %v948, %v949
  %v951 = vrot.slane %v950, 1
  %v952 = vmax.f32 %v950, %v951
  %v953 = vsel %vm539, %v199, -inf
  %v954 = vrot.slane %v953, 4
  %v955 = vmax.f32 %v953, %v954
  %v956 = vrot.slane %v955, 2
  %v957 = vmax.f32 %v955, %v956
  %v958 = vrot.slane %v957, 1
  %v959 = vmax.f32 %v957, %v958
  %v960 = vsel %vm539, %v42, -inf
  %v961 = vrot.slane %v960, 4
  %v962 = vmax.f32 %v960, %v961
  %v963 = vrot.slane %v962, 2
  %v964 = vmax.f32 %v962, %v963
  %v965 = vrot.slane %v964, 1
  %v966 = vmax.f32 %v964, %v965
  %v967 = vsel %vm539, %v200, -inf
  %v968 = vrot.slane %v967, 4
  %v969 = vmax.f32 %v967, %v968
  %v970 = vrot.slane %v969, 2
  %v971 = vmax.f32 %v969, %v970
  %v972 = vrot.slane %v971, 1
  %v973 = vmax.f32 %v971, %v972
  %v974 = vsel %vm539, %v201, -inf
  %v975 = vrot.slane %v974, 4
  %v976 = vmax.f32 %v974, %v975
  %v977 = vrot.slane %v976, 2
  %v978 = vmax.f32 %v976, %v977
  %v979 = vrot.slane %v978, 1
  %v980 = vmax.f32 %v978, %v979
  %v981 = vsel %vm539, %v202, -inf
  %v982 = vrot.slane %v981, 4
  %v983 = vmax.f32 %v981, %v982
  %v984 = vrot.slane %v983, 2
  %v985 = vmax.f32 %v983, %v984
  %v986 = vrot.slane %v985, 1
  %v987 = vmax.f32 %v985, %v986
  %v988 = vsel %vm539, %v43, -inf
  %v989 = vrot.slane %v988, 4
  %v990 = vmax.f32 %v988, %v989
  %v991 = vrot.slane %v990, 2
  %v992 = vmax.f32 %v990, %v991
  %v993 = vrot.slane %v992, 1
  %v994 = vmax.f32 %v992, %v993
  %v995 = vsel %vm539, %v203, -inf
  %v996 = vrot.slane %v995, 4
  %v997 = vmax.f32 %v995, %v996
  %v998 = vrot.slane %v997, 2
  %v999 = vmax.f32 %v997, %v998
  %v1000 = vrot.slane %v999, 1
  %v1001 = vmax.f32 %v999, %v1000
  %v1002 = vsel %vm539, %v204, -inf
  %v1003 = vrot.slane %v1002, 4
  %v1004 = vmax.f32 %v1002, %v1003
  %v1005 = vrot.slane %v1004, 2
  %v1006 = vmax.f32 %v1004, %v1005
  %v1007 = vrot.slane %v1006, 1
  %v1008 = vmax.f32 %v1006, %v1007
  %v1009 = vsel %vm539, %v205, -inf
  %v1010 = vrot.slane %v1009, 4
  %v1011 = vmax.f32 %v1009, %v1010
  %v1012 = vrot.slane %v1011, 2
  %v1013 = vmax.f32 %v1011, %v1012
  %v1014 = vrot.slane %v1013, 1
  %v1015 = vmax.f32 %v1013, %v1014
  %v1016 = vsel %vm539, %v44, -inf
  %v1017 = vrot.slane %v1016, 4
  %v1018 = vmax.f32 %v1016, %v1017
  %v1019 = vrot.slane %v1018, 2
  %v1020 = vmax.f32 %v1018, %v1019
  %v1021 = vrot.slane %v1020, 1
  %v1022 = vmax.f32 %v1020, %v1021
  %v1023 = vsel %vm539, %v206, -inf
  %v1024 = vrot.slane %v1023, 4
  %v1025 = vmax.f32 %v1023, %v1024
  %v1026 = vrot.slane %v1025, 2
  %v1027 = vmax.f32 %v1025, %v1026
  %v1028 = vrot.slane %v1027, 1
  %v1029 = vmax.f32 %v1027, %v1028
  %v1030 = vsel %vm539, %v207, -inf
  %v1031 = vrot.slane %v1030, 4
  %v1032 = vmax.f32 %v1030, %v1031
  %v1033 = vrot.slane %v1032, 2
  %v1034 = vmax.f32 %v1032, %v1033
  %v1035 = vrot.slane %v1034, 1
  %v1036 = vmax.f32 %v1034, %v1035
  %v1037 = vsel %vm539, %v208, -inf
  %v1038 = vrot.slane %v1037, 4
  %v1039 = vmax.f32 %v1037, %v1038
  %v1040 = vrot.slane %v1039, 2
  %v1041 = vmax.f32 %v1039, %v1040
  %v1042 = vrot.slane %v1041, 1
  %v1043 = vmax.f32 %v1041, %v1042
  %v1044 = vsel %vm539, %v45, -inf
  %v1045 = vrot.slane %v1044, 4
  %v1046 = vmax.f32 %v1044, %v1045
  %v1047 = vrot.slane %v1046, 2
  %v1048 = vmax.f32 %v1046, %v1047
  %v1049 = vrot.slane %v1048, 1
  %v1050 = vmax.f32 %v1048, %v1049
  %v1051 = vsel %vm539, %v209, -inf
  %v1052 = vrot.slane %v1051, 4
  %v1053 = vmax.f32 %v1051, %v1052
  %v1054 = vrot.slane %v1053, 2
  %v1055 = vmax.f32 %v1053, %v1054
  %v1056 = vrot.slane %v1055, 1
  %v1057 = vmax.f32 %v1055, %v1056
  %v1058 = vsel %vm539, %v210, -inf
  %v1059 = vrot.slane %v1058, 4
  %v1060 = vmax.f32 %v1058, %v1059
  %v1061 = vrot.slane %v1060, 2
  %v1062 = vmax.f32 %v1060, %v1061
  %v1063 = vrot.slane %v1062, 1
  %v1064 = vmax.f32 %v1062, %v1063
  %v1065 = vsel %vm539, %v211, -inf
  %v1066 = vrot.slane %v1065, 4
  %v1067 = vmax.f32 %v1065, %v1066
  %v1068 = vrot.slane %v1067, 2
  %v1069 = vmax.f32 %v1067, %v1068
  %v1070 = vrot.slane %v1069, 1
  %v1071 = vmax.f32 %v1069, %v1070
  %v1072 = vsel %vm539, %v46, -inf
  %v1073 = vrot.slane %v1072, 4
  %v1074 = vmax.f32 %v1072, %v1073
  %v1075 = vrot.slane %v1074, 2
  %v1076 = vmax.f32 %v1074, %v1075
  %v1077 = vrot.slane %v1076, 1
  %v1078 = vmax.f32 %v1076, %v1077
  %v1079 = vsel %vm539, %v212, -inf
  %v1080 = vrot.slane %v1079, 4
  %v1081 = vmax.f32 %v1079, %v1080
  %v1082 = vrot.slane %v1081, 2
  %v1083 = vmax.f32 %v1081, %v1082
  %v1084 = vrot.slane %v1083, 1
  %v1085 = vmax.f32 %v1083, %v1084
  %v1086 = vsel %vm539, %v213, -inf
  %v1087 = vrot.slane %v1086, 4
  %v1088 = vmax.f32 %v1086, %v1087
  %v1089 = vrot.slane %v1088, 2
  %v1090 = vmax.f32 %v1088, %v1089
  %v1091 = vrot.slane %v1090, 1
  %v1092 = vmax.f32 %v1090, %v1091
  %v1093 = vsel %vm539, %v214, -inf
  %v1094 = vrot.slane %v1093, 4
  %v1095 = vmax.f32 %v1093, %v1094
  %v1096 = vrot.slane %v1095, 2
  %v1097 = vmax.f32 %v1095, %v1096
  %v1098 = vrot.slane %v1097, 1
  %v1099 = vmax.f32 %v1097, %v1098
  %v1100 = vsel %vm539, %v47, -inf
  %v1101 = vrot.slane %v1100, 4
  %v1102 = vmax.f32 %v1100, %v1101
  %v1103 = vrot.slane %v1102, 2
  %v1104 = vmax.f32 %v1102, %v1103
  %v1105 = vrot.slane %v1104, 1
  %v1106 = vmax.f32 %v1104, %v1105
  %v1107 = vsel %vm539, %v215, -inf
  %v1108 = vrot.slane %v1107, 4
  %v1109 = vmax.f32 %v1107, %v1108
  %v1110 = vrot.slane %v1109, 2
  %v1111 = vmax.f32 %v1109, %v1110
  %v1112 = vrot.slane %v1111, 1
  %v1113 = vmax.f32 %v1111, %v1112
  %v1114 = vsel %vm539, %v216, -inf
  %v1115 = vrot.slane %v1114, 4
  %v1116 = vmax.f32 %v1114, %v1115
  %v1117 = vrot.slane %v1116, 2
  %v1118 = vmax.f32 %v1116, %v1117
  %v1119 = vrot.slane %v1118, 1
  %v1120 = vmax.f32 %v1118, %v1119
  %v1121 = vsel %vm539, %v217, -inf
  %v1122 = vrot.slane %v1121, 4
  %v1123 = vmax.f32 %v1121, %v1122
  %v1124 = vrot.slane %v1123, 2
  %v1125 = vmax.f32 %v1123, %v1124
  %v1126 = vrot.slane %v1125, 1
  %v1127 = vmax.f32 %v1125, %v1126
  %v1128 = vsel %vm539, %v48, -inf
  %v1129 = vrot.slane %v1128, 4
  %v1130 = vmax.f32 %v1128, %v1129
  %v1131 = vrot.slane %v1130, 2
  %v1132 = vmax.f32 %v1130, %v1131
  %v1133 = vrot.slane %v1132, 1
  %v1134 = vmax.f32 %v1132, %v1133
  %v1135 = vsel %vm539, %v218, -inf
  %v1136 = vrot.slane %v1135, 4
  %v1137 = vmax.f32 %v1135, %v1136
  %v1138 = vrot.slane %v1137, 2
  %v1139 = vmax.f32 %v1137, %v1138
  %v1140 = vrot.slane %v1139, 1
  %v1141 = vmax.f32 %v1139, %v1140
  %v1142 = vsel %vm539, %v219, -inf
  %v1143 = vrot.slane %v1142, 4
  %v1144 = vmax.f32 %v1142, %v1143
  %v1145 = vrot.slane %v1144, 2
  %v1146 = vmax.f32 %v1144, %v1145
  %v1147 = vrot.slane %v1146, 1
  %v1148 = vmax.f32 %v1146, %v1147
  %v1149 = vsel %vm539, %v220, -inf
  %v1150 = vrot.slane %v1149, 4
  %v1151 = vmax.f32 %v1149, %v1150
  %v1152 = vrot.slane %v1151, 2
  %v1153 = vmax.f32 %v1151, %v1152
  %v1154 = vrot.slane %v1153, 1
  %v1155 = vmax.f32 %v1153, %v1154
  %v1156 = vsel %vm539, %v49, -inf
  %v1157 = vrot.slane %v1156, 4
  %v1158 = vmax.f32 %v1156, %v1157
  %v1159 = vrot.slane %v1158, 2
  %v1160 = vmax.f32 %v1158, %v1159
  %v1161 = vrot.slane %v1160, 1
  %v1162 = vmax.f32 %v1160, %v1161
  %v1163 = vsel %vm539, %v221, -inf
  %v1164 = vrot.slane %v1163, 4
  %v1165 = vmax.f32 %v1163, %v1164
  %v1166 = vrot.slane %v1165, 2
  %v1167 = vmax.f32 %v1165, %v1166
  %v1168 = vrot.slane %v1167, 1
  %v1169 = vmax.f32 %v1167, %v1168
  %v1170 = vsel %vm539, %v222, -inf
  %v1171 = vrot.slane %v1170, 4
  %v1172 = vmax.f32 %v1170, %v1171
  %v1173 = vrot.slane %v1172, 2
  %v1174 = vmax.f32 %v1172, %v1173
  %v1175 = vrot.slane %v1174, 1
  %v1176 = vmax.f32 %v1174, %v1175
  %v1177 = vsel %vm539, %v223, -inf
  %v1178 = vrot.slane %v1177, 4
  %v1179 = vmax.f32 %v1177, %v1178
  %v1180 = vrot.slane %v1179, 2
  %v1181 = vmax.f32 %v1179, %v1180
  %v1182 = vrot.slane %v1181, 1
  %v1183 = vmax.f32 %v1181, %v1182
  %v1184 = vsel %vm539, %v50, -inf
  %v1185 = vrot.slane %v1184, 4
  %v1186 = vmax.f32 %v1184, %v1185
  %v1187 = vrot.slane %v1186, 2
  %v1188 = vmax.f32 %v1186, %v1187
  %v1189 = vrot.slane %v1188, 1
  %v1190 = vmax.f32 %v1188, %v1189
  %v1191 = vsel %vm539, %v224, -inf
  %v1192 = vrot.slane %v1191, 4
  %v1193 = vmax.f32 %v1191, %v1192
  %v1194 = vrot.slane %v1193, 2
  %v1195 = vmax.f32 %v1193, %v1194
  %v1196 = vrot.slane %v1195, 1
  %v1197 = vmax.f32 %v1195, %v1196
  %v1198 = vsel %vm539, %v225, -inf
  %v1199 = vrot.slane %v1198, 4
  %v1200 = vmax.f32 %v1198, %v1199
  %v1201 = vrot.slane %v1200, 2
  %v1202 = vmax.f32 %v1200, %v1201
  %v1203 = vrot.slane %v1202, 1
  %v1204 = vmax.f32 %v1202, %v1203
  %v1205 = vsel %vm539, %v226, -inf
  %v1206 = vrot.slane %v1205, 4
  %v1207 = vmax.f32 %v1205, %v1206
  %v1208 = vrot.slane %v1207, 2
  %v1209 = vmax.f32 %v1207, %v1208
  %v1210 = vrot.slane %v1209, 1
  %v1211 = vmax.f32 %v1209, %v1210
  %v1212 = vsel %vm539, %v51, -inf
  %v1213 = vrot.slane %v1212, 4
  %v1214 = vmax.f32 %v1212, %v1213
  %v1215 = vrot.slane %v1214, 2
  %v1216 = vmax.f32 %v1214, %v1215
  %v1217 = vrot.slane %v1216, 1
  %v1218 = vmax.f32 %v1216, %v1217
  %v1219 = vsel %vm539, %v227, -inf
  %v1220 = vrot.slane %v1219, 4
  %v1221 = vmax.f32 %v1219, %v1220
  %v1222 = vrot.slane %v1221, 2
  %v1223 = vmax.f32 %v1221, %v1222
  %v1224 = vrot.slane %v1223, 1
  %v1225 = vmax.f32 %v1223, %v1224
  %v1226 = vsel %vm539, %v228, -inf
  %v1227 = vrot.slane %v1226, 4
  %v1228 = vmax.f32 %v1226, %v1227
  %v1229 = vrot.slane %v1228, 2
  %v1230 = vmax.f32 %v1228, %v1229
  %v1231 = vrot.slane %v1230, 1
  %v1232 = vmax.f32 %v1230, %v1231
  %v1233 = vsel %vm539, %v229, -inf
  %v1234 = vrot.slane %v1233, 4
  %v1235 = vmax.f32 %v1233, %v1234
  %v1236 = vrot.slane %v1235, 2
  %v1237 = vmax.f32 %v1235, %v1236
  %v1238 = vrot.slane %v1237, 1
  %v1239 = vmax.f32 %v1237, %v1238
  %v1240 = vsel %vm539, %v52, -inf
  %v1241 = vrot.slane %v1240, 4
  %v1242 = vmax.f32 %v1240, %v1241
  %v1243 = vrot.slane %v1242, 2
  %v1244 = vmax.f32 %v1242, %v1243
  %v1245 = vrot.slane %v1244, 1
  %v1246 = vmax.f32 %v1244, %v1245
  %v1247 = vsel %vm539, %v230, -inf
  %v1248 = vrot.slane %v1247, 4
  %v1249 = vmax.f32 %v1247, %v1248
  %v1250 = vrot.slane %v1249, 2
  %v1251 = vmax.f32 %v1249, %v1250
  %v1252 = vrot.slane %v1251, 1
  %v1253 = vmax.f32 %v1251, %v1252
  %v1254 = vsel %vm539, %v231, -inf
  %v1255 = vrot.slane %v1254, 4
  %v1256 = vmax.f32 %v1254, %v1255
  %v1257 = vrot.slane %v1256, 2
  %v1258 = vmax.f32 %v1256, %v1257
  %v1259 = vrot.slane %v1258, 1
  %v1260 = vmax.f32 %v1258, %v1259
  %v1261 = vsel %vm539, %v232, -inf
  %v1262 = vrot.slane %v1261, 4
  %v1263 = vmax.f32 %v1261, %v1262
  %v1264 = vrot.slane %v1263, 2
  %v1265 = vmax.f32 %v1263, %v1264
  %v1266 = vrot.slane %v1265, 1
  %v1267 = vmax.f32 %v1265, %v1266
  %v1268 = vsel %vm539, %v53, -inf
  %v1269 = vrot.slane %v1268, 4
  %v1270 = vmax.f32 %v1268, %v1269
  %v1271 = vrot.slane %v1270, 2
  %v1272 = vmax.f32 %v1270, %v1271
  %v1273 = vrot.slane %v1272, 1
  %v1274 = vmax.f32 %v1272, %v1273
  %v1275 = vsel %vm539, %v233, -inf
  %v1276 = vrot.slane %v1275, 4
  %v1277 = vmax.f32 %v1275, %v1276
  %v1278 = vrot.slane %v1277, 2
  %v1279 = vmax.f32 %v1277, %v1278
  %v1280 = vrot.slane %v1279, 1
  %v1281 = vmax.f32 %v1279, %v1280
  %v1282 = vsel %vm539, %v234, -inf
  %v1283 = vrot.slane %v1282, 4
  %v1284 = vmax.f32 %v1282, %v1283
  %v1285 = vrot.slane %v1284, 2
  %v1286 = vmax.f32 %v1284, %v1285
  %v1287 = vrot.slane %v1286, 1
  %v1288 = vmax.f32 %v1286, %v1287
  %v1289 = vsel %vm539, %v235, -inf
  %v1290 = vrot.slane %v1289, 4
  %v1291 = vmax.f32 %v1289, %v1290
  %v1292 = vrot.slane %v1291, 2
  %v1293 = vmax.f32 %v1291, %v1292
  %v1294 = vrot.slane %v1293, 1
  %v1295 = vmax.f32 %v1293, %v1294
  %v1296 = vsel %vm539, %v54, -inf
  %v1297 = vrot.slane %v1296, 4
  %v1298 = vmax.f32 %v1296, %v1297
  %v1299 = vrot.slane %v1298, 2
  %v1300 = vmax.f32 %v1298, %v1299
  %v1301 = vrot.slane %v1300, 1
  %v1302 = vmax.f32 %v1300, %v1301
  %v1303 = vsel %vm539, %v236, -inf
  %v1304 = vrot.slane %v1303, 4
  %v1305 = vmax.f32 %v1303, %v1304
  %v1306 = vrot.slane %v1305, 2
  %v1307 = vmax.f32 %v1305, %v1306
  %v1308 = vrot.slane %v1307, 1
  %v1309 = vmax.f32 %v1307, %v1308
  %v1310 = vsel %vm539, %v237, -inf
  %v1311 = vrot.slane %v1310, 4
  %v1312 = vmax.f32 %v1310, %v1311
  %v1313 = vrot.slane %v1312, 2
  %v1314 = vmax.f32 %v1312, %v1313
  %v1315 = vrot.slane %v1314, 1
  %v1316 = vmax.f32 %v1314, %v1315
  %v1317 = vsel %vm539, %v238, -inf
  %v1318 = vrot.slane %v1317, 4
  %v1319 = vmax.f32 %v1317, %v1318
  %v1320 = vrot.slane %v1319, 2
  %v1321 = vmax.f32 %v1319, %v1320
  %v1322 = vrot.slane %v1321, 1
  %v1323 = vmax.f32 %v1321, %v1322
  %v1324 = vsel %vm539, %v55, -inf
  %v1325 = vrot.slane %v1324, 4
  %v1326 = vmax.f32 %v1324, %v1325
  %v1327 = vrot.slane %v1326, 2
  %v1328 = vmax.f32 %v1326, %v1327
  %v1329 = vrot.slane %v1328, 1
  %v1330 = vmax.f32 %v1328, %v1329
  %v1331 = vsel %vm539, %v239, -inf
  %v1332 = vrot.slane %v1331, 4
  %v1333 = vmax.f32 %v1331, %v1332
  %v1334 = vrot.slane %v1333, 2
  %v1335 = vmax.f32 %v1333, %v1334
  %v1336 = vrot.slane %v1335, 1
  %v1337 = vmax.f32 %v1335, %v1336
  %v1338 = vsel %vm539, %v240, -inf
  %v1339 = vrot.slane %v1338, 4
  %v1340 = vmax.f32 %v1338, %v1339
  %v1341 = vrot.slane %v1340, 2
  %v1342 = vmax.f32 %v1340, %v1341
  %v1343 = vrot.slane %v1342, 1
  %v1344 = vmax.f32 %v1342, %v1343
  %v1345 = vsel %vm539, %v241, -inf
  %v1346 = vrot.slane %v1345, 4
  %v1347 = vmax.f32 %v1345, %v1346
  %v1348 = vrot.slane %v1347, 2
  %v1349 = vmax.f32 %v1347, %v1348
  %v1350 = vrot.slane %v1349, 1
  %v1351 = vmax.f32 %v1349, %v1350
  %v1352 = vsel %vm539, %v56, -inf
  %v1353 = vrot.slane %v1352, 4
  %v1354 = vmax.f32 %v1352, %v1353
  %v1355 = vrot.slane %v1354, 2
  %v1356 = vmax.f32 %v1354, %v1355
  %v1357 = vrot.slane %v1356, 1
  %v1358 = vmax.f32 %v1356, %v1357
  %v1359 = vsel %vm539, %v242, -inf
  %v1360 = vrot.slane %v1359, 4
  %v1361 = vmax.f32 %v1359, %v1360
  %v1362 = vrot.slane %v1361, 2
  %v1363 = vmax.f32 %v1361, %v1362
  %v1364 = vrot.slane %v1363, 1
  %v1365 = vmax.f32 %v1363, %v1364
  %v1366 = vsel %vm539, %v243, -inf
  %v1367 = vrot.slane %v1366, 4
  %v1368 = vmax.f32 %v1366, %v1367
  %v1369 = vrot.slane %v1368, 2
  %v1370 = vmax.f32 %v1368, %v1369
  %v1371 = vrot.slane %v1370, 1
  %v1372 = vmax.f32 %v1370, %v1371
  %v1373 = vsel %vm539, %v244, -inf
  %v1374 = vrot.slane %v1373, 4
  %v1375 = vmax.f32 %v1373, %v1374
  %v1376 = vrot.slane %v1375, 2
  %v1377 = vmax.f32 %v1375, %v1376
  %v1378 = vrot.slane %v1377, 1
  %v1379 = vmax.f32 %v1377, %v1378
  %v1380 = vsel %vm539, %v57, -inf
  %v1381 = vrot.slane %v1380, 4
  %v1382 = vmax.f32 %v1380, %v1381
  %v1383 = vrot.slane %v1382, 2
  %v1384 = vmax.f32 %v1382, %v1383
  %v1385 = vrot.slane %v1384, 1
  %v1386 = vmax.f32 %v1384, %v1385
  %v1387 = vsel %vm539, %v245, -inf
  %v1388 = vrot.slane %v1387, 4
  %v1389 = vmax.f32 %v1387, %v1388
  %v1390 = vrot.slane %v1389, 2
  %v1391 = vmax.f32 %v1389, %v1390
  %v1392 = vrot.slane %v1391, 1
  %v1393 = vmax.f32 %v1391, %v1392
  %v1394 = vsel %vm539, %v246, -inf
  %v1395 = vrot.slane %v1394, 4
  %v1396 = vmax.f32 %v1394, %v1395
  %v1397 = vrot.slane %v1396, 2
  %v1398 = vmax.f32 %v1396, %v1397
  %v1399 = vrot.slane %v1398, 1
  %v1400 = vmax.f32 %v1398, %v1399
  %v1401 = vsel %vm539, %v247, -inf
  %v1402 = vrot.slane %v1401, 4
  %v1403 = vmax.f32 %v1401, %v1402
  %v1404 = vrot.slane %v1403, 2
  %v1405 = vmax.f32 %v1403, %v1404
  %v1406 = vrot.slane %v1405, 1
  %v1407 = vmax.f32 %v1405, %v1406
  %v1408 = vsel %vm539, %v58, -inf
  %v1409 = vrot.slane %v1408, 4
  %v1410 = vmax.f32 %v1408, %v1409
  %v1411 = vrot.slane %v1410, 2
  %v1412 = vmax.f32 %v1410, %v1411
  %v1413 = vrot.slane %v1412, 1
  %v1414 = vmax.f32 %v1412, %v1413
  %v1415 = vsel %vm539, %v248, -inf
  %v1416 = vrot.slane %v1415, 4
  %v1417 = vmax.f32 %v1415, %v1416
  %v1418 = vrot.slane %v1417, 2
  %v1419 = vmax.f32 %v1417, %v1418
  %v1420 = vrot.slane %v1419, 1
  %v1421 = vmax.f32 %v1419, %v1420
  %v1422 = vsel %vm539, %v249, -inf
  %v1423 = vrot.slane %v1422, 4
  %v1424 = vmax.f32 %v1422, %v1423
  %v1425 = vrot.slane %v1424, 2
  %v1426 = vmax.f32 %v1424, %v1425
  %v1427 = vrot.slane %v1426, 1
  %v1428 = vmax.f32 %v1426, %v1427
  %v1429 = vsel %vm539, %v250, -inf
  %v1430 = vrot.slane %v1429, 4
  %v1431 = vmax.f32 %v1429, %v1430
  %v1432 = vrot.slane %v1431, 2
  %v1433 = vmax.f32 %v1431, %v1432
  %v1434 = vrot.slane %v1433, 1
  %v1435 = vmax.f32 %v1433, %v1434
  %v1436 = vsel %vm539, %v59, -inf
  %v1437 = vrot.slane %v1436, 4
  %v1438 = vmax.f32 %v1436, %v1437
  %v1439 = vrot.slane %v1438, 2
  %v1440 = vmax.f32 %v1438, %v1439
  %v1441 = vrot.slane %v1440, 1
  %v1442 = vmax.f32 %v1440, %v1441
  %v1443 = vsel %vm539, %v251, -inf
  %v1444 = vrot.slane %v1443, 4
  %v1445 = vmax.f32 %v1443, %v1444
  %v1446 = vrot.slane %v1445, 2
  %v1447 = vmax.f32 %v1445, %v1446
  %v1448 = vrot.slane %v1447, 1
  %v1449 = vmax.f32 %v1447, %v1448
  %v1450 = vsel %vm539, %v252, -inf
  %v1451 = vrot.slane %v1450, 4
  %v1452 = vmax.f32 %v1450, %v1451
  %v1453 = vrot.slane %v1452, 2
  %v1454 = vmax.f32 %v1452, %v1453
  %v1455 = vrot.slane %v1454, 1
  %v1456 = vmax.f32 %v1454, %v1455
  %v1457 = vsel %vm539, %v253, -inf
  %v1458 = vrot.slane %v1457, 4
  %v1459 = vmax.f32 %v1457, %v1458
  %v1460 = vrot.slane %v1459, 2
  %v1461 = vmax.f32 %v1459, %v1460
  %v1462 = vrot.slane %v1461, 1
  %v1463 = vmax.f32 %v1461, %v1462
  %v1464 = vsel %vm539, %v60, -inf
  %v1465 = vrot.slane %v1464, 4
  %v1466 = vmax.f32 %v1464, %v1465
  %v1467 = vrot.slane %v1466, 2
  %v1468 = vmax.f32 %v1466, %v1467
  %v1469 = vrot.slane %v1468, 1
  %v1470 = vmax.f32 %v1468, %v1469
  %v1471 = vsel %vm539, %v254, -inf
  %v1472 = vrot.slane %v1471, 4
  %v1473 = vmax.f32 %v1471, %v1472
  %v1474 = vrot.slane %v1473, 2
  %v1475 = vmax.f32 %v1473, %v1474
  %v1476 = vrot.slane %v1475, 1
  %v1477 = vmax.f32 %v1475, %v1476
  %v1478 = vsel %vm539, %v255, -inf
  %v1479 = vrot.slane %v1478, 4
  %v1480 = vmax.f32 %v1478, %v1479
  %v1481 = vrot.slane %v1480, 2
  %v1482 = vmax.f32 %v1480, %v1481
  %v1483 = vrot.slane %v1482, 1
  %v1484 = vmax.f32 %v1482, %v1483
  %v1485 = vsel %vm539, %v256, -inf
  %v1486 = vrot.slane %v1485, 4
  %v1487 = vmax.f32 %v1485, %v1486
  %v1488 = vrot.slane %v1487, 2
  %v1489 = vmax.f32 %v1487, %v1488
  %v1490 = vrot.slane %v1489, 1
  %v1491 = vmax.f32 %v1489, %v1490
  %v1492 = vsel %vm539, %v61, -inf
  %v1493 = vrot.slane %v1492, 4
  %v1494 = vmax.f32 %v1492, %v1493
  %v1495 = vrot.slane %v1494, 2
  %v1496 = vmax.f32 %v1494, %v1495
  %v1497 = vrot.slane %v1496, 1
  %v1498 = vmax.f32 %v1496, %v1497
  %v1499 = vsel %vm539, %v257, -inf
  %v1500 = vrot.slane %v1499, 4
  %v1501 = vmax.f32 %v1499, %v1500
  %v1502 = vrot.slane %v1501, 2
  %v1503 = vmax.f32 %v1501, %v1502
  %v1504 = vrot.slane %v1503, 1
  %v1505 = vmax.f32 %v1503, %v1504
  %v1506 = vsel %vm539, %v258, -inf
  %v1507 = vrot.slane %v1506, 4
  %v1508 = vmax.f32 %v1506, %v1507
  %v1509 = vrot.slane %v1508, 2
  %v1510 = vmax.f32 %v1508, %v1509
  %v1511 = vrot.slane %v1510, 1
  %v1512 = vmax.f32 %v1510, %v1511
  %v1513 = vsel %vm539, %v259, -inf
  %v1514 = vrot.slane %v1513, 4
  %v1515 = vmax.f32 %v1513, %v1514
  %v1516 = vrot.slane %v1515, 2
  %v1517 = vmax.f32 %v1515, %v1516
  %v1518 = vrot.slane %v1517, 1
  %v1519 = vmax.f32 %v1517, %v1518
  %v1520 = vsel %vm539, %v62, -inf
  %v1521 = vrot.slane %v1520, 4
  %v1522 = vmax.f32 %v1520, %v1521
  %v1523 = vrot.slane %v1522, 2
  %v1524 = vmax.f32 %v1522, %v1523
  %v1525 = vrot.slane %v1524, 1
  %v1526 = vmax.f32 %v1524, %v1525
  %v1527 = vsel %vm539, %v260, -inf
  %v1528 = vrot.slane %v1527, 4
  %v1529 = vmax.f32 %v1527, %v1528
  %v1530 = vrot.slane %v1529, 2
  %v1531 = vmax.f32 %v1529, %v1530
  %v1532 = vrot.slane %v1531, 1
  %v1533 = vmax.f32 %v1531, %v1532
  %v1534 = vsel %vm539, %v261, -inf
  %v1535 = vrot.slane %v1534, 4
  %v1536 = vmax.f32 %v1534, %v1535
  %v1537 = vrot.slane %v1536, 2
  %v1538 = vmax.f32 %v1536, %v1537
  %v1539 = vrot.slane %v1538, 1
  %v1540 = vmax.f32 %v1538, %v1539
  %v1541 = vsel %vm539, %v262, -inf
  %v1542 = vrot.slane %v1541, 4
  %v1543 = vmax.f32 %v1541, %v1542
  %v1544 = vrot.slane %v1543, 2
  %v1545 = vmax.f32 %v1543, %v1544
  %v1546 = vrot.slane %v1545, 1
  %v1547 = vmax.f32 %v1545, %v1546
  %v1548 = vsel %vm539, %v63, -inf
  %v1549 = vrot.slane %v1548, 4
  %v1550 = vmax.f32 %v1548, %v1549
  %v1551 = vrot.slane %v1550, 2
  %v1552 = vmax.f32 %v1550, %v1551
  %v1553 = vrot.slane %v1552, 1
  %v1554 = vmax.f32 %v1552, %v1553
  %v1555 = vsel %vm539, %v263, -inf
  %v1556 = vrot.slane %v1555, 4
  %v1557 = vmax.f32 %v1555, %v1556
  %v1558 = vrot.slane %v1557, 2
  %v1559 = vmax.f32 %v1557, %v1558
  %v1560 = vrot.slane %v1559, 1
  %v1561 = vmax.f32 %v1559, %v1560
  %v1562 = vsel %vm539, %v264, -inf
  %v1563 = vrot.slane %v1562, 4
  %v1564 = vmax.f32 %v1562, %v1563
  %v1565 = vrot.slane %v1564, 2
  %v1566 = vmax.f32 %v1564, %v1565
  %v1567 = vrot.slane %v1566, 1
  %v1568 = vmax.f32 %v1566, %v1567
  %v1569 = vsel %vm539, %v265, -inf
  %v1570 = vrot.slane %v1569, 4
  %v1571 = vmax.f32 %v1569, %v1570
  %v1572 = vrot.slane %v1571, 2
  %v1573 = vmax.f32 %v1571, %v1572
  %v1574 = vrot.slane %v1573, 1
  %v1575 = vmax.f32 %v1573, %v1574
  %v1576 = vsel %vm539, %v64, -inf
  %v1577 = vrot.slane %v1576, 4
  %v1578 = vmax.f32 %v1576, %v1577
  %v1579 = vrot.slane %v1578, 2
  %v1580 = vmax.f32 %v1578, %v1579
  %v1581 = vrot.slane %v1580, 1
  %v1582 = vmax.f32 %v1580, %v1581
  %v1583 = vsel %vm539, %v266, -inf
  %v1584 = vrot.slane %v1583, 4
  %v1585 = vmax.f32 %v1583, %v1584
  %v1586 = vrot.slane %v1585, 2
  %v1587 = vmax.f32 %v1585, %v1586
  %v1588 = vrot.slane %v1587, 1
  %v1589 = vmax.f32 %v1587, %v1588
  %v1590 = vsel %vm539, %v267, -inf
  %v1591 = vrot.slane %v1590, 4
  %v1592 = vmax.f32 %v1590, %v1591
  %v1593 = vrot.slane %v1592, 2
  %v1594 = vmax.f32 %v1592, %v1593
  %v1595 = vrot.slane %v1594, 1
  %v1596 = vmax.f32 %v1594, %v1595
  %v1597 = vsel %vm539, %v268, -inf
  %v1598 = vrot.slane %v1597, 4
  %v1599 = vmax.f32 %v1597, %v1598
  %v1600 = vrot.slane %v1599, 2
  %v1601 = vmax.f32 %v1599, %v1600
  %v1602 = vrot.slane %v1601, 1
  %v1603 = vmax.f32 %v1601, %v1602
  %v1604 = vsel %vm539, %v65, -inf
  %v1605 = vrot.slane %v1604, 4
  %v1606 = vmax.f32 %v1604, %v1605
  %v1607 = vrot.slane %v1606, 2
  %v1608 = vmax.f32 %v1606, %v1607
  %v1609 = vrot.slane %v1608, 1
  %v1610 = vmax.f32 %v1608, %v1609
  %v1611 = vsel %vm539, %v269, -inf
  %v1612 = vrot.slane %v1611, 4
  %v1613 = vmax.f32 %v1611, %v1612
  %v1614 = vrot.slane %v1613, 2
  %v1615 = vmax.f32 %v1613, %v1614
  %v1616 = vrot.slane %v1615, 1
  %v1617 = vmax.f32 %v1615, %v1616
  %v1618 = vsel %vm539, %v270, -inf
  %v1619 = vrot.slane %v1618, 4
  %v1620 = vmax.f32 %v1618, %v1619
  %v1621 = vrot.slane %v1620, 2
  %v1622 = vmax.f32 %v1620, %v1621
  %v1623 = vrot.slane %v1622, 1
  %v1624 = vmax.f32 %v1622, %v1623
  %v1625 = vsel %vm539, %v271, -inf
  %v1626 = vrot.slane %v1625, 4
  %v1627 = vmax.f32 %v1625, %v1626
  %v1628 = vrot.slane %v1627, 2
  %v1629 = vmax.f32 %v1627, %v1628
  %v1630 = vrot.slane %v1629, 1
  %v1631 = vmax.f32 %v1629, %v1630
  %v1632 = vsel %vm539, %v66, -inf
  %v1633 = vrot.slane %v1632, 4
  %v1634 = vmax.f32 %v1632, %v1633
  %v1635 = vrot.slane %v1634, 2
  %v1636 = vmax.f32 %v1634, %v1635
  %v1637 = vrot.slane %v1636, 1
  %v1638 = vmax.f32 %v1636, %v1637
  %v1639 = vsel %vm539, %v272, -inf
  %v1640 = vrot.slane %v1639, 4
  %v1641 = vmax.f32 %v1639, %v1640
  %v1642 = vrot.slane %v1641, 2
  %v1643 = vmax.f32 %v1641, %v1642
  %v1644 = vrot.slane %v1643, 1
  %v1645 = vmax.f32 %v1643, %v1644
  %v1646 = vsel %vm539, %v273, -inf
  %v1647 = vrot.slane %v1646, 4
  %v1648 = vmax.f32 %v1646, %v1647
  %v1649 = vrot.slane %v1648, 2
  %v1650 = vmax.f32 %v1648, %v1649
  %v1651 = vrot.slane %v1650, 1
  %v1652 = vmax.f32 %v1650, %v1651
  %v1653 = vsel %vm539, %v274, -inf
  %v1654 = vrot.slane %v1653, 4
  %v1655 = vmax.f32 %v1653, %v1654
  %v1656 = vrot.slane %v1655, 2
  %v1657 = vmax.f32 %v1655, %v1656
  %v1658 = vrot.slane %v1657, 1
  %v1659 = vmax.f32 %v1657, %v1658
  %v1660 = vsel %vm539, %v67, -inf
  %v1661 = vrot.slane %v1660, 4
  %v1662 = vmax.f32 %v1660, %v1661
  %v1663 = vrot.slane %v1662, 2
  %v1664 = vmax.f32 %v1662, %v1663
  %v1665 = vrot.slane %v1664, 1
  %v1666 = vmax.f32 %v1664, %v1665
  %v1667 = vsel %vm539, %v275, -inf
  %v1668 = vrot.slane %v1667, 4
  %v1669 = vmax.f32 %v1667, %v1668
  %v1670 = vrot.slane %v1669, 2
  %v1671 = vmax.f32 %v1669, %v1670
  %v1672 = vrot.slane %v1671, 1
  %v1673 = vmax.f32 %v1671, %v1672
  %v1674 = vsel %vm539, %v276, -inf
  %v1675 = vrot.slane %v1674, 4
  %v1676 = vmax.f32 %v1674, %v1675
  %v1677 = vrot.slane %v1676, 2
  %v1678 = vmax.f32 %v1676, %v1677
  %v1679 = vrot.slane %v1678, 1
  %v1680 = vmax.f32 %v1678, %v1679
  %v1681 = vsel %vm539, %v277, -inf
  %v1682 = vrot.slane %v1681, 4
  %v1683 = vmax.f32 %v1681, %v1682
  %v1684 = vrot.slane %v1683, 2
  %v1685 = vmax.f32 %v1683, %v1684
  %v1686 = vrot.slane %v1685, 1
  %v1687 = vmax.f32 %v1685, %v1686
  %v1688 = vsel %vm539, %v68, -inf
  %v1689 = vrot.slane %v1688, 4
  %v1690 = vmax.f32 %v1688, %v1689
  %v1691 = vrot.slane %v1690, 2
  %v1692 = vmax.f32 %v1690, %v1691
  %v1693 = vrot.slane %v1692, 1
  %v1694 = vmax.f32 %v1692, %v1693
  %v1695 = vsel %vm539, %v278, -inf
  %v1696 = vrot.slane %v1695, 4
  %v1697 = vmax.f32 %v1695, %v1696
  %v1698 = vrot.slane %v1697, 2
  %v1699 = vmax.f32 %v1697, %v1698
  %v1700 = vrot.slane %v1699, 1
  %v1701 = vmax.f32 %v1699, %v1700
  %v1702 = vsel %vm539, %v279, -inf
  %v1703 = vrot.slane %v1702, 4
  %v1704 = vmax.f32 %v1702, %v1703
  %v1705 = vrot.slane %v1704, 2
  %v1706 = vmax.f32 %v1704, %v1705
  %v1707 = vrot.slane %v1706, 1
  %v1708 = vmax.f32 %v1706, %v1707
  %v1709 = vsel %vm539, %v280, -inf
  %v1710 = vrot.slane %v1709, 4
  %v1711 = vmax.f32 %v1709, %v1710
  %v1712 = vrot.slane %v1711, 2
  %v1713 = vmax.f32 %v1711, %v1712
  %v1714 = vrot.slane %v1713, 1
  %v1715 = vmax.f32 %v1713, %v1714
  %v1716 = vsel %vm539, %v69, -inf
  %v1717 = vrot.slane %v1716, 4
  %v1718 = vmax.f32 %v1716, %v1717
  %v1719 = vrot.slane %v1718, 2
  %v1720 = vmax.f32 %v1718, %v1719
  %v1721 = vrot.slane %v1720, 1
  %v1722 = vmax.f32 %v1720, %v1721
  %v1723 = vsel %vm539, %v281, -inf
  %v1724 = vrot.slane %v1723, 4
  %v1725 = vmax.f32 %v1723, %v1724
  %v1726 = vrot.slane %v1725, 2
  %v1727 = vmax.f32 %v1725, %v1726
  %v1728 = vrot.slane %v1727, 1
  %v1729 = vmax.f32 %v1727, %v1728
  %v1730 = vsel %vm539, %v282, -inf
  %v1731 = vrot.slane %v1730, 4
  %v1732 = vmax.f32 %v1730, %v1731
  %v1733 = vrot.slane %v1732, 2
  %v1734 = vmax.f32 %v1732, %v1733
  %v1735 = vrot.slane %v1734, 1
  %v1736 = vmax.f32 %v1734, %v1735
  %v1737 = vsel %vm539, %v283, -inf
  %v1738 = vrot.slane %v1737, 4
  %v1739 = vmax.f32 %v1737, %v1738
  %v1740 = vrot.slane %v1739, 2
  %v1741 = vmax.f32 %v1739, %v1740
  %v1742 = vrot.slane %v1741, 1
  %v1743 = vmax.f32 %v1741, %v1742
  %v1744 = vsel %vm539, %v70, -inf
  %v1745 = vrot.slane %v1744, 4
  %v1746 = vmax.f32 %v1744, %v1745
  %v1747 = vrot.slane %v1746, 2
  %v1748 = vmax.f32 %v1746, %v1747
  %v1749 = vrot.slane %v1748, 1
  %v1750 = vmax.f32 %v1748, %v1749
  %v1751 = vsel %vm539, %v284, -inf
  %v1752 = vrot.slane %v1751, 4
  %v1753 = vmax.f32 %v1751, %v1752
  %v1754 = vrot.slane %v1753, 2
  %v1755 = vmax.f32 %v1753, %v1754
  %v1756 = vrot.slane %v1755, 1
  %v1757 = vmax.f32 %v1755, %v1756
  %v1758 = vsel %vm539, %v285, -inf
  %v1759 = vrot.slane %v1758, 4
  %v1760 = vmax.f32 %v1758, %v1759
  %v1761 = vrot.slane %v1760, 2
  %v1762 = vmax.f32 %v1760, %v1761
  %v1763 = vrot.slane %v1762, 1
  %v1764 = vmax.f32 %v1762, %v1763
  %v1765 = vsel %vm539, %v286, -inf
  %v1766 = vrot.slane %v1765, 4
  %v1767 = vmax.f32 %v1765, %v1766
  %v1768 = vrot.slane %v1767, 2
  %v1769 = vmax.f32 %v1767, %v1768
  %v1770 = vrot.slane %v1769, 1
  %v1771 = vmax.f32 %v1769, %v1770
  %v1772 = vsel %vm539, %v71, -inf
  %v1773 = vrot.slane %v1772, 4
  %v1774 = vmax.f32 %v1772, %v1773
  %v1775 = vrot.slane %v1774, 2
  %v1776 = vmax.f32 %v1774, %v1775
  %v1777 = vrot.slane %v1776, 1
  %v1778 = vmax.f32 %v1776, %v1777
  %v1779 = vsel %vm539, %v287, -inf
  %v1780 = vrot.slane %v1779, 4
  %v1781 = vmax.f32 %v1779, %v1780
  %v1782 = vrot.slane %v1781, 2
  %v1783 = vmax.f32 %v1781, %v1782
  %v1784 = vrot.slane %v1783, 1
  %v1785 = vmax.f32 %v1783, %v1784
  %v1786 = vsel %vm539, %v288, -inf
  %v1787 = vrot.slane %v1786, 4
  %v1788 = vmax.f32 %v1786, %v1787
  %v1789 = vrot.slane %v1788, 2
  %v1790 = vmax.f32 %v1788, %v1789
  %v1791 = vrot.slane %v1790, 1
  %v1792 = vmax.f32 %v1790, %v1791
  %v1793 = vsel %vm539, %v289, -inf
  %v1794 = vrot.slane %v1793, 4
  %v1795 = vmax.f32 %v1793, %v1794
  %v1796 = vrot.slane %v1795, 2
  %v1797 = vmax.f32 %v1795, %v1796
  %v1798 = vrot.slane %v1797, 1
  %v1799 = vmax.f32 %v1797, %v1798
  %v1800 = vsel %vm539, %v72, -inf
  %v1801 = vrot.slane %v1800, 4
  %v1802 = vmax.f32 %v1800, %v1801
  %v1803 = vrot.slane %v1802, 2
  %v1804 = vmax.f32 %v1802, %v1803
  %v1805 = vrot.slane %v1804, 1
  %v1806 = vmax.f32 %v1804, %v1805
  %v1807 = vsel %vm539, %v290, -inf
  %v1808 = vrot.slane %v1807, 4
  %v1809 = vmax.f32 %v1807, %v1808
  %v1810 = vrot.slane %v1809, 2
  %v1811 = vmax.f32 %v1809, %v1810
  %v1812 = vrot.slane %v1811, 1
  %v1813 = vmax.f32 %v1811, %v1812
  %v1814 = vsel %vm539, %v291, -inf
  %v1815 = vrot.slane %v1814, 4
  %v1816 = vmax.f32 %v1814, %v1815
  %v1817 = vrot.slane %v1816, 2
  %v1818 = vmax.f32 %v1816, %v1817
  %v1819 = vrot.slane %v1818, 1
  %v1820 = vmax.f32 %v1818, %v1819
  %v1821 = vsel %vm539, %v292, -inf
  %v1822 = vrot.slane %v1821, 4
  %v1823 = vmax.f32 %v1821, %v1822
  %v1824 = vrot.slane %v1823, 2
  %v1825 = vmax.f32 %v1823, %v1824
  %v1826 = vrot.slane %v1825, 1
  %v1827 = vmax.f32 %v1825, %v1826
  %v1828 = vsel %vm539, %v73, -inf
  %v1829 = vrot.slane %v1828, 4
  %v1830 = vmax.f32 %v1828, %v1829
  %v1831 = vrot.slane %v1830, 2
  %v1832 = vmax.f32 %v1830, %v1831
  %v1833 = vrot.slane %v1832, 1
  %v1834 = vmax.f32 %v1832, %v1833
  %v1835 = vsel %vm539, %v293, -inf
  %v1836 = vrot.slane %v1835, 4
  %v1837 = vmax.f32 %v1835, %v1836
  %v1838 = vrot.slane %v1837, 2
  %v1839 = vmax.f32 %v1837, %v1838
  %v1840 = vrot.slane %v1839, 1
  %v1841 = vmax.f32 %v1839, %v1840
  %v1842 = vsel %vm539, %v294, -inf
  %v1843 = vrot.slane %v1842, 4
  %v1844 = vmax.f32 %v1842, %v1843
  %v1845 = vrot.slane %v1844, 2
  %v1846 = vmax.f32 %v1844, %v1845
  %v1847 = vrot.slane %v1846, 1
  %v1848 = vmax.f32 %v1846, %v1847
  %v1849 = vsel %vm539, %v295, -inf
  %v1850 = vrot.slane %v1849, 4
  %v1851 = vmax.f32 %v1849, %v1850
  %v1852 = vrot.slane %v1851, 2
  %v1853 = vmax.f32 %v1851, %v1852
  %v1854 = vrot.slane %v1853, 1
  %v1855 = vmax.f32 %v1853, %v1854
  %v1856 = vsel %vm539, %v74, -inf
  %v1857 = vrot.slane %v1856, 4
  %v1858 = vmax.f32 %v1856, %v1857
  %v1859 = vrot.slane %v1858, 2
  %v1860 = vmax.f32 %v1858, %v1859
  %v1861 = vrot.slane %v1860, 1
  %v1862 = vmax.f32 %v1860, %v1861
  %v1863 = vsel %vm539, %v296, -inf
  %v1864 = vrot.slane %v1863, 4
  %v1865 = vmax.f32 %v1863, %v1864
  %v1866 = vrot.slane %v1865, 2
  %v1867 = vmax.f32 %v1865, %v1866
  %v1868 = vrot.slane %v1867, 1
  %v1869 = vmax.f32 %v1867, %v1868
  %v1870 = vsel %vm539, %v297, -inf
  %v1871 = vrot.slane %v1870, 4
  %v1872 = vmax.f32 %v1870, %v1871
  %v1873 = vrot.slane %v1872, 2
  %v1874 = vmax.f32 %v1872, %v1873
  %v1875 = vrot.slane %v1874, 1
  %v1876 = vmax.f32 %v1874, %v1875
  %v1877 = vsel %vm539, %v298, -inf
  %v1878 = vrot.slane %v1877, 4
  %v1879 = vmax.f32 %v1877, %v1878
  %v1880 = vrot.slane %v1879, 2
  %v1881 = vmax.f32 %v1879, %v1880
  %v1882 = vrot.slane %v1881, 1
  %v1883 = vmax.f32 %v1881, %v1882
  %v1884 = vsel %vm539, %v75, -inf
  %v1885 = vrot.slane %v1884, 4
  %v1886 = vmax.f32 %v1884, %v1885
  %v1887 = vrot.slane %v1886, 2
  %v1888 = vmax.f32 %v1886, %v1887
  %v1889 = vrot.slane %v1888, 1
  %v1890 = vmax.f32 %v1888, %v1889
  %v1891 = vsel %vm539, %v299, -inf
  %v1892 = vrot.slane %v1891, 4
  %v1893 = vmax.f32 %v1891, %v1892
  %v1894 = vrot.slane %v1893, 2
  %v1895 = vmax.f32 %v1893, %v1894
  %v1896 = vrot.slane %v1895, 1
  %v1897 = vmax.f32 %v1895, %v1896
  %v1898 = vsel %vm539, %v300, -inf
  %v1899 = vrot.slane %v1898, 4
  %v1900 = vmax.f32 %v1898, %v1899
  %v1901 = vrot.slane %v1900, 2
  %v1902 = vmax.f32 %v1900, %v1901
  %v1903 = vrot.slane %v1902, 1
  %v1904 = vmax.f32 %v1902, %v1903
  %v1905 = vsel %vm539, %v301, -inf
  %v1906 = vrot.slane %v1905, 4
  %v1907 = vmax.f32 %v1905, %v1906
  %v1908 = vrot.slane %v1907, 2
  %v1909 = vmax.f32 %v1907, %v1908
  %v1910 = vrot.slane %v1909, 1
  %v1911 = vmax.f32 %v1909, %v1910
  %v1912 = vsel %vm539, %v76, -inf
  %v1913 = vrot.slane %v1912, 4
  %v1914 = vmax.f32 %v1912, %v1913
  %v1915 = vrot.slane %v1914, 2
  %v1916 = vmax.f32 %v1914, %v1915
  %v1917 = vrot.slane %v1916, 1
  %v1918 = vmax.f32 %v1916, %v1917
  %v1919 = vsel %vm539, %v302, -inf
  %v1920 = vrot.slane %v1919, 4
  %v1921 = vmax.f32 %v1919, %v1920
  %v1922 = vrot.slane %v1921, 2
  %v1923 = vmax.f32 %v1921, %v1922
  %v1924 = vrot.slane %v1923, 1
  %v1925 = vmax.f32 %v1923, %v1924
  %v1926 = vsel %vm539, %v303, -inf
  %v1927 = vrot.slane %v1926, 4
  %v1928 = vmax.f32 %v1926, %v1927
  %v1929 = vrot.slane %v1928, 2
  %v1930 = vmax.f32 %v1928, %v1929
  %v1931 = vrot.slane %v1930, 1
  %v1932 = vmax.f32 %v1930, %v1931
  %v1933 = vsel %vm539, %v304, -inf
  %v1934 = vrot.slane %v1933, 4
  %v1935 = vmax.f32 %v1933, %v1934
  %v1936 = vrot.slane %v1935, 2
  %v1937 = vmax.f32 %v1935, %v1936
  %v1938 = vrot.slane %v1937, 1
  %v1939 = vmax.f32 %v1937, %v1938
  %v1940 = vsel %vm539, %v77, -inf
  %v1941 = vrot.slane %v1940, 4
  %v1942 = vmax.f32 %v1940, %v1941
  %v1943 = vrot.slane %v1942, 2
  %v1944 = vmax.f32 %v1942, %v1943
  %v1945 = vrot.slane %v1944, 1
  %v1946 = vmax.f32 %v1944, %v1945
  %v1947 = vsel %vm539, %v305, -inf
  %v1948 = vrot.slane %v1947, 4
  %v1949 = vmax.f32 %v1947, %v1948
  %v1950 = vrot.slane %v1949, 2
  %v1951 = vmax.f32 %v1949, %v1950
  %v1952 = vrot.slane %v1951, 1
  %v1953 = vmax.f32 %v1951, %v1952
  %v1954 = vsel %vm539, %v306, -inf
  %v1955 = vrot.slane %v1954, 4
  %v1956 = vmax.f32 %v1954, %v1955
  %v1957 = vrot.slane %v1956, 2
  %v1958 = vmax.f32 %v1956, %v1957
  %v1959 = vrot.slane %v1958, 1
  %v1960 = vmax.f32 %v1958, %v1959
  %v1961 = vsel %vm539, %v307, -inf
  %v1962 = vrot.slane %v1961, 4
  %v1963 = vmax.f32 %v1961, %v1962
  %v1964 = vrot.slane %v1963, 2
  %v1965 = vmax.f32 %v1963, %v1964
  %v1966 = vrot.slane %v1965, 1
  %v1967 = vmax.f32 %v1965, %v1966
  %v1968 = vsel %vm539, %v78, -inf
  %v1969 = vrot.slane %v1968, 4
  %v1970 = vmax.f32 %v1968, %v1969
  %v1971 = vrot.slane %v1970, 2
  %v1972 = vmax.f32 %v1970, %v1971
  %v1973 = vrot.slane %v1972, 1
  %v1974 = vmax.f32 %v1972, %v1973
  %v1975 = vsel %vm539, %v308, -inf
  %v1976 = vrot.slane %v1975, 4
  %v1977 = vmax.f32 %v1975, %v1976
  %v1978 = vrot.slane %v1977, 2
  %v1979 = vmax.f32 %v1977, %v1978
  %v1980 = vrot.slane %v1979, 1
  %v1981 = vmax.f32 %v1979, %v1980
  %v1982 = vsel %vm539, %v309, -inf
  %v1983 = vrot.slane %v1982, 4
  %v1984 = vmax.f32 %v1982, %v1983
  %v1985 = vrot.slane %v1984, 2
  %v1986 = vmax.f32 %v1984, %v1985
  %v1987 = vrot.slane %v1986, 1
  %v1988 = vmax.f32 %v1986, %v1987
  %v1989 = vsel %vm539, %v310, -inf
  %v1990 = vrot.slane %v1989, 4
  %v1991 = vmax.f32 %v1989, %v1990
  %v1992 = vrot.slane %v1991, 2
  %v1993 = vmax.f32 %v1991, %v1992
  %v1994 = vrot.slane %v1993, 1
  %v1995 = vmax.f32 %v1993, %v1994
  %v1996 = vsel %vm539, %v79, -inf
  %v1997 = vrot.slane %v1996, 4
  %v1998 = vmax.f32 %v1996, %v1997
  %v1999 = vrot.slane %v1998, 2
  %v2000 = vmax.f32 %v1998, %v1999
  %v2001 = vrot.slane %v2000, 1
  %v2002 = vmax.f32 %v2000, %v2001
  %v2003 = vsel %vm539, %v311, -inf
  %v2004 = vrot.slane %v2003, 4
  %v2005 = vmax.f32 %v2003, %v2004
  %v2006 = vrot.slane %v2005, 2
  %v2007 = vmax.f32 %v2005, %v2006
  %v2008 = vrot.slane %v2007, 1
  %v2009 = vmax.f32 %v2007, %v2008
  %v2010 = vsel %vm539, %v312, -inf
  %v2011 = vrot.slane %v2010, 4
  %v2012 = vmax.f32 %v2010, %v2011
  %v2013 = vrot.slane %v2012, 2
  %v2014 = vmax.f32 %v2012, %v2013
  %v2015 = vrot.slane %v2014, 1
  %v2016 = vmax.f32 %v2014, %v2015
  %v2017 = vsel %vm539, %v313, -inf
  %v2018 = vrot.slane %v2017, 4
  %v2019 = vmax.f32 %v2017, %v2018
  %v2020 = vrot.slane %v2019, 2
  %v2021 = vmax.f32 %v2019, %v2020
  %v2022 = vrot.slane %v2021, 1
  %v2023 = vmax.f32 %v2021, %v2022
  %v2024 = vsel %vm539, %v80, -inf
  %v2025 = vrot.slane %v2024, 4
  %v2026 = vmax.f32 %v2024, %v2025
  %v2027 = vrot.slane %v2026, 2
  %v2028 = vmax.f32 %v2026, %v2027
  %v2029 = vrot.slane %v2028, 1
  %v2030 = vmax.f32 %v2028, %v2029
  %v2031 = vsel %vm539, %v314, -inf
  %v2032 = vrot.slane %v2031, 4
  %v2033 = vmax.f32 %v2031, %v2032
  %v2034 = vrot.slane %v2033, 2
  %v2035 = vmax.f32 %v2033, %v2034
  %v2036 = vrot.slane %v2035, 1
  %v2037 = vmax.f32 %v2035, %v2036
  %v2038 = vsel %vm539, %v315, -inf
  %v2039 = vrot.slane %v2038, 4
  %v2040 = vmax.f32 %v2038, %v2039
  %v2041 = vrot.slane %v2040, 2
  %v2042 = vmax.f32 %v2040, %v2041
  %v2043 = vrot.slane %v2042, 1
  %v2044 = vmax.f32 %v2042, %v2043
  %v2045 = vsel %vm539, %v316, -inf
  %v2046 = vrot.slane %v2045, 4
  %v2047 = vmax.f32 %v2045, %v2046
  %v2048 = vrot.slane %v2047, 2
  %v2049 = vmax.f32 %v2047, %v2048
  %v2050 = vrot.slane %v2049, 1
  %v2051 = vmax.f32 %v2049, %v2050
  %v2052 = vsel %vm539, %v81, -inf
  %v2053 = vrot.slane %v2052, 4
  %v2054 = vmax.f32 %v2052, %v2053
  %v2055 = vrot.slane %v2054, 2
  %v2056 = vmax.f32 %v2054, %v2055
  %v2057 = vrot.slane %v2056, 1
  %v2058 = vmax.f32 %v2056, %v2057
  %v2059 = vsel %vm539, %v317, -inf
  %v2060 = vrot.slane %v2059, 4
  %v2061 = vmax.f32 %v2059, %v2060
  %v2062 = vrot.slane %v2061, 2
  %v2063 = vmax.f32 %v2061, %v2062
  %v2064 = vrot.slane %v2063, 1
  %v2065 = vmax.f32 %v2063, %v2064
  %v2066 = vsel %vm539, %v318, -inf
  %v2067 = vrot.slane %v2066, 4
  %v2068 = vmax.f32 %v2066, %v2067
  %v2069 = vrot.slane %v2068, 2
  %v2070 = vmax.f32 %v2068, %v2069
  %v2071 = vrot.slane %v2070, 1
  %v2072 = vmax.f32 %v2070, %v2071
  %v2073 = vsel %vm539, %v319, -inf
  %v2074 = vrot.slane %v2073, 4
  %v2075 = vmax.f32 %v2073, %v2074
  %v2076 = vrot.slane %v2075, 2
  %v2077 = vmax.f32 %v2075, %v2076
  %v2078 = vrot.slane %v2077, 1
  %v2079 = vmax.f32 %v2077, %v2078
  %v2080 = vsel %vm539, %v82, -inf
  %v2081 = vrot.slane %v2080, 4
  %v2082 = vmax.f32 %v2080, %v2081
  %v2083 = vrot.slane %v2082, 2
  %v2084 = vmax.f32 %v2082, %v2083
  %v2085 = vrot.slane %v2084, 1
  %v2086 = vmax.f32 %v2084, %v2085
  %v2087 = vsel %vm539, %v320, -inf
  %v2088 = vrot.slane %v2087, 4
  %v2089 = vmax.f32 %v2087, %v2088
  %v2090 = vrot.slane %v2089, 2
  %v2091 = vmax.f32 %v2089, %v2090
  %v2092 = vrot.slane %v2091, 1
  %v2093 = vmax.f32 %v2091, %v2092
  %v2094 = vsel %vm539, %v321, -inf
  %v2095 = vrot.slane %v2094, 4
  %v2096 = vmax.f32 %v2094, %v2095
  %v2097 = vrot.slane %v2096, 2
  %v2098 = vmax.f32 %v2096, %v2097
  %v2099 = vrot.slane %v2098, 1
  %v2100 = vmax.f32 %v2098, %v2099
  %v2101 = vsel %vm539, %v322, -inf
  %v2102 = vrot.slane %v2101, 4
  %v2103 = vmax.f32 %v2101, %v2102
  %v2104 = vrot.slane %v2103, 2
  %v2105 = vmax.f32 %v2103, %v2104
  %v2106 = vrot.slane %v2105, 1
  %v2107 = vmax.f32 %v2105, %v2106
  %v2108 = vsel %vm539, %v83, -inf
  %v2109 = vrot.slane %v2108, 4
  %v2110 = vmax.f32 %v2108, %v2109
  %v2111 = vrot.slane %v2110, 2
  %v2112 = vmax.f32 %v2110, %v2111
  %v2113 = vrot.slane %v2112, 1
  %v2114 = vmax.f32 %v2112, %v2113
  %v2115 = vsel %vm539, %v323, -inf
  %v2116 = vrot.slane %v2115, 4
  %v2117 = vmax.f32 %v2115, %v2116
  %v2118 = vrot.slane %v2117, 2
  %v2119 = vmax.f32 %v2117, %v2118
  %v2120 = vrot.slane %v2119, 1
  %v2121 = vmax.f32 %v2119, %v2120
  %v2122 = vsel %vm539, %v324, -inf
  %v2123 = vrot.slane %v2122, 4
  %v2124 = vmax.f32 %v2122, %v2123
  %v2125 = vrot.slane %v2124, 2
  %v2126 = vmax.f32 %v2124, %v2125
  %v2127 = vrot.slane %v2126, 1
  %v2128 = vmax.f32 %v2126, %v2127
  %v2129 = vsel %vm539, %v325, -inf
  %v2130 = vrot.slane %v2129, 4
  %v2131 = vmax.f32 %v2129, %v2130
  %v2132 = vrot.slane %v2131, 2
  %v2133 = vmax.f32 %v2131, %v2132
  %v2134 = vrot.slane %v2133, 1
  %v2135 = vmax.f32 %v2133, %v2134
  %v2136 = vsel %vm539, %v84, -inf
  %v2137 = vrot.slane %v2136, 4
  %v2138 = vmax.f32 %v2136, %v2137
  %v2139 = vrot.slane %v2138, 2
  %v2140 = vmax.f32 %v2138, %v2139
  %v2141 = vrot.slane %v2140, 1
  %v2142 = vmax.f32 %v2140, %v2141
  %v2143 = vsel %vm539, %v326, -inf
  %v2144 = vrot.slane %v2143, 4
  %v2145 = vmax.f32 %v2143, %v2144
  %v2146 = vrot.slane %v2145, 2
  %v2147 = vmax.f32 %v2145, %v2146
  %v2148 = vrot.slane %v2147, 1
  %v2149 = vmax.f32 %v2147, %v2148
  %v2150 = vsel %vm539, %v327, -inf
  %v2151 = vrot.slane %v2150, 4
  %v2152 = vmax.f32 %v2150, %v2151
  %v2153 = vrot.slane %v2152, 2
  %v2154 = vmax.f32 %v2152, %v2153
  %v2155 = vrot.slane %v2154, 1
  %v2156 = vmax.f32 %v2154, %v2155
  %v2157 = vsel %vm539, %v328, -inf
  %v2158 = vrot.slane %v2157, 4
  %v2159 = vmax.f32 %v2157, %v2158
  %v2160 = vrot.slane %v2159, 2
  %v2161 = vmax.f32 %v2159, %v2160
  %v2162 = vrot.slane %v2161, 1
  %v2163 = vmax.f32 %v2161, %v2162
  %v2164 = vsel %vm539, %v85, -inf
  %v2165 = vrot.slane %v2164, 4
  %v2166 = vmax.f32 %v2164, %v2165
  %v2167 = vrot.slane %v2166, 2
  %v2168 = vmax.f32 %v2166, %v2167
  %v2169 = vrot.slane %v2168, 1
  %v2170 = vmax.f32 %v2168, %v2169
  %v2171 = vsel %vm539, %v329, -inf
  %v2172 = vrot.slane %v2171, 4
  %v2173 = vmax.f32 %v2171, %v2172
  %v2174 = vrot.slane %v2173, 2
  %v2175 = vmax.f32 %v2173, %v2174
  %v2176 = vrot.slane %v2175, 1
  %v2177 = vmax.f32 %v2175, %v2176
  %v2178 = vsel %vm539, %v330, -inf
  %v2179 = vrot.slane %v2178, 4
  %v2180 = vmax.f32 %v2178, %v2179
  %v2181 = vrot.slane %v2180, 2
  %v2182 = vmax.f32 %v2180, %v2181
  %v2183 = vrot.slane %v2182, 1
  %v2184 = vmax.f32 %v2182, %v2183
  %v2185 = vsel %vm539, %v331, -inf
  %v2186 = vrot.slane %v2185, 4
  %v2187 = vmax.f32 %v2185, %v2186
  %v2188 = vrot.slane %v2187, 2
  %v2189 = vmax.f32 %v2187, %v2188
  %v2190 = vrot.slane %v2189, 1
  %v2191 = vmax.f32 %v2189, %v2190
  %v2192 = vsel %vm539, %v86, -inf
  %v2193 = vrot.slane %v2192, 4
  %v2194 = vmax.f32 %v2192, %v2193
  %v2195 = vrot.slane %v2194, 2
  %v2196 = vmax.f32 %v2194, %v2195
  %v2197 = vrot.slane %v2196, 1
  %v2198 = vmax.f32 %v2196, %v2197
  %v2199 = vsel %vm539, %v332, -inf
  %v2200 = vrot.slane %v2199, 4
  %v2201 = vmax.f32 %v2199, %v2200
  %v2202 = vrot.slane %v2201, 2
  %v2203 = vmax.f32 %v2201, %v2202
  %v2204 = vrot.slane %v2203, 1
  %v2205 = vmax.f32 %v2203, %v2204
  %v2206 = vsel %vm539, %v333, -inf
  %v2207 = vrot.slane %v2206, 4
  %v2208 = vmax.f32 %v2206, %v2207
  %v2209 = vrot.slane %v2208, 2
  %v2210 = vmax.f32 %v2208, %v2209
  %v2211 = vrot.slane %v2210, 1
  %v2212 = vmax.f32 %v2210, %v2211
  %v2213 = vsel %vm539, %v334, -inf
  %v2214 = vrot.slane %v2213, 4
  %v2215 = vmax.f32 %v2213, %v2214
  %v2216 = vrot.slane %v2215, 2
  %v2217 = vmax.f32 %v2215, %v2216
  %v2218 = vrot.slane %v2217, 1
  %v2219 = vmax.f32 %v2217, %v2218
  %v2220 = vsel %vm539, %v87, -inf
  %v2221 = vrot.slane %v2220, 4
  %v2222 = vmax.f32 %v2220, %v2221
  %v2223 = vrot.slane %v2222, 2
  %v2224 = vmax.f32 %v2222, %v2223
  %v2225 = vrot.slane %v2224, 1
  %v2226 = vmax.f32 %v2224, %v2225
  %v2227 = vsel %vm539, %v335, -inf
  %v2228 = vrot.slane %v2227, 4
  %v2229 = vmax.f32 %v2227, %v2228
  %v2230 = vrot.slane %v2229, 2
  %v2231 = vmax.f32 %v2229, %v2230
  %v2232 = vrot.slane %v2231, 1
  %v2233 = vmax.f32 %v2231, %v2232
  %v2234 = vsel %vm539, %v336, -inf
  %v2235 = vrot.slane %v2234, 4
  %v2236 = vmax.f32 %v2234, %v2235
  %v2237 = vrot.slane %v2236, 2
  %v2238 = vmax.f32 %v2236, %v2237
  %v2239 = vrot.slane %v2238, 1
  %v2240 = vmax.f32 %v2238, %v2239
  %v2241 = vsel %vm539, %v337, -inf
  %v2242 = vrot.slane %v2241, 4
  %v2243 = vmax.f32 %v2241, %v2242
  %v2244 = vrot.slane %v2243, 2
  %v2245 = vmax.f32 %v2243, %v2244
  %v2246 = vrot.slane %v2245, 1
  %v2247 = vmax.f32 %v2245, %v2246
  %v2248 = vsel %vm539, %v88, -inf
  %v2249 = vrot.slane %v2248, 4
  %v2250 = vmax.f32 %v2248, %v2249
  %v2251 = vrot.slane %v2250, 2
  %v2252 = vmax.f32 %v2250, %v2251
  %v2253 = vrot.slane %v2252, 1
  %v2254 = vmax.f32 %v2252, %v2253
  %v2255 = vsel %vm539, %v338, -inf
  %v2256 = vrot.slane %v2255, 4
  %v2257 = vmax.f32 %v2255, %v2256
  %v2258 = vrot.slane %v2257, 2
  %v2259 = vmax.f32 %v2257, %v2258
  %v2260 = vrot.slane %v2259, 1
  %v2261 = vmax.f32 %v2259, %v2260
  %v2262 = vsel %vm539, %v339, -inf
  %v2263 = vrot.slane %v2262, 4
  %v2264 = vmax.f32 %v2262, %v2263
  %v2265 = vrot.slane %v2264, 2
  %v2266 = vmax.f32 %v2264, %v2265
  %v2267 = vrot.slane %v2266, 1
  %v2268 = vmax.f32 %v2266, %v2267
  %v2269 = vsel %vm539, %v340, -inf
  %v2270 = vrot.slane %v2269, 4
  %v2271 = vmax.f32 %v2269, %v2270
  %v2272 = vrot.slane %v2271, 2
  %v2273 = vmax.f32 %v2271, %v2272
  %v2274 = vrot.slane %v2273, 1
  %v2275 = vmax.f32 %v2273, %v2274
  %v2276 = vsel %vm539, %v89, -inf
  %v2277 = vrot.slane %v2276, 4
  %v2278 = vmax.f32 %v2276, %v2277
  %v2279 = vrot.slane %v2278, 2
  %v2280 = vmax.f32 %v2278, %v2279
  %v2281 = vrot.slane %v2280, 1
  %v2282 = vmax.f32 %v2280, %v2281
  %v2283 = vsel %vm539, %v341, -inf
  %v2284 = vrot.slane %v2283, 4
  %v2285 = vmax.f32 %v2283, %v2284
  %v2286 = vrot.slane %v2285, 2
  %v2287 = vmax.f32 %v2285, %v2286
  %v2288 = vrot.slane %v2287, 1
  %v2289 = vmax.f32 %v2287, %v2288
  %v2290 = vsel %vm539, %v342, -inf
  %v2291 = vrot.slane %v2290, 4
  %v2292 = vmax.f32 %v2290, %v2291
  %v2293 = vrot.slane %v2292, 2
  %v2294 = vmax.f32 %v2292, %v2293
  %v2295 = vrot.slane %v2294, 1
  %v2296 = vmax.f32 %v2294, %v2295
  %v2297 = vsel %vm539, %v343, -inf
  %v2298 = vrot.slane %v2297, 4
  %v2299 = vmax.f32 %v2297, %v2298
  %v2300 = vrot.slane %v2299, 2
  %v2301 = vmax.f32 %v2299, %v2300
  %v2302 = vrot.slane %v2301, 1
  %v2303 = vmax.f32 %v2301, %v2302
  %v2304 = vsel %vm539, %v90, -inf
  %v2305 = vrot.slane %v2304, 4
  %v2306 = vmax.f32 %v2304, %v2305
  %v2307 = vrot.slane %v2306, 2
  %v2308 = vmax.f32 %v2306, %v2307
  %v2309 = vrot.slane %v2308, 1
  %v2310 = vmax.f32 %v2308, %v2309
  %v2311 = vsel %vm539, %v344, -inf
  %v2312 = vrot.slane %v2311, 4
  %v2313 = vmax.f32 %v2311, %v2312
  %v2314 = vrot.slane %v2313, 2
  %v2315 = vmax.f32 %v2313, %v2314
  %v2316 = vrot.slane %v2315, 1
  %v2317 = vmax.f32 %v2315, %v2316
  %v2318 = vsel %vm539, %v345, -inf
  %v2319 = vrot.slane %v2318, 4
  %v2320 = vmax.f32 %v2318, %v2319
  %v2321 = vrot.slane %v2320, 2
  %v2322 = vmax.f32 %v2320, %v2321
  %v2323 = vrot.slane %v2322, 1
  %v2324 = vmax.f32 %v2322, %v2323
  %v2325 = vsel %vm539, %v346, -inf
  %v2326 = vrot.slane %v2325, 4
  %v2327 = vmax.f32 %v2325, %v2326
  %v2328 = vrot.slane %v2327, 2
  %v2329 = vmax.f32 %v2327, %v2328
  %v2330 = vrot.slane %v2329, 1
  %v2331 = vmax.f32 %v2329, %v2330
  %vm2332 = vcmask 31744
  %v2333 = vsel %vm2332, %v546, -inf
  %v2334 = vsel %vm2332, %v602, -inf
  %v2335 = vmax.f32 %v2333, %v2334
  %v2336 = vsel %vm2332, %v553, -inf
  %v2337 = vsel %vm2332, %v609, -inf
  %v2338 = vmax.f32 %v2336, %v2337
  %v2339 = vsel %vm2332, %v560, -inf
  %v2340 = vsel %vm2332, %v616, -inf
  %v2341 = vmax.f32 %v2339, %v2340
  %v2342 = vsel %vm2332, %v567, -inf
  %v2343 = vsel %vm2332, %v623, -inf
  %v2344 = vmax.f32 %v2342, %v2343
  %v2345 = vsel %vm2332, %v574, -inf
  %v2346 = vsel %vm2332, %v630, -inf
  %v2347 = vmax.f32 %v2345, %v2346
  %v2348 = vsel %vm2332, %v581, -inf
  %v2349 = vsel %vm2332, %v637, -inf
  %v2350 = vmax.f32 %v2348, %v2349
  %v2351 = vsel %vm2332, %v588, -inf
  %v2352 = vsel %vm2332, %v644, -inf
  %v2353 = vmax.f32 %v2351, %v2352
  %v2354 = vsel %vm2332, %v595, -inf
  %v2355 = vsel %vm2332, %v651, -inf
  %v2356 = vmax.f32 %v2354, %v2355
  %v2357 = vsel %vm2332, %v658, -inf
  %v2358 = vsel %vm2332, %v714, -inf
  %v2359 = vmax.f32 %v2357, %v2358
  %v2360 = vsel %vm2332, %v665, -inf
  %v2361 = vsel %vm2332, %v721, -inf
  %v2362 = vmax.f32 %v2360, %v2361
  %v2363 = vsel %vm2332, %v672, -inf
  %v2364 = vsel %vm2332, %v728, -inf
  %v2365 = vmax.f32 %v2363, %v2364
  %v2366 = vsel %vm2332, %v679, -inf
  %v2367 = vsel %vm2332, %v735, -inf
  %v2368 = vmax.f32 %v2366, %v2367
  %v2369 = vsel %vm2332, %v686, -inf
  %v2370 = vsel %vm2332, %v742, -inf
  %v2371 = vmax.f32 %v2369, %v2370
  %v2372 = vsel %vm2332, %v693, -inf
  %v2373 = vsel %vm2332, %v749, -inf
  %v2374 = vmax.f32 %v2372, %v2373
  %v2375 = vsel %vm2332, %v700, -inf
  %v2376 = vsel %vm2332, %v756, -inf
  %v2377 = vmax.f32 %v2375, %v2376
  %v2378 = vsel %vm2332, %v707, -inf
  %v2379 = vsel %vm2332, %v763, -inf
  %v2380 = vmax.f32 %v2378, %v2379
  %v2381 = vsel %vm2332, %v770, -inf
  %v2382 = vsel %vm2332, %v826, -inf
  %v2383 = vmax.f32 %v2381, %v2382
  %v2384 = vsel %vm2332, %v777, -inf
  %v2385 = vsel %vm2332, %v833, -inf
  %v2386 = vmax.f32 %v2384, %v2385
  %v2387 = vsel %vm2332, %v784, -inf
  %v2388 = vsel %vm2332, %v840, -inf
  %v2389 = vmax.f32 %v2387, %v2388
  %v2390 = vsel %vm2332, %v791, -inf
  %v2391 = vsel %vm2332, %v847, -inf
  %v2392 = vmax.f32 %v2390, %v2391
  %v2393 = vsel %vm2332, %v798, -inf
  %v2394 = vsel %vm2332, %v854, -inf
  %v2395 = vmax.f32 %v2393, %v2394
  %v2396 = vsel %vm2332, %v805, -inf
  %v2397 = vsel %vm2332, %v861, -inf
  %v2398 = vmax.f32 %v2396, %v2397
  %v2399 = vsel %vm2332, %v812, -inf
  %v2400 = vsel %vm2332, %v868, -inf
  %v2401 = vmax.f32 %v2399, %v2400
  %v2402 = vsel %vm2332, %v819, -inf
  %v2403 = vsel %vm2332, %v875, -inf
  %v2404 = vmax.f32 %v2402, %v2403
  %v2405 = vsel %vm2332, %v882, -inf
  %v2406 = vsel %vm2332, %v938, -inf
  %v2407 = vmax.f32 %v2405, %v2406
  %v2408 = vsel %vm2332, %v889, -inf
  %v2409 = vsel %vm2332, %v945, -inf
  %v2410 = vmax.f32 %v2408, %v2409
  %v2411 = vsel %vm2332, %v896, -inf
  %v2412 = vsel %vm2332, %v952, -inf
  %v2413 = vmax.f32 %v2411, %v2412
  %v2414 = vsel %vm2332, %v903, -inf
  %v2415 = vsel %vm2332, %v959, -inf
  %v2416 = vmax.f32 %v2414, %v2415
  %v2417 = vsel %vm2332, %v910, -inf
  %v2418 = vsel %vm2332, %v966, -inf
  %v2419 = vmax.f32 %v2417, %v2418
  %v2420 = vsel %vm2332, %v917, -inf
  %v2421 = vsel %vm2332, %v973, -inf
  %v2422 = vmax.f32 %v2420, %v2421
  %v2423 = vsel %vm2332, %v924, -inf
  %v2424 = vsel %vm2332, %v980, -inf
  %v2425 = vmax.f32 %v2423, %v2424
  %v2426 = vsel %vm2332, %v931, -inf
  %v2427 = vsel %vm2332, %v987, -inf
  %v2428 = vmax.f32 %v2426, %v2427
  %v2429 = vsel %vm2332, %v994, -inf
  %v2430 = vsel %vm2332, %v1050, -inf
  %v2431 = vmax.f32 %v2429, %v2430
  %v2432 = vsel %vm2332, %v1001, -inf
  %v2433 = vsel %vm2332, %v1057, -inf
  %v2434 = vmax.f32 %v2432, %v2433
  %v2435 = vsel %vm2332, %v1008, -inf
  %v2436 = vsel %vm2332, %v1064, -inf
  %v2437 = vmax.f32 %v2435, %v2436
  %v2438 = vsel %vm2332, %v1015, -inf
  %v2439 = vsel %vm2332, %v1071, -inf
  %v2440 = vmax.f32 %v2438, %v2439
  %v2441 = vsel %vm2332, %v1022, -inf
  %v2442 = vsel %vm2332, %v1078, -inf
  %v2443 = vmax.f32 %v2441, %v2442
  %v2444 = vsel %vm2332, %v1029, -inf
  %v2445 = vsel %vm2332, %v1085, -inf
  %v2446 = vmax.f32 %v2444, %v2445
  %v2447 = vsel %vm2332, %v1036, -inf
  %v2448 = vsel %vm2332, %v1092, -inf
  %v2449 = vmax.f32 %v2447, %v2448
  %v2450 = vsel %vm2332, %v1043, -inf
  %v2451 = vsel %vm2332, %v1099, -inf
  %v2452 = vmax.f32 %v2450, %v2451
  %v2453 = vsel %vm2332, %v1106, -inf
  %v2454 = vsel %vm2332, %v1162, -inf
  %v2455 = vmax.f32 %v2453, %v2454
  %v2456 = vsel %vm2332, %v1113, -inf
  %v2457 = vsel %vm2332, %v1169, -inf
  %v2458 = vmax.f32 %v2456, %v2457
  %v2459 = vsel %vm2332, %v1120, -inf
  %v2460 = vsel %vm2332, %v1176, -inf
  %v2461 = vmax.f32 %v2459, %v2460
  %v2462 = vsel %vm2332, %v1127, -inf
  %v2463 = vsel %vm2332, %v1183, -inf
  %v2464 = vmax.f32 %v2462, %v2463
  %v2465 = vsel %vm2332, %v1134, -inf
  %v2466 = vsel %vm2332, %v1190, -inf
  %v2467 = vmax.f32 %v2465, %v2466
  %v2468 = vsel %vm2332, %v1141, -inf
  %v2469 = vsel %vm2332, %v1197, -inf
  %v2470 = vmax.f32 %v2468, %v2469
  %v2471 = vsel %vm2332, %v1148, -inf
  %v2472 = vsel %vm2332, %v1204, -inf
  %v2473 = vmax.f32 %v2471, %v2472
  %v2474 = vsel %vm2332, %v1155, -inf
  %v2475 = vsel %vm2332, %v1211, -inf
  %v2476 = vmax.f32 %v2474, %v2475
  %v2477 = vsel %vm2332, %v1218, -inf
  %v2478 = vsel %vm2332, %v1274, -inf
  %v2479 = vmax.f32 %v2477, %v2478
  %v2480 = vsel %vm2332, %v1225, -inf
  %v2481 = vsel %vm2332, %v1281, -inf
  %v2482 = vmax.f32 %v2480, %v2481
  %v2483 = vsel %vm2332, %v1232, -inf
  %v2484 = vsel %vm2332, %v1288, -inf
  %v2485 = vmax.f32 %v2483, %v2484
  %v2486 = vsel %vm2332, %v1239, -inf
  %v2487 = vsel %vm2332, %v1295, -inf
  %v2488 = vmax.f32 %v2486, %v2487
  %v2489 = vsel %vm2332, %v1246, -inf
  %v2490 = vsel %vm2332, %v1302, -inf
  %v2491 = vmax.f32 %v2489, %v2490
  %v2492 = vsel %vm2332, %v1253, -inf
  %v2493 = vsel %vm2332, %v1309, -inf
  %v2494 = vmax.f32 %v2492, %v2493
  %v2495 = vsel %vm2332, %v1260, -inf
  %v2496 = vsel %vm2332, %v1316, -inf
  %v2497 = vmax.f32 %v2495, %v2496
  %v2498 = vsel %vm2332, %v1267, -inf
  %v2499 = vsel %vm2332, %v1323, -inf
  %v2500 = vmax.f32 %v2498, %v2499
  %v2501 = vsel %vm2332, %v1330, -inf
  %v2502 = vsel %vm2332, %v1386, -inf
  %v2503 = vmax.f32 %v2501, %v2502
  %v2504 = vsel %vm2332, %v1337, -inf
  %v2505 = vsel %vm2332, %v1393, -inf
  %v2506 = vmax.f32 %v2504, %v2505
  %v2507 = vsel %vm2332, %v1344, -inf
  %v2508 = vsel %vm2332, %v1400, -inf
  %v2509 = vmax.f32 %v2507, %v2508
  %v2510 = vsel %vm2332, %v1351, -inf
  %v2511 = vsel %vm2332, %v1407, -inf
  %v2512 = vmax.f32 %v2510, %v2511
  %v2513 = vsel %vm2332, %v1358, -inf
  %v2514 = vsel %vm2332, %v1414, -inf
  %v2515 = vmax.f32 %v2513, %v2514
  %v2516 = vsel %vm2332, %v1365, -inf
  %v2517 = vsel %vm2332, %v1421, -inf
  %v2518 = vmax.f32 %v2516, %v2517
  %v2519 = vsel %vm2332, %v1372, -inf
  %v2520 = vsel %vm2332, %v1428, -inf
  %v2521 = vmax.f32 %v2519, %v2520
  %v2522 = vsel %vm2332, %v1379, -inf
  %v2523 = vsel %vm2332, %v1435, -inf
  %v2524 = vmax.f32 %v2522, %v2523
  %v2525 = vsel %vm2332, %v1442, -inf
  %v2526 = vsel %vm2332, %v1498, -inf
  %v2527 = vmax.f32 %v2525, %v2526
  %v2528 = vsel %vm2332, %v1449, -inf
  %v2529 = vsel %vm2332, %v1505, -inf
  %v2530 = vmax.f32 %v2528, %v2529
  %v2531 = vsel %vm2332, %v1456, -inf
  %v2532 = vsel %vm2332, %v1512, -inf
  %v2533 = vmax.f32 %v2531, %v2532
  %v2534 = vsel %vm2332, %v1463, -inf
  %v2535 = vsel %vm2332, %v1519, -inf
  %v2536 = vmax.f32 %v2534, %v2535
  %v2537 = vsel %vm2332, %v1470, -inf
  %v2538 = vsel %vm2332, %v1526, -inf
  %v2539 = vmax.f32 %v2537, %v2538
  %v2540 = vsel %vm2332, %v1477, -inf
  %v2541 = vsel %vm2332, %v1533, -inf
  %v2542 = vmax.f32 %v2540, %v2541
  %v2543 = vsel %vm2332, %v1484, -inf
  %v2544 = vsel %vm2332, %v1540, -inf
  %v2545 = vmax.f32 %v2543, %v2544
  %v2546 = vsel %vm2332, %v1491, -inf
  %v2547 = vsel %vm2332, %v1547, -inf
  %v2548 = vmax.f32 %v2546, %v2547
  %v2549 = vsel %vm2332, %v1554, -inf
  %v2550 = vsel %vm2332, %v1610, -inf
  %v2551 = vmax.f32 %v2549, %v2550
  %v2552 = vsel %vm2332, %v1561, -inf
  %v2553 = vsel %vm2332, %v1617, -inf
  %v2554 = vmax.f32 %v2552, %v2553
  %v2555 = vsel %vm2332, %v1568, -inf
  %v2556 = vsel %vm2332, %v1624, -inf
  %v2557 = vmax.f32 %v2555, %v2556
  %v2558 = vsel %vm2332, %v1575, -inf
  %v2559 = vsel %vm2332, %v1631, -inf
  %v2560 = vmax.f32 %v2558, %v2559
  %v2561 = vsel %vm2332, %v1582, -inf
  %v2562 = vsel %vm2332, %v1638, -inf
  %v2563 = vmax.f32 %v2561, %v2562
  %v2564 = vsel %vm2332, %v1589, -inf
  %v2565 = vsel %vm2332, %v1645, -inf
  %v2566 = vmax.f32 %v2564, %v2565
  %v2567 = vsel %vm2332, %v1596, -inf
  %v2568 = vsel %vm2332, %v1652, -inf
  %v2569 = vmax.f32 %v2567, %v2568
  %v2570 = vsel %vm2332, %v1603, -inf
  %v2571 = vsel %vm2332, %v1659, -inf
  %v2572 = vmax.f32 %v2570, %v2571
  %v2573 = vsel %vm2332, %v1666, -inf
  %v2574 = vsel %vm2332, %v1722, -inf
  %v2575 = vmax.f32 %v2573, %v2574
  %v2576 = vsel %vm2332, %v1673, -inf
  %v2577 = vsel %vm2332, %v1729, -inf
  %v2578 = vmax.f32 %v2576, %v2577
  %v2579 = vsel %vm2332, %v1680, -inf
  %v2580 = vsel %vm2332, %v1736, -inf
  %v2581 = vmax.f32 %v2579, %v2580
  %v2582 = vsel %vm2332, %v1687, -inf
  %v2583 = vsel %vm2332, %v1743, -inf
  %v2584 = vmax.f32 %v2582, %v2583
  %v2585 = vsel %vm2332, %v1694, -inf
  %v2586 = vsel %vm2332, %v1750, -inf
  %v2587 = vmax.f32 %v2585, %v2586
  %v2588 = vsel %vm2332, %v1701, -inf
  %v2589 = vsel %vm2332, %v1757, -inf
  %v2590 = vmax.f32 %v2588, %v2589
  %v2591 = vsel %vm2332, %v1708, -inf
  %v2592 = vsel %vm2332, %v1764, -inf
  %v2593 = vmax.f32 %v2591, %v2592
  %v2594 = vsel %vm2332, %v1715, -inf
  %v2595 = vsel %vm2332, %v1771, -inf
  %v2596 = vmax.f32 %v2594, %v2595
  %v2597 = vsel %vm2332, %v1778, -inf
  %v2598 = vsel %vm2332, %v1834, -inf
  %v2599 = vmax.f32 %v2597, %v2598
  %v2600 = vsel %vm2332, %v1785, -inf
  %v2601 = vsel %vm2332, %v1841, -inf
  %v2602 = vmax.f32 %v2600, %v2601
  %v2603 = vsel %vm2332, %v1792, -inf
  %v2604 = vsel %vm2332, %v1848, -inf
  %v2605 = vmax.f32 %v2603, %v2604
  %v2606 = vsel %vm2332, %v1799, -inf
  %v2607 = vsel %vm2332, %v1855, -inf
  %v2608 = vmax.f32 %v2606, %v2607
  %v2609 = vsel %vm2332, %v1806, -inf
  %v2610 = vsel %vm2332, %v1862, -inf
  %v2611 = vmax.f32 %v2609, %v2610
  %v2612 = vsel %vm2332, %v1813, -inf
  %v2613 = vsel %vm2332, %v1869, -inf
  %v2614 = vmax.f32 %v2612, %v2613
  %v2615 = vsel %vm2332, %v1820, -inf
  %v2616 = vsel %vm2332, %v1876, -inf
  %v2617 = vmax.f32 %v2615, %v2616
  %v2618 = vsel %vm2332, %v1827, -inf
  %v2619 = vsel %vm2332, %v1883, -inf
  %v2620 = vmax.f32 %v2618, %v2619
  %v2621 = vsel %vm2332, %v1890, -inf
  %v2622 = vsel %vm2332, %v1946, -inf
  %v2623 = vmax.f32 %v2621, %v2622
  %v2624 = vsel %vm2332, %v1897, -inf
  %v2625 = vsel %vm2332, %v1953, -inf
  %v2626 = vmax.f32 %v2624, %v2625
  %v2627 = vsel %vm2332, %v1904, -inf
  %v2628 = vsel %vm2332, %v1960, -inf
  %v2629 = vmax.f32 %v2627, %v2628
  %v2630 = vsel %vm2332, %v1911, -inf
  %v2631 = vsel %vm2332, %v1967, -inf
  %v2632 = vmax.f32 %v2630, %v2631
  %v2633 = vsel %vm2332, %v1918, -inf
  %v2634 = vsel %vm2332, %v1974, -inf
  %v2635 = vmax.f32 %v2633, %v2634
  %v2636 = vsel %vm2332, %v1925, -inf
  %v2637 = vsel %vm2332, %v1981, -inf
  %v2638 = vmax.f32 %v2636, %v2637
  %v2639 = vsel %vm2332, %v1932, -inf
  %v2640 = vsel %vm2332, %v1988, -inf
  %v2641 = vmax.f32 %v2639, %v2640
  %v2642 = vsel %vm2332, %v1939, -inf
  %v2643 = vsel %vm2332, %v1995, -inf
  %v2644 = vmax.f32 %v2642, %v2643
  %v2645 = vsel %vm2332, %v2002, -inf
  %v2646 = vsel %vm2332, %v2058, -inf
  %v2647 = vmax.f32 %v2645, %v2646
  %v2648 = vsel %vm2332, %v2009, -inf
  %v2649 = vsel %vm2332, %v2065, -inf
  %v2650 = vmax.f32 %v2648, %v2649
  %v2651 = vsel %vm2332, %v2016, -inf
  %v2652 = vsel %vm2332, %v2072, -inf
  %v2653 = vmax.f32 %v2651, %v2652
  %v2654 = vsel %vm2332, %v2023, -inf
  %v2655 = vsel %vm2332, %v2079, -inf
  %v2656 = vmax.f32 %v2654, %v2655
  %v2657 = vsel %vm2332, %v2030, -inf
  %v2658 = vsel %vm2332, %v2086, -inf
  %v2659 = vmax.f32 %v2657, %v2658
  %v2660 = vsel %vm2332, %v2037, -inf
  %v2661 = vsel %vm2332, %v2093, -inf
  %v2662 = vmax.f32 %v2660, %v2661
  %v2663 = vsel %vm2332, %v2044, -inf
  %v2664 = vsel %vm2332, %v2100, -inf
  %v2665 = vmax.f32 %v2663, %v2664
  %v2666 = vsel %vm2332, %v2051, -inf
  %v2667 = vsel %vm2332, %v2107, -inf
  %v2668 = vmax.f32 %v2666, %v2667
  %v2669 = vsel %vm2332, %v2114, -inf
  %v2670 = vsel %vm2332, %v2170, -inf
  %v2671 = vmax.f32 %v2669, %v2670
  %v2672 = vsel %vm2332, %v2121, -inf
  %v2673 = vsel %vm2332, %v2177, -inf
  %v2674 = vmax.f32 %v2672, %v2673
  %v2675 = vsel %vm2332, %v2128, -inf
  %v2676 = vsel %vm2332, %v2184, -inf
  %v2677 = vmax.f32 %v2675, %v2676
  %v2678 = vsel %vm2332, %v2135, -inf
  %v2679 = vsel %vm2332, %v2191, -inf
  %v2680 = vmax.f32 %v2678, %v2679
  %v2681 = vsel %vm2332, %v2142, -inf
  %v2682 = vsel %vm2332, %v2198, -inf
  %v2683 = vmax.f32 %v2681, %v2682
  %v2684 = vsel %vm2332, %v2149, -inf
  %v2685 = vsel %vm2332, %v2205, -inf
  %v2686 = vmax.f32 %v2684, %v2685
  %v2687 = vsel %vm2332, %v2156, -inf
  %v2688 = vsel %vm2332, %v2212, -inf
  %v2689 = vmax.f32 %v2687, %v2688
  %v2690 = vsel %vm2332, %v2163, -inf
  %v2691 = vsel %vm2332, %v2219, -inf
  %v2692 = vmax.f32 %v2690, %v2691
  %v2693 = vsel %vm2332, %v2226, -inf
  %v2694 = vsel %vm2332, %v2282, -inf
  %v2695 = vmax.f32 %v2693, %v2694
  %v2696 = vsel %vm2332, %v2233, -inf
  %v2697 = vsel %vm2332, %v2289, -inf
  %v2698 = vmax.f32 %v2696, %v2697
  %v2699 = vsel %vm2332, %v2240, -inf
  %v2700 = vsel %vm2332, %v2296, -inf
  %v2701 = vmax.f32 %v2699, %v2700
  %v2702 = vsel %vm2332, %v2247, -inf
  %v2703 = vsel %vm2332, %v2303, -inf
  %v2704 = vmax.f32 %v2702, %v2703
  %v2705 = vsel %vm2332, %v2254, -inf
  %v2706 = vsel %vm2332, %v2310, -inf
  %v2707 = vmax.f32 %v2705, %v2706
  %v2708 = vsel %vm2332, %v2261, -inf
  %v2709 = vsel %vm2332, %v2317, -inf
  %v2710 = vmax.f32 %v2708, %v2709
  %v2711 = vsel %vm2332, %v2268, -inf
  %v2712 = vsel %vm2332, %v2324, -inf
  %v2713 = vmax.f32 %v2711, %v2712
  %v2714 = vsel %vm2332, %v2275, -inf
  %v2715 = vsel %vm2332, %v2331, -inf
  %v2716 = vmax.f32 %v2714, %v2715
  %2717 = vst.msk [vmem:[#allocation2] sm:$0xff] %vm2332, 0.0
  %2718 = vst.msk [vmem:[#allocation2 + $0x8] sm:$0x3] %vm539, 0.0
  %2719 = vst.msk [vmem:[#allocation2 + $0xa0] sm:$0xff] %vm2332, 0.0
  %2720 = vst.msk [vmem:[#allocation2 + $0xa8] sm:$0x3] %vm539, 0.0
  %s2721 = scalar_lea.vmem [#allocation2], 144
  %2722 = vst.msk [vmem:[%s2721] sm:$0xff] %vm2332, 0.0
  %2723 = vst.msk [vmem:[%s2721 + $0x8] sm:$0x3] %vm539, 0.0
  %2724 = vst.msk [vmem:[%s2721 + $0xa0] sm:$0xff] %vm2332, 0.0
  %2725 = vst.msk [vmem:[%s2721 + $0xa8] sm:$0x3] %vm539, 0.0
  %s2726 = scalar_lea.vmem [#allocation2], 16
  %vm2727 = vcmask 24576
  %2728 = vst.msk [vmem:[%s2726] sm:$0x1] %vm2727, 0.0
  %2729 = vst.msk [vmem:[%s2726 + $0x10] sm:$0x1] %vm2727, 0.0
  %2730 = vst.msk [vmem:[%s2726 + $0x20] sm:$0x1] %vm2727, 0.0
  %2731 = vst.msk [vmem:[%s2726 + $0x30] sm:$0x1] %vm2727, 0.0
  %2732 = vst.msk [vmem:[%s2726 + $0x40] sm:$0x1] %vm2727, 0.0
  %2733 = vst.msk [vmem:[%s2726 + $0x50] sm:$0x1] %vm2727, 0.0
  %2734 = vst.msk [vmem:[%s2726 + $0x60] sm:$0x1] %vm2727, 0.0
  %2735 = vst.msk [vmem:[%s2726 + $0x70] sm:$0x1] %vm2727, 0.0
  %2736 = vst.msk [vmem:[%s2726 + $0xa0] sm:$0x1] %vm2727, 0.0
  %2737 = vst.msk [vmem:[%s2726 + $0xb0] sm:$0x1] %vm2727, 0.0
  %2738 = vst.msk [vmem:[%s2726 + $0xc0] sm:$0x1] %vm2727, 0.0
  %2739 = vst.msk [vmem:[%s2726 + $0xd0] sm:$0x1] %vm2727, 0.0
  %2740 = vst.msk [vmem:[%s2726 + $0xe0] sm:$0x1] %vm2727, 0.0
  %2741 = vst.msk [vmem:[%s2726 + $0xf0] sm:$0x1] %vm2727, 0.0
  %2742 = vst.msk [vmem:[%s2726 + $0x100] sm:$0x1] %vm2727, 0.0
  %2743 = vst.msk [vmem:[%s2726 + $0x110] sm:$0x1] %vm2727, 0.0
  %2744 = vst.msk [vmem:[%s2726 + $0x9] sm:$0x1] %vm2727, 0.0
  %2745 = vst.msk [vmem:[%s2726 + $0x19] sm:$0x1] %vm2727, 0.0
  %2746 = vst.msk [vmem:[%s2726 + $0x29] sm:$0x1] %vm2727, 0.0
  %2747 = vst.msk [vmem:[%s2726 + $0x39] sm:$0x1] %vm2727, 0.0
  %2748 = vst.msk [vmem:[%s2726 + $0x49] sm:$0x1] %vm2727, 0.0
  %2749 = vst.msk [vmem:[%s2726 + $0x59] sm:$0x1] %vm2727, 0.0
  %2750 = vst.msk [vmem:[%s2726 + $0x69] sm:$0x1] %vm2727, 0.0
  %2751 = vst.msk [vmem:[%s2726 + $0x79] sm:$0x1] %vm2727, 0.0
  %2752 = vst.msk [vmem:[%s2726 + $0xa9] sm:$0x1] %vm2727, 0.0
  %2753 = vst.msk [vmem:[%s2726 + $0xb9] sm:$0x1] %vm2727, 0.0
  %2754 = vst.msk [vmem:[%s2726 + $0xc9] sm:$0x1] %vm2727, 0.0
  %2755 = vst.msk [vmem:[%s2726 + $0xd9] sm:$0x1] %vm2727, 0.0
  %2756 = vst.msk [vmem:[%s2726 + $0xe9] sm:$0x1] %vm2727, 0.0
  %2757 = vst.msk [vmem:[%s2726 + $0xf9] sm:$0x1] %vm2727, 0.0
  %2758 = vst.msk [vmem:[%s2726 + $0x109] sm:$0x1] %vm2727, 0.0
  %2759 = vst.msk [vmem:[%s2726 + $0x119] sm:$0x1] %vm2727, 0.0
  %vm2888 = vcmask 1041409
  %v2889 = vsel %vm2888, %v2338, %v2335
  %vm2890 = vcmask 1042434
  %v2891 = vsel %vm2890, %v2341, %v2889
  %vm2892 = vcmask 1043459
  %v2893 = vsel %vm2892, %v2344, %v2891
  %vm2894 = vcmask 1044484
  %v2895 = vsel %vm2894, %v2347, %v2893
  %vm2896 = vcmask 1045509
  %v2897 = vsel %vm2896, %v2350, %v2895
  %vm2898 = vcmask 1046534
  %v2899 = vsel %vm2898, %v2353, %v2897
  %vm2900 = vcmask 1047559
  %v2901 = vsel %vm2900, %v2356, %v2899
  %v2902 = vsel %vm2888, %v2362, %v2359
  %v2903 = vsel %vm2890, %v2365, %v2902
  %v2904 = vsel %vm2892, %v2368, %v2903
  %v2905 = vsel %vm2894, %v2371, %v2904
  %v2906 = vsel %vm2896, %v2374, %v2905
  %v2907 = vsel %vm2898, %v2377, %v2906
  %v2908 = vsel %vm2900, %v2380, %v2907
  %v2909 = vsel %vm2888, %v2386, %v2383
  %v2910 = vsel %vm2890, %v2389, %v2909
  %v2911 = vsel %vm2892, %v2392, %v2910
  %v2912 = vsel %vm2894, %v2395, %v2911
  %v2913 = vsel %vm2896, %v2398, %v2912
  %v2914 = vsel %vm2898, %v2401, %v2913
  %v2915 = vsel %vm2900, %v2404, %v2914
  %v2916 = vsel %vm2888, %v2410, %v2407
  %v2917 = vsel %vm2890, %v2413, %v2916
  %v2918 = vsel %vm2892, %v2416, %v2917
  %v2919 = vsel %vm2894, %v2419, %v2918
  %v2920 = vsel %vm2896, %v2422, %v2919
  %v2921 = vsel %vm2898, %v2425, %v2920
  %v2922 = vsel %vm2900, %v2428, %v2921
  %v2923 = vsel %vm2888, %v2434, %v2431
  %v2924 = vsel %vm2890, %v2437, %v2923
  %v2925 = vsel %vm2892, %v2440, %v2924
  %v2926 = vsel %vm2894, %v2443, %v2925
  %v2927 = vsel %vm2896, %v2446, %v2926
  %v2928 = vsel %vm2898, %v2449, %v2927
  %v2929 = vsel %vm2900, %v2452, %v2928
  %v2930 = vsel %vm2888, %v2458, %v2455
  %v2931 = vsel %vm2890, %v2461, %v2930
  %v2932 = vsel %vm2892, %v2464, %v2931
  %v2933 = vsel %vm2894, %v2467, %v2932
  %v2934 = vsel %vm2896, %v2470, %v2933
  %v2935 = vsel %vm2898, %v2473, %v2934
  %v2936 = vsel %vm2900, %v2476, %v2935
  %v2937 = vsel %vm2888, %v2482, %v2479
  %v2938 = vsel %vm2890, %v2485, %v2937
  %v2939 = vsel %vm2892, %v2488, %v2938
  %v2940 = vsel %vm2894, %v2491, %v2939
  %v2941 = vsel %vm2896, %v2494, %v2940
  %v2942 = vsel %vm2898, %v2497, %v2941
  %v2943 = vsel %vm2900, %v2500, %v2942
  %v2944 = vsel %vm2888, %v2506, %v2503
  %v2945 = vsel %vm2890, %v2509, %v2944
  %v2946 = vsel %vm2892, %v2512, %v2945
  %v2947 = vsel %vm2894, %v2515, %v2946
  %v2948 = vsel %vm2896, %v2518, %v2947
  %v2949 = vsel %vm2898, %v2521, %v2948
  %v2950 = vsel %vm2900, %v2524, %v2949
  %v2951 = vsel %vm2888, %v2530, %v2527
  %v2952 = vsel %vm2890, %v2533, %v2951
  %v2953 = vsel %vm2892, %v2536, %v2952
  %v2954 = vsel %vm2894, %v2539, %v2953
  %v2955 = vsel %vm2896, %v2542, %v2954
  %v2956 = vsel %vm2898, %v2545, %v2955
  %v2957 = vsel %vm2900, %v2548, %v2956
  %v2958 = vsel %vm2888, %v2554, %v2551
  %v2959 = vsel %vm2890, %v2557, %v2958
  %v2960 = vsel %vm2892, %v2560, %v2959
  %v2961 = vsel %vm2894, %v2563, %v2960
  %v2962 = vsel %vm2896, %v2566, %v2961
  %v2963 = vsel %vm2898, %v2569, %v2962
  %v2964 = vsel %vm2900, %v2572, %v2963
  %v2965 = vsel %vm2888, %v2578, %v2575
  %v2966 = vsel %vm2890, %v2581, %v2965
  %v2967 = vsel %vm2892, %v2584, %v2966
  %v2968 = vsel %vm2894, %v2587, %v2967
  %v2969 = vsel %vm2896, %v2590, %v2968
  %v2970 = vsel %vm2898, %v2593, %v2969
  %v2971 = vsel %vm2900, %v2596, %v2970
  %v2972 = vsel %vm2888, %v2602, %v2599
  %v2973 = vsel %vm2890, %v2605, %v2972
  %v2974 = vsel %vm2892, %v2608, %v2973
  %v2975 = vsel %vm2894, %v2611, %v2974
  %v2976 = vsel %vm2896, %v2614, %v2975
  %v2977 = vsel %vm2898, %v2617, %v2976
  %v2978 = vsel %vm2900, %v2620, %v2977
  %v2979 = vsel %vm2888, %v2626, %v2623
  %v2980 = vsel %vm2890, %v2629, %v2979
  %v2981 = vsel %vm2892, %v2632, %v2980
  %v2982 = vsel %vm2894, %v2635, %v2981
  %v2983 = vsel %vm2896, %v2638, %v2982
  %v2984 = vsel %vm2898, %v2641, %v2983
  %v2985 = vsel %vm2900, %v2644, %v2984
  %v2986 = vsel %vm2888, %v2650, %v2647
  %v2987 = vsel %vm2890, %v2653, %v2986
  %v2988 = vsel %vm2892, %v2656, %v2987
  %v2989 = vsel %vm2894, %v2659, %v2988
  %v2990 = vsel %vm2896, %v2662, %v2989
  %v2991 = vsel %vm2898, %v2665, %v2990
  %v2992 = vsel %vm2900, %v2668, %v2991
  %v2993 = vsel %vm2888, %v2674, %v2671
  %v2994 = vsel %vm2890, %v2677, %v2993
  %v2995 = vsel %vm2892, %v2680, %v2994
  %v2996 = vsel %vm2894, %v2683, %v2995
  %v2997 = vsel %vm2896, %v2686, %v2996
  %v2998 = vsel %vm2898, %v2689, %v2997
  %v2999 = vsel %vm2900, %v2692, %v2998
  %v3000 = vsel %vm2888, %v2698, %v2695
  %v3001 = vsel %vm2890, %v2701, %v3000
  %v3002 = vsel %vm2892, %v2704, %v3001
  %v3003 = vsel %vm2894, %v2707, %v3002
  %v3004 = vsel %vm2896, %v2710, %v3003
  %v3005 = vsel %vm2898, %v2713, %v3004
  %v3006 = vsel %vm2900, %v2716, %v3005
  %3023 = vst.msk [vmem:[%s2726 + $0x1] sm:$0xff] %vm2332, %v2901
  %3024 = vst.msk [vmem:[%s2726 + $0x11] sm:$0xff] %vm2332, %v2908
  %3025 = vst.msk [vmem:[%s2726 + $0x21] sm:$0xff] %vm2332, %v2915
  %3026 = vst.msk [vmem:[%s2726 + $0x31] sm:$0xff] %vm2332, %v2922
  %3027 = vst.msk [vmem:[%s2726 + $0x41] sm:$0xff] %vm2332, %v2929
  %3028 = vst.msk [vmem:[%s2726 + $0x51] sm:$0xff] %vm2332, %v2936
  %3029 = vst.msk [vmem:[%s2726 + $0x61] sm:$0xff] %vm2332, %v2943
  %3030 = vst.msk [vmem:[%s2726 + $0x71] sm:$0xff] %vm2332, %v2950
  %3031 = vst.msk [vmem:[%s2726 + $0xa1] sm:$0xff] %vm2332, %v2957
  %3032 = vst.msk [vmem:[%s2726 + $0xb1] sm:$0xff] %vm2332, %v2964
  %3033 = vst.msk [vmem:[%s2726 + $0xc1] sm:$0xff] %vm2332, %v2971
  %3034 = vst.msk [vmem:[%s2726 + $0xd1] sm:$0xff] %vm2332, %v2978
  %3035 = vst.msk [vmem:[%s2726 + $0xe1] sm:$0xff] %vm2332, %v2985
  %3036 = vst.msk [vmem:[%s2726 + $0xf1] sm:$0xff] %vm2332, %v2992
  %3037 = vst.msk [vmem:[%s2726 + $0x101] sm:$0xff] %vm2332, %v2999
  %3038 = vst.msk [vmem:[%s2726 + $0x111] sm:$0xff] %vm2332, %v3006
  %v3039 = vld [vmem:[#allocation2] sm:$0xff]
  %v3040 = vld [vmem:[#allocation2 + $0x10] sm:$0xff]
  %v3041 = vld [vmem:[#allocation2 + $0x20] sm:$0xff]
  %v3042 = vld [vmem:[#allocation2 + $0x30] sm:$0xff]
  %v3043 = vld [vmem:[#allocation2 + $0x40] sm:$0xff]
  %v3044 = vld [vmem:[#allocation2 + $0x50] sm:$0xff]
  %v3045 = vld [vmem:[#allocation2 + $0x60] sm:$0xff]
  %v3046 = vld [vmem:[#allocation2 + $0x70] sm:$0xff]
  %v3047 = vld [vmem:[#allocation2 + $0xa0] sm:$0xff]
  %v3048 = vld [vmem:[#allocation2 + $0xb0] sm:$0xff]
  %v3049 = vld [vmem:[#allocation2 + $0xc0] sm:$0xff]
  %v3050 = vld [vmem:[#allocation2 + $0xd0] sm:$0xff]
  %v3051 = vld [vmem:[#allocation2 + $0xe0] sm:$0xff]
  %v3052 = vld [vmem:[#allocation2 + $0xf0] sm:$0xff]
  %v3053 = vld [vmem:[#allocation2 + $0x100] sm:$0xff]
  %v3054 = vld [vmem:[#allocation2 + $0x110] sm:$0xff]
  %v3055 = vpack.c.bf16 %v3039, %v3039
  %v3056 = vpack.c.bf16 %v3040, %v3040
  %v3057 = vpack.c.bf16 %v3041, %v3041
  %v3058 = vpack.c.bf16 %v3042, %v3042
  %v3059 = vpack.c.bf16 %v3043, %v3043
  %v3060 = vpack.c.bf16 %v3044, %v3044
  %v3061 = vpack.c.bf16 %v3045, %v3045
  %v3062 = vpack.c.bf16 %v3046, %v3046
  %v3063 = vpack.c.bf16 %v3047, %v3047
  %v3064 = vpack.c.bf16 %v3048, %v3048
  %v3065 = vpack.c.bf16 %v3049, %v3049
  %v3066 = vpack.c.bf16 %v3050, %v3050
  %v3067 = vpack.c.bf16 %v3051, %v3051
  %v3068 = vpack.c.bf16 %v3052, %v3052
  %v3069 = vpack.c.bf16 %v3053, %v3053
  %v3070 = vpack.c.bf16 %v3054, %v3054
  %vm3071 = vcmask 27648
  %3072 = vst.msk [vmem:[#allocation3] sm:$0xf] %vm3071, %v3055
  %3073 = vst.msk [vmem:[#allocation3 + $0x4] sm:$0xf] %vm3071, %v3056
  %3074 = vst.msk [vmem:[#allocation3 + $0x8] sm:$0xf] %vm3071, %v3057
  %3075 = vst.msk [vmem:[#allocation3 + $0xc] sm:$0xf] %vm3071, %v3058
  %3076 = vst.msk [vmem:[#allocation3 + $0x10] sm:$0xf] %vm3071, %v3059
  %3077 = vst.msk [vmem:[#allocation3 + $0x14] sm:$0xf] %vm3071, %v3060
  %3078 = vst.msk [vmem:[#allocation3 + $0x18] sm:$0xf] %vm3071, %v3061
  %3079 = vst.msk [vmem:[#allocation3 + $0x1c] sm:$0xf] %vm3071, %v3062
  %3080 = vst.msk [vmem:[#allocation3 + $0x20] sm:$0xf] %vm3071, %v3063
  %3081 = vst.msk [vmem:[#allocation3 + $0x24] sm:$0xf] %vm3071, %v3064
  %3082 = vst.msk [vmem:[#allocation3 + $0x28] sm:$0xf] %vm3071, %v3065
  %3083 = vst.msk [vmem:[#allocation3 + $0x2c] sm:$0xf] %vm3071, %v3066
  %3084 = vst.msk [vmem:[#allocation3 + $0x30] sm:$0xf] %vm3071, %v3067
  %3085 = vst.msk [vmem:[#allocation3 + $0x34] sm:$0xf] %vm3071, %v3068
  %3086 = vst.msk [vmem:[#allocation3 + $0x38] sm:$0xf] %vm3071, %v3069
  %3087 = vst.msk [vmem:[#allocation3 + $0x3c] sm:$0xf] %vm3071, %v3070
  %v3088 = vld [vmem:[#allocation2 + $0x1] sm:$0xff]
  %v3089 = vld [vmem:[#allocation2 + $0x11] sm:$0xff]
  %v3090 = vld [vmem:[#allocation2 + $0x21] sm:$0xff]
  %v3091 = vld [vmem:[#allocation2 + $0x31] sm:$0xff]
  %v3092 = vld [vmem:[#allocation2 + $0x41] sm:$0xff]
  %v3093 = vld [vmem:[#allocation2 + $0x51] sm:$0xff]
  %v3094 = vld [vmem:[#allocation2 + $0x61] sm:$0xff]
  %v3095 = vld [vmem:[#allocation2 + $0x71] sm:$0xff]
  %v3096 = vld [vmem:[#allocation2 + $0xa1] sm:$0xff]
  %v3097 = vld [vmem:[#allocation2 + $0xb1] sm:$0xff]
  %v3098 = vld [vmem:[#allocation2 + $0xc1] sm:$0xff]
  %v3099 = vld [vmem:[#allocation2 + $0xd1] sm:$0xff]
  %v3100 = vld [vmem:[#allocation2 + $0xe1] sm:$0xff]
  %v3101 = vld [vmem:[#allocation2 + $0xf1] sm:$0xff]
  %v3102 = vld [vmem:[#allocation2 + $0x101] sm:$0xff]
  %v3103 = vld [vmem:[#allocation2 + $0x111] sm:$0xff]
  %v3104 = vpack.c.bf16 %v3088, %v3088
  %v3105 = vpack.c.bf16 %v3089, %v3089
  %v3106 = vpack.c.bf16 %v3090, %v3090
  %v3107 = vpack.c.bf16 %v3091, %v3091
  %v3108 = vpack.c.bf16 %v3092, %v3092
  %v3109 = vpack.c.bf16 %v3093, %v3093
  %v3110 = vpack.c.bf16 %v3094, %v3094
  %v3111 = vpack.c.bf16 %v3095, %v3095
  %v3112 = vpack.c.bf16 %v3096, %v3096
  %v3113 = vpack.c.bf16 %v3097, %v3097
  %v3114 = vpack.c.bf16 %v3098, %v3098
  %v3115 = vpack.c.bf16 %v3099, %v3099
  %v3116 = vpack.c.bf16 %v3100, %v3100
  %v3117 = vpack.c.bf16 %v3101, %v3101
  %v3118 = vpack.c.bf16 %v3102, %v3102
  %v3119 = vpack.c.bf16 %v3103, %v3103
  %3136 = vrot.lane.b32.xlu0 %v3104, 4
  %v3137 = vpop.permute.xlu0 %3136
  %3138 = vrot.lane.b32.xlu0 %v3105, 4
  %v3139 = vpop.permute.xlu0 %3138
  %3140 = vrot.lane.b32.xlu0 %v3106, 4
  %v3141 = vpop.permute.xlu0 %3140
  %3142 = vrot.lane.b32.xlu0 %v3107, 4
  %v3143 = vpop.permute.xlu0 %3142
  %3144 = vrot.lane.b32.xlu0 %v3108, 4
  %v3145 = vpop.permute.xlu0 %3144
  %3146 = vrot.lane.b32.xlu0 %v3109, 4
  %v3147 = vpop.permute.xlu0 %3146
  %3148 = vrot.lane.b32.xlu0 %v3110, 4
  %v3149 = vpop.permute.xlu0 %3148
  %3150 = vrot.lane.b32.xlu0 %v3111, 4
  %v3151 = vpop.permute.xlu0 %3150
  %3152 = vrot.lane.b32.xlu0 %v3112, 4
  %v3153 = vpop.permute.xlu0 %3152
  %3154 = vrot.lane.b32.xlu0 %v3113, 4
  %v3155 = vpop.permute.xlu0 %3154
  %3156 = vrot.lane.b32.xlu0 %v3114, 4
  %v3157 = vpop.permute.xlu0 %3156
  %3158 = vrot.lane.b32.xlu0 %v3115, 4
  %v3159 = vpop.permute.xlu0 %3158
  %3160 = vrot.lane.b32.xlu0 %v3116, 4
  %v3161 = vpop.permute.xlu0 %3160
  %3162 = vrot.lane.b32.xlu0 %v3117, 4
  %v3163 = vpop.permute.xlu0 %3162
  %3164 = vrot.lane.b32.xlu0 %v3118, 4
  %v3165 = vpop.permute.xlu0 %3164
  %3166 = vrot.lane.b32.xlu0 %v3119, 4
  %v3167 = vpop.permute.xlu0 %3166
  %vm3184 = vcmask 60448
  %3185 = vst.msk [vmem:[#allocation3] sm:$0xf] %vm3184, %v3137
  %3186 = vst.msk [vmem:[#allocation3 + $0x4] sm:$0xf] %vm3184, %v3139
  %3187 = vst.msk [vmem:[#allocation3 + $0x8] sm:$0xf] %vm3184, %v3141
  %3188 = vst.msk [vmem:[#allocation3 + $0xc] sm:$0xf] %vm3184, %v3143
  %3189 = vst.msk [vmem:[#allocation3 + $0x10] sm:$0xf] %vm3184, %v3145
  %3190 = vst.msk [vmem:[#allocation3 + $0x14] sm:$0xf] %vm3184, %v3147
  %3191 = vst.msk [vmem:[#allocation3 + $0x18] sm:$0xf] %vm3184, %v3149
  %3192 = vst.msk [vmem:[#allocation3 + $0x1c] sm:$0xf] %vm3184, %v3151
  %3193 = vst.msk [vmem:[#allocation3 + $0x20] sm:$0xf] %vm3184, %v3153
  %3194 = vst.msk [vmem:[#allocation3 + $0x24] sm:$0xf] %vm3184, %v3155
  %3195 = vst.msk [vmem:[#allocation3 + $0x28] sm:$0xf] %vm3184, %v3157
  %3196 = vst.msk [vmem:[#allocation3 + $0x2c] sm:$0xf] %vm3184, %v3159
  %3197 = vst.msk [vmem:[#allocation3 + $0x30] sm:$0xf] %vm3184, %v3161
  %3198 = vst.msk [vmem:[#allocation3 + $0x34] sm:$0xf] %vm3184, %v3163
  %3199 = vst.msk [vmem:[#allocation3 + $0x38] sm:$0xf] %vm3184, %v3165
  %3200 = vst.msk [vmem:[#allocation3 + $0x3c] sm:$0xf] %vm3184, %v3167
  %v3201 = vld [vmem:[#allocation2 + $0x2] sm:$0xff]
  %v3202 = vld [vmem:[#allocation2 + $0x12] sm:$0xff]
  %v3203 = vld [vmem:[#allocation2 + $0x22] sm:$0xff]
  %v3204 = vld [vmem:[#allocation2 + $0x32] sm:$0xff]
  %v3205 = vld [vmem:[#allocation2 + $0x42] sm:$0xff]
  %v3206 = vld [vmem:[#allocation2 + $0x52] sm:$0xff]
  %v3207 = vld [vmem:[#allocation2 + $0x62] sm:$0xff]
  %v3208 = vld [vmem:[#allocation2 + $0x72] sm:$0xff]
  %v3209 = vld [vmem:[#allocation2 + $0xa2] sm:$0xff]
  %v3210 = vld [vmem:[#allocation2 + $0xb2] sm:$0xff]
  %v3211 = vld [vmem:[#allocation2 + $0xc2] sm:$0xff]
  %v3212 = vld [vmem:[#allocation2 + $0xd2] sm:$0xff]
  %v3213 = vld [vmem:[#allocation2 + $0xe2] sm:$0xff]
  %v3214 = vld [vmem:[#allocation2 + $0xf2] sm:$0xff]
  %v3215 = vld [vmem:[#allocation2 + $0x102] sm:$0xff]
  %v3216 = vld [vmem:[#allocation2 + $0x112] sm:$0xff]
  %v3217 = vpack.c.bf16 %v3201, %v3201
  %v3218 = vpack.c.bf16 %v3202, %v3202
  %v3219 = vpack.c.bf16 %v3203, %v3203
  %v3220 = vpack.c.bf16 %v3204, %v3204
  %v3221 = vpack.c.bf16 %v3205, %v3205
  %v3222 = vpack.c.bf16 %v3206, %v3206
  %v3223 = vpack.c.bf16 %v3207, %v3207
  %v3224 = vpack.c.bf16 %v3208, %v3208
  %v3225 = vpack.c.bf16 %v3209, %v3209
  %v3226 = vpack.c.bf16 %v3210, %v3210
  %v3227 = vpack.c.bf16 %v3211, %v3211
  %v3228 = vpack.c.bf16 %v3212, %v3212
  %v3229 = vpack.c.bf16 %v3213, %v3213
  %v3230 = vpack.c.bf16 %v3214, %v3214
  %v3231 = vpack.c.bf16 %v3215, %v3215
  %v3232 = vpack.c.bf16 %v3216, %v3216
  %3249 = vrot.lane.b32.xlu0 %v3217, 8
  %v3250 = vpop.permute.xlu0 %3249
  %3251 = vrot.lane.b32.xlu0 %v3218, 8
  %v3252 = vpop.permute.xlu0 %3251
  %3253 = vrot.lane.b32.xlu0 %v3219, 8
  %v3254 = vpop.permute.xlu0 %3253
  %3255 = vrot.lane.b32.xlu0 %v3220, 8
  %v3256 = vpop.permute.xlu0 %3255
  %3257 = vrot.lane.b32.xlu0 %v3221, 8
  %v3258 = vpop.permute.xlu0 %3257
  %3259 = vrot.lane.b32.xlu0 %v3222, 8
  %v3260 = vpop.permute.xlu0 %3259
  %3261 = vrot.lane.b32.xlu0 %v3223, 8
  %v3262 = vpop.permute.xlu0 %3261
  %3263 = vrot.lane.b32.xlu0 %v3224, 8
  %v3264 = vpop.permute.xlu0 %3263
  %3265 = vrot.lane.b32.xlu0 %v3225, 8
  %v3266 = vpop.permute.xlu0 %3265
  %3267 = vrot.lane.b32.xlu0 %v3226, 8
  %v3268 = vpop.permute.xlu0 %3267
  %3269 = vrot.lane.b32.xlu0 %v3227, 8
  %v3270 = vpop.permute.xlu0 %3269
  %3271 = vrot.lane.b32.xlu0 %v3228, 8
  %v3272 = vpop.permute.xlu0 %3271
  %3273 = vrot.lane.b32.xlu0 %v3229, 8
  %v3274 = vpop.permute.xlu0 %3273
  %3275 = vrot.lane.b32.xlu0 %v3230, 8
  %v3276 = vpop.permute.xlu0 %3275
  %3277 = vrot.lane.b32.xlu0 %v3231, 8
  %v3278 = vpop.permute.xlu0 %3277
  %3279 = vrot.lane.b32.xlu0 %v3232, 8
  %v3280 = vpop.permute.xlu0 %3279
  %vm3297 = vcmask 93248
  %3298 = vst.msk [vmem:[#allocation3] sm:$0xf] %vm3297, %v3250
  %3299 = vst.msk [vmem:[#allocation3 + $0x4] sm:$0xf] %vm3297, %v3252
  %3300 = vst.msk [vmem:[#allocation3 + $0x8] sm:$0xf] %vm3297, %v3254
  %3301 = vst.msk [vmem:[#allocation3 + $0xc] sm:$0xf] %vm3297, %v3256
  %3302 = vst.msk [vmem:[#allocation3 + $0x10] sm:$0xf] %vm3297, %v3258
  %3303 = vst.msk [vmem:[#allocation3 + $0x14] sm:$0xf] %vm3297, %v3260
  %3304 = vst.msk [vmem:[#allocation3 + $0x18] sm:$0xf] %vm3297, %v3262
  %3305 = vst.msk [vmem:[#allocation3 + $0x1c] sm:$0xf] %vm3297, %v3264
  %3306 = vst.msk [vmem:[#allocation3 + $0x20] sm:$0xf] %vm3297, %v3266
  %3307 = vst.msk [vmem:[#allocation3 + $0x24] sm:$0xf] %vm3297, %v3268
  %3308 = vst.msk [vmem:[#allocation3 + $0x28] sm:$0xf] %vm3297, %v3270
  %3309 = vst.msk [vmem:[#allocation3 + $0x2c] sm:$0xf] %vm3297, %v3272
  %3310 = vst.msk [vmem:[#allocation3 + $0x30] sm:$0xf] %vm3297, %v3274
  %3311 = vst.msk [vmem:[#allocation3 + $0x34] sm:$0xf] %vm3297, %v3276
  %3312 = vst.msk [vmem:[#allocation3 + $0x38] sm:$0xf] %vm3297, %v3278
  %3313 = vst.msk [vmem:[#allocation3 + $0x3c] sm:$0xf] %vm3297, %v3280
  %v3314 = vld [vmem:[%s2726] sm:$0xff]
  %v3315 = vld [vmem:[%s2726 + $0x10] sm:$0xff]
  %v3316 = vld [vmem:[%s2726 + $0x20] sm:$0xff]
  %v3317 = vld [vmem:[%s2726 + $0x30] sm:$0xff]
  %v3318 = vld [vmem:[%s2726 + $0x40] sm:$0xff]
  %v3319 = vld [vmem:[%s2726 + $0x50] sm:$0xff]
  %v3320 = vld [vmem:[%s2726 + $0x60] sm:$0xff]
  %v3321 = vld [vmem:[%s2726 + $0x70] sm:$0xff]
  %v3322 = vld [vmem:[%s2726 + $0xa0] sm:$0xff]
  %v3323 = vld [vmem:[%s2726 + $0xb0] sm:$0xff]
  %v3324 = vld [vmem:[%s2726 + $0xc0] sm:$0xff]
  %v3325 = vld [vmem:[%s2726 + $0xd0] sm:$0xff]
  %v3326 = vld [vmem:[%s2726 + $0xe0] sm:$0xff]
  %v3327 = vld [vmem:[%s2726 + $0xf0] sm:$0xff]
  %v3328 = vld [vmem:[%s2726 + $0x100] sm:$0xff]
  %v3329 = vld [vmem:[%s2726 + $0x110] sm:$0xff]
  %v3330 = vpack.c.bf16 %v3314, %v3314
  %v3331 = vpack.c.bf16 %v3315, %v3315
  %v3332 = vpack.c.bf16 %v3316, %v3316
  %v3333 = vpack.c.bf16 %v3317, %v3317
  %v3334 = vpack.c.bf16 %v3318, %v3318
  %v3335 = vpack.c.bf16 %v3319, %v3319
  %v3336 = vpack.c.bf16 %v3320, %v3320
  %v3337 = vpack.c.bf16 %v3321, %v3321
  %v3338 = vpack.c.bf16 %v3322, %v3322
  %v3339 = vpack.c.bf16 %v3323, %v3323
  %v3340 = vpack.c.bf16 %v3324, %v3324
  %v3341 = vpack.c.bf16 %v3325, %v3325
  %v3342 = vpack.c.bf16 %v3326, %v3326
  %v3343 = vpack.c.bf16 %v3327, %v3327
  %v3344 = vpack.c.bf16 %v3328, %v3328
  %v3345 = vpack.c.bf16 %v3329, %v3329
  %3362 = vrot.lane.b32.xlu0 %v3330, 12
  %v3363 = vpop.permute.xlu0 %3362
  %3364 = vrot.lane.b32.xlu0 %v3331, 12
  %v3365 = vpop.permute.xlu0 %3364
  %3366 = vrot.lane.b32.xlu0 %v3332, 12
  %v3367 = vpop.permute.xlu0 %3366
  %3368 = vrot.lane.b32.xlu0 %v3333, 12
  %v3369 = vpop.permute.xlu0 %3368
  %3370 = vrot.lane.b32.xlu0 %v3334, 12
  %v3371 = vpop.permute.xlu0 %3370
  %3372 = vrot.lane.b32.xlu0 %v3335, 12
  %v3373 = vpop.permute.xlu0 %3372
  %3374 = vrot.lane.b32.xlu0 %v3336, 12
  %v3375 = vpop.permute.xlu0 %3374
  %3376 = vrot.lane.b32.xlu0 %v3337, 12
  %v3377 = vpop.permute.xlu0 %3376
  %3378 = vrot.lane.b32.xlu0 %v3338, 12
  %v3379 = vpop.permute.xlu0 %3378
  %3380 = vrot.lane.b32.xlu0 %v3339, 12
  %v3381 = vpop.permute.xlu0 %3380
  %3382 = vrot.lane.b32.xlu0 %v3340, 12
  %v3383 = vpop.permute.xlu0 %3382
  %3384 = vrot.lane.b32.xlu0 %v3341, 12
  %v3385 = vpop.permute.xlu0 %3384
  %3386 = vrot.lane.b32.xlu0 %v3342, 12
  %v3387 = vpop.permute.xlu0 %3386
  %3388 = vrot.lane.b32.xlu0 %v3343, 12
  %v3389 = vpop.permute.xlu0 %3388
  %3390 = vrot.lane.b32.xlu0 %v3344, 12
  %v3391 = vpop.permute.xlu0 %3390
  %3392 = vrot.lane.b32.xlu0 %v3345, 12
  %v3393 = vpop.permute.xlu0 %3392
  %vm3410 = vcmask 126048
  %3411 = vst.msk [vmem:[#allocation3] sm:$0xf] %vm3410, %v3363
  %3412 = vst.msk [vmem:[#allocation3 + $0x4] sm:$0xf] %vm3410, %v3365
  %3413 = vst.msk [vmem:[#allocation3 + $0x8] sm:$0xf] %vm3410, %v3367
  %3414 = vst.msk [vmem:[#allocation3 + $0xc] sm:$0xf] %vm3410, %v3369
  %3415 = vst.msk [vmem:[#allocation3 + $0x10] sm:$0xf] %vm3410, %v3371
  %3416 = vst.msk [vmem:[#allocation3 + $0x14] sm:$0xf] %vm3410, %v3373
  %3417 = vst.msk [vmem:[#allocation3 + $0x18] sm:$0xf] %vm3410, %v3375
  %3418 = vst.msk [vmem:[#allocation3 + $0x1c] sm:$0xf] %vm3410, %v3377
  %3419 = vst.msk [vmem:[#allocation3 + $0x20] sm:$0xf] %vm3410, %v3379
  %3420 = vst.msk [vmem:[#allocation3 + $0x24] sm:$0xf] %vm3410, %v3381
  %3421 = vst.msk [vmem:[#allocation3 + $0x28] sm:$0xf] %vm3410, %v3383
  %3422 = vst.msk [vmem:[#allocation3 + $0x2c] sm:$0xf] %vm3410, %v3385
  %3423 = vst.msk [vmem:[#allocation3 + $0x30] sm:$0xf] %vm3410, %v3387
  %3424 = vst.msk [vmem:[#allocation3 + $0x34] sm:$0xf] %vm3410, %v3389
  %3425 = vst.msk [vmem:[#allocation3 + $0x38] sm:$0xf] %vm3410, %v3391
  %3426 = vst.msk [vmem:[#allocation3 + $0x3c] sm:$0xf] %vm3410, %v3393
  %v3427 = vld [vmem:[%s2726 + $0x1] sm:$0xff]
  %v3428 = vld [vmem:[%s2726 + $0x11] sm:$0xff]
  %v3429 = vld [vmem:[%s2726 + $0x21] sm:$0xff]
  %v3430 = vld [vmem:[%s2726 + $0x31] sm:$0xff]
  %v3431 = vld [vmem:[%s2726 + $0x41] sm:$0xff]
  %v3432 = vld [vmem:[%s2726 + $0x51] sm:$0xff]
  %v3433 = vld [vmem:[%s2726 + $0x61] sm:$0xff]
  %v3434 = vld [vmem:[%s2726 + $0x71] sm:$0xff]
  %v3435 = vld [vmem:[%s2726 + $0xa1] sm:$0xff]
  %v3436 = vld [vmem:[%s2726 + $0xb1] sm:$0xff]
  %v3437 = vld [vmem:[%s2726 + $0xc1] sm:$0xff]
  %v3438 = vld [vmem:[%s2726 + $0xd1] sm:$0xff]
  %v3439 = vld [vmem:[%s2726 + $0xe1] sm:$0xff]
  %v3440 = vld [vmem:[%s2726 + $0xf1] sm:$0xff]
  %v3441 = vld [vmem:[%s2726 + $0x101] sm:$0xff]
  %v3442 = vld [vmem:[%s2726 + $0x111] sm:$0xff]
  %v3443 = vpack.c.bf16 %v3427, %v3427
  %v3444 = vpack.c.bf16 %v3428, %v3428
  %v3445 = vpack.c.bf16 %v3429, %v3429
  %v3446 = vpack.c.bf16 %v3430, %v3430
  %v3447 = vpack.c.bf16 %v3431, %v3431
  %v3448 = vpack.c.bf16 %v3432, %v3432
  %v3449 = vpack.c.bf16 %v3433, %v3433
  %v3450 = vpack.c.bf16 %v3434, %v3434
  %v3451 = vpack.c.bf16 %v3435, %v3435
  %v3452 = vpack.c.bf16 %v3436, %v3436
  %v3453 = vpack.c.bf16 %v3437, %v3437
  %v3454 = vpack.c.bf16 %v3438, %v3438
  %v3455 = vpack.c.bf16 %v3439, %v3439
  %v3456 = vpack.c.bf16 %v3440, %v3440
  %v3457 = vpack.c.bf16 %v3441, %v3441
  %v3458 = vpack.c.bf16 %v3442, %v3442
  %3475 = vrot.lane.b32.xlu0 %v3443, 16
  %v3476 = vpop.permute.xlu0 %3475
  %3477 = vrot.lane.b32.xlu0 %v3444, 16
  %v3478 = vpop.permute.xlu0 %3477
  %3479 = vrot.lane.b32.xlu0 %v3445, 16
  %v3480 = vpop.permute.xlu0 %3479
  %3481 = vrot.lane.b32.xlu0 %v3446, 16
  %v3482 = vpop.permute.xlu0 %3481
  %3483 = vrot.lane.b32.xlu0 %v3447, 16
  %v3484 = vpop.permute.xlu0 %3483
  %3485 = vrot.lane.b32.xlu0 %v3448, 16
  %v3486 = vpop.permute.xlu0 %3485
  %3487 = vrot.lane.b32.xlu0 %v3449, 16
  %v3488 = vpop.permute.xlu0 %3487
  %3489 = vrot.lane.b32.xlu0 %v3450, 16
  %v3490 = vpop.permute.xlu0 %3489
  %3491 = vrot.lane.b32.xlu0 %v3451, 16
  %v3492 = vpop.permute.xlu0 %3491
  %3493 = vrot.lane.b32.xlu0 %v3452, 16
  %v3494 = vpop.permute.xlu0 %3493
  %3495 = vrot.lane.b32.xlu0 %v3453, 16
  %v3496 = vpop.permute.xlu0 %3495
  %3497 = vrot.lane.b32.xlu0 %v3454, 16
  %v3498 = vpop.permute.xlu0 %3497
  %3499 = vrot.lane.b32.xlu0 %v3455, 16
  %v3500 = vpop.permute.xlu0 %3499
  %3501 = vrot.lane.b32.xlu0 %v3456, 16
  %v3502 = vpop.permute.xlu0 %3501
  %3503 = vrot.lane.b32.xlu0 %v3457, 16
  %v3504 = vpop.permute.xlu0 %3503
  %3505 = vrot.lane.b32.xlu0 %v3458, 16
  %v3506 = vpop.permute.xlu0 %3505
  %vm3523 = vcmask 158848
  %3524 = vst.msk [vmem:[#allocation3] sm:$0xf] %vm3523, %v3476
  %3525 = vst.msk [vmem:[#allocation3 + $0x4] sm:$0xf] %vm3523, %v3478
  %3526 = vst.msk [vmem:[#allocation3 + $0x8] sm:$0xf] %vm3523, %v3480
  %3527 = vst.msk [vmem:[#allocation3 + $0xc] sm:$0xf] %vm3523, %v3482
  %3528 = vst.msk [vmem:[#allocation3 + $0x10] sm:$0xf] %vm3523, %v3484
  %3529 = vst.msk [vmem:[#allocation3 + $0x14] sm:$0xf] %vm3523, %v3486
  %3530 = vst.msk [vmem:[#allocation3 + $0x18] sm:$0xf] %vm3523, %v3488
  %3531 = vst.msk [vmem:[#allocation3 + $0x1c] sm:$0xf] %vm3523, %v3490
  %3532 = vst.msk [vmem:[#allocation3 + $0x20] sm:$0xf] %vm3523, %v3492
  %3533 = vst.msk [vmem:[#allocation3 + $0x24] sm:$0xf] %vm3523, %v3494
  %3534 = vst.msk [vmem:[#allocation3 + $0x28] sm:$0xf] %vm3523, %v3496
  %3535 = vst.msk [vmem:[#allocation3 + $0x2c] sm:$0xf] %vm3523, %v3498
  %3536 = vst.msk [vmem:[#allocation3 + $0x30] sm:$0xf] %vm3523, %v3500
  %3537 = vst.msk [vmem:[#allocation3 + $0x34] sm:$0xf] %vm3523, %v3502
  %3538 = vst.msk [vmem:[#allocation3 + $0x38] sm:$0xf] %vm3523, %v3504
  %3539 = vst.msk [vmem:[#allocation3 + $0x3c] sm:$0xf] %vm3523, %v3506
  %v3540 = vld [vmem:[%s2726 + $0x2] sm:$0xff]
  %v3541 = vld [vmem:[%s2726 + $0x12] sm:$0xff]
  %v3542 = vld [vmem:[%s2726 + $0x22] sm:$0xff]
  %v3543 = vld [vmem:[%s2726 + $0x32] sm:$0xff]
  %v3544 = vld [vmem:[%s2726 + $0x42] sm:$0xff]
  %v3545 = vld [vmem:[%s2726 + $0x52] sm:$0xff]
  %v3546 = vld [vmem:[%s2726 + $0x62] sm:$0xff]
  %v3547 = vld [vmem:[%s2726 + $0x72] sm:$0xff]
  %v3548 = vld [vmem:[%s2726 + $0xa2] sm:$0xff]
  %v3549 = vld [vmem:[%s2726 + $0xb2] sm:$0xff]
  %v3550 = vld [vmem:[%s2726 + $0xc2] sm:$0xff]
  %v3551 = vld [vmem:[%s2726 + $0xd2] sm:$0xff]
  %v3552 = vld [vmem:[%s2726 + $0xe2] sm:$0xff]
  %v3553 = vld [vmem:[%s2726 + $0xf2] sm:$0xff]
  %v3554 = vld [vmem:[%s2726 + $0x102] sm:$0xff]
  %v3555 = vld [vmem:[%s2726 + $0x112] sm:$0xff]
  %v3556 = vpack.c.bf16 %v3540, %v3540
  %v3557 = vpack.c.bf16 %v3541, %v3541
  %v3558 = vpack.c.bf16 %v3542, %v3542
  %v3559 = vpack.c.bf16 %v3543, %v3543
  %v3560 = vpack.c.bf16 %v3544, %v3544
  %v3561 = vpack.c.bf16 %v3545, %v3545
  %v3562 = vpack.c.bf16 %v3546, %v3546
  %v3563 = vpack.c.bf16 %v3547, %v3547
  %v3564 = vpack.c.bf16 %v3548, %v3548
  %v3565 = vpack.c.bf16 %v3549, %v3549
  %v3566 = vpack.c.bf16 %v3550, %v3550
  %v3567 = vpack.c.bf16 %v3551, %v3551
  %v3568 = vpack.c.bf16 %v3552, %v3552
  %v3569 = vpack.c.bf16 %v3553, %v3553
  %v3570 = vpack.c.bf16 %v3554, %v3554
  %v3571 = vpack.c.bf16 %v3555, %v3555
  %3588 = vrot.lane.b32.xlu0 %v3556, 20
  %v3589 = vpop.permute.xlu0 %3588
  %3590 = vrot.lane.b32.xlu0 %v3557, 20
  %v3591 = vpop.permute.xlu0 %3590
  %3592 = vrot.lane.b32.xlu0 %v3558, 20
  %v3593 = vpop.permute.xlu0 %3592
  %3594 = vrot.lane.b32.xlu0 %v3559, 20
  %v3595 = vpop.permute.xlu0 %3594
  %3596 = vrot.lane.b32.xlu0 %v3560, 20
  %v3597 = vpop.permute.xlu0 %3596
  %3598 = vrot.lane.b32.xlu0 %v3561, 20
  %v3599 = vpop.permute.xlu0 %3598
  %3600 = vrot.lane.b32.xlu0 %v3562, 20
  %v3601 = vpop.permute.xlu0 %3600
  %3602 = vrot.lane.b32.xlu0 %v3563, 20
  %v3603 = vpop.permute.xlu0 %3602
  %3604 = vrot.lane.b32.xlu0 %v3564, 20
  %v3605 = vpop.permute.xlu0 %3604
  %3606 = vrot.lane.b32.xlu0 %v3565, 20
  %v3607 = vpop.permute.xlu0 %3606
  %3608 = vrot.lane.b32.xlu0 %v3566, 20
  %v3609 = vpop.permute.xlu0 %3608
  %3610 = vrot.lane.b32.xlu0 %v3567, 20
  %v3611 = vpop.permute.xlu0 %3610
  %3612 = vrot.lane.b32.xlu0 %v3568, 20
  %v3613 = vpop.permute.xlu0 %3612
  %3614 = vrot.lane.b32.xlu0 %v3569, 20
  %v3615 = vpop.permute.xlu0 %3614
  %3616 = vrot.lane.b32.xlu0 %v3570, 20
  %v3617 = vpop.permute.xlu0 %3616
  %3618 = vrot.lane.b32.xlu0 %v3571, 20
  %v3619 = vpop.permute.xlu0 %3618
  %vm3636 = vcmask 191648
  %3637 = vst.msk [vmem:[#allocation3] sm:$0xf] %vm3636, %v3589
  %3638 = vst.msk [vmem:[#allocation3 + $0x4] sm:$0xf] %vm3636, %v3591
  %3639 = vst.msk [vmem:[#allocation3 + $0x8] sm:$0xf] %vm3636, %v3593
  %3640 = vst.msk [vmem:[#allocation3 + $0xc] sm:$0xf] %vm3636, %v3595
  %3641 = vst.msk [vmem:[#allocation3 + $0x10] sm:$0xf] %vm3636, %v3597
  %3642 = vst.msk [vmem:[#allocation3 + $0x14] sm:$0xf] %vm3636, %v3599
  %3643 = vst.msk [vmem:[#allocation3 + $0x18] sm:$0xf] %vm3636, %v3601
  %3644 = vst.msk [vmem:[#allocation3 + $0x1c] sm:$0xf] %vm3636, %v3603
  %3645 = vst.msk [vmem:[#allocation3 + $0x20] sm:$0xf] %vm3636, %v3605
  %3646 = vst.msk [vmem:[#allocation3 + $0x24] sm:$0xf] %vm3636, %v3607
  %3647 = vst.msk [vmem:[#allocation3 + $0x28] sm:$0xf] %vm3636, %v3609
  %3648 = vst.msk [vmem:[#allocation3 + $0x2c] sm:$0xf] %vm3636, %v3611
  %3649 = vst.msk [vmem:[#allocation3 + $0x30] sm:$0xf] %vm3636, %v3613
  %3650 = vst.msk [vmem:[#allocation3 + $0x34] sm:$0xf] %vm3636, %v3615
  %3651 = vst.msk [vmem:[#allocation3 + $0x38] sm:$0xf] %vm3636, %v3617
  %3652 = vst.msk [vmem:[#allocation3 + $0x3c] sm:$0xf] %vm3636, %v3619
  %s3653 = scalar_lea.vmem [#allocation2], 32
  %v3654 = vld [vmem:[%s3653] sm:$0xff]
  %v3655 = vld [vmem:[%s3653 + $0x10] sm:$0xff]
  %v3656 = vld [vmem:[%s3653 + $0x20] sm:$0xff]
  %v3657 = vld [vmem:[%s3653 + $0x30] sm:$0xff]
  %v3658 = vld [vmem:[%s3653 + $0x40] sm:$0xff]
  %v3659 = vld [vmem:[%s3653 + $0x50] sm:$0xff]
  %v3660 = vld [vmem:[%s3653 + $0x60] sm:$0xff]
  %v3661 = vld [vmem:[%s3653 + $0x70] sm:$0xff]
  %v3662 = vld [vmem:[%s3653 + $0xa0] sm:$0xff]
  %v3663 = vld [vmem:[%s3653 + $0xb0] sm:$0xff]
  %v3664 = vld [vmem:[%s3653 + $0xc0] sm:$0xff]
  %v3665 = vld [vmem:[%s3653 + $0xd0] sm:$0xff]
  %v3666 = vld [vmem:[%s3653 + $0xe0] sm:$0xff]
  %v3667 = vld [vmem:[%s3653 + $0xf0] sm:$0xff]
  %v3668 = vld [vmem:[%s3653 + $0x100] sm:$0xff]
  %v3669 = vld [vmem:[%s3653 + $0x110] sm:$0xff]
  %v3670 = vpack.c.bf16 %v3654, %v3654
  %v3671 = vpack.c.bf16 %v3655, %v3655
  %v3672 = vpack.c.bf16 %v3656, %v3656
  %v3673 = vpack.c.bf16 %v3657, %v3657
  %v3674 = vpack.c.bf16 %v3658, %v3658
  %v3675 = vpack.c.bf16 %v3659, %v3659
  %v3676 = vpack.c.bf16 %v3660, %v3660
  %v3677 = vpack.c.bf16 %v3661, %v3661
  %v3678 = vpack.c.bf16 %v3662, %v3662
  %v3679 = vpack.c.bf16 %v3663, %v3663
  %v3680 = vpack.c.bf16 %v3664, %v3664
  %v3681 = vpack.c.bf16 %v3665, %v3665
  %v3682 = vpack.c.bf16 %v3666, %v3666
  %v3683 = vpack.c.bf16 %v3667, %v3667
  %v3684 = vpack.c.bf16 %v3668, %v3668
  %v3685 = vpack.c.bf16 %v3669, %v3669
  %3702 = vrot.lane.b32.xlu0 %v3670, 24
  %v3703 = vpop.permute.xlu0 %3702
  %3704 = vrot.lane.b32.xlu0 %v3671, 24
  %v3705 = vpop.permute.xlu0 %3704
  %3706 = vrot.lane.b32.xlu0 %v3672, 24
  %v3707 = vpop.permute.xlu0 %3706
  %3708 = vrot.lane.b32.xlu0 %v3673, 24
  %v3709 = vpop.permute.xlu0 %3708
  %3710 = vrot.lane.b32.xlu0 %v3674, 24
  %v3711 = vpop.permute.xlu0 %3710
  %3712 = vrot.lane.b32.xlu0 %v3675, 24
  %v3713 = vpop.permute.xlu0 %3712
  %3714 = vrot.lane.b32.xlu0 %v3676, 24
  %v3715 = vpop.permute.xlu0 %3714
  %3716 = vrot.lane.b32.xlu0 %v3677, 24
  %v3717 = vpop.permute.xlu0 %3716
  %3718 = vrot.lane.b32.xlu0 %v3678, 24
  %v3719 = vpop.permute.xlu0 %3718
  %3720 = vrot.lane.b32.xlu0 %v3679, 24
  %v3721 = vpop.permute.xlu0 %3720
  %3722 = vrot.lane.b32.xlu0 %v3680, 24
  %v3723 = vpop.permute.xlu0 %3722
  %3724 = vrot.lane.b32.xlu0 %v3681, 24
  %v3725 = vpop.permute.xlu0 %3724
  %3726 = vrot.lane.b32.xlu0 %v3682, 24
  %v3727 = vpop.permute.xlu0 %3726
  %3728 = vrot.lane.b32.xlu0 %v3683, 24
  %v3729 = vpop.permute.xlu0 %3728
  %3730 = vrot.lane.b32.xlu0 %v3684, 24
  %v3731 = vpop.permute.xlu0 %3730
  %3732 = vrot.lane.b32.xlu0 %v3685, 24
  %v3733 = vpop.permute.xlu0 %3732
  %vm3750 = vcmask 224448
  %3751 = vst.msk [vmem:[#allocation3] sm:$0xf] %vm3750, %v3703
  %3752 = vst.msk [vmem:[#allocation3 + $0x4] sm:$0xf] %vm3750, %v3705
  %3753 = vst.msk [vmem:[#allocation3 + $0x8] sm:$0xf] %vm3750, %v3707
  %3754 = vst.msk [vmem:[#allocation3 + $0xc] sm:$0xf] %vm3750, %v3709
  %3755 = vst.msk [vmem:[#allocation3 + $0x10] sm:$0xf] %vm3750, %v3711
  %3756 = vst.msk [vmem:[#allocation3 + $0x14] sm:$0xf] %vm3750, %v3713
  %3757 = vst.msk [vmem:[#allocation3 + $0x18] sm:$0xf] %vm3750, %v3715
  %3758 = vst.msk [vmem:[#allocation3 + $0x1c] sm:$0xf] %vm3750, %v3717
  %3759 = vst.msk [vmem:[#allocation3 + $0x20] sm:$0xf] %vm3750, %v3719
  %3760 = vst.msk [vmem:[#allocation3 + $0x24] sm:$0xf] %vm3750, %v3721
  %3761 = vst.msk [vmem:[#allocation3 + $0x28] sm:$0xf] %vm3750, %v3723
  %3762 = vst.msk [vmem:[#allocation3 + $0x2c] sm:$0xf] %vm3750, %v3725
  %3763 = vst.msk [vmem:[#allocation3 + $0x30] sm:$0xf] %vm3750, %v3727
  %3764 = vst.msk [vmem:[#allocation3 + $0x34] sm:$0xf] %vm3750, %v3729
  %3765 = vst.msk [vmem:[#allocation3 + $0x38] sm:$0xf] %vm3750, %v3731
  %3766 = vst.msk [vmem:[#allocation3 + $0x3c] sm:$0xf] %vm3750, %v3733
  %v3767 = vld [vmem:[%s3653 + $0x1] sm:$0xff]
  %v3768 = vld [vmem:[%s3653 + $0x11] sm:$0xff]
  %v3769 = vld [vmem:[%s3653 + $0x21] sm:$0xff]
  %v3770 = vld [vmem:[%s3653 + $0x31] sm:$0xff]
  %v3771 = vld [vmem:[%s3653 + $0x41] sm:$0xff]
  %v3772 = vld [vmem:[%s3653 + $0x51] sm:$0xff]
  %v3773 = vld [vmem:[%s3653 + $0x61] sm:$0xff]
  %v3774 = vld [vmem:[%s3653 + $0x71] sm:$0xff]
  %v3775 = vld [vmem:[%s3653 + $0xa1] sm:$0xff]
  %v3776 = vld [vmem:[%s3653 + $0xb1] sm:$0xff]
  %v3777 = vld [vmem:[%s3653 + $0xc1] sm:$0xff]
  %v3778 = vld [vmem:[%s3653 + $0xd1] sm:$0xff]
  %v3779 = vld [vmem:[%s3653 + $0xe1] sm:$0xff]
  %v3780 = vld [vmem:[%s3653 + $0xf1] sm:$0xff]
  %v3781 = vld [vmem:[%s3653 + $0x101] sm:$0xff]
  %v3782 = vld [vmem:[%s3653 + $0x111] sm:$0xff]
  %v3783 = vpack.c.bf16 %v3767, %v3767
  %v3784 = vpack.c.bf16 %v3768, %v3768
  %v3785 = vpack.c.bf16 %v3769, %v3769
  %v3786 = vpack.c.bf16 %v3770, %v3770
  %v3787 = vpack.c.bf16 %v3771, %v3771
  %v3788 = vpack.c.bf16 %v3772, %v3772
  %v3789 = vpack.c.bf16 %v3773, %v3773
  %v3790 = vpack.c.bf16 %v3774, %v3774
  %v3791 = vpack.c.bf16 %v3775, %v3775
  %v3792 = vpack.c.bf16 %v3776, %v3776
  %v3793 = vpack.c.bf16 %v3777, %v3777
  %v3794 = vpack.c.bf16 %v3778, %v3778
  %v3795 = vpack.c.bf16 %v3779, %v3779
  %v3796 = vpack.c.bf16 %v3780, %v3780
  %v3797 = vpack.c.bf16 %v3781, %v3781
  %v3798 = vpack.c.bf16 %v3782, %v3782
  %3815 = vrot.lane.b32.xlu0 %v3783, 28
  %v3816 = vpop.permute.xlu0 %3815
  %3817 = vrot.lane.b32.xlu0 %v3784, 28
  %v3818 = vpop.permute.xlu0 %3817
  %3819 = vrot.lane.b32.xlu0 %v3785, 28
  %v3820 = vpop.permute.xlu0 %3819
  %3821 = vrot.lane.b32.xlu0 %v3786, 28
  %v3822 = vpop.permute.xlu0 %3821
  %3823 = vrot.lane.b32.xlu0 %v3787, 28
  %v3824 = vpop.permute.xlu0 %3823
  %3825 = vrot.lane.b32.xlu0 %v3788, 28
  %v3826 = vpop.permute.xlu0 %3825
  %3827 = vrot.lane.b32.xlu0 %v3789, 28
  %v3828 = vpop.permute.xlu0 %3827
  %3829 = vrot.lane.b32.xlu0 %v3790, 28
  %v3830 = vpop.permute.xlu0 %3829
  %3831 = vrot.lane.b32.xlu0 %v3791, 28
  %v3832 = vpop.permute.xlu0 %3831
  %3833 = vrot.lane.b32.xlu0 %v3792, 28
  %v3834 = vpop.permute.xlu0 %3833
  %3835 = vrot.lane.b32.xlu0 %v3793, 28
  %v3836 = vpop.permute.xlu0 %3835
  %3837 = vrot.lane.b32.xlu0 %v3794, 28
  %v3838 = vpop.permute.xlu0 %3837
  %3839 = vrot.lane.b32.xlu0 %v3795, 28
  %v3840 = vpop.permute.xlu0 %3839
  %3841 = vrot.lane.b32.xlu0 %v3796, 28
  %v3842 = vpop.permute.xlu0 %3841
  %3843 = vrot.lane.b32.xlu0 %v3797, 28
  %v3844 = vpop.permute.xlu0 %3843
  %3845 = vrot.lane.b32.xlu0 %v3798, 28
  %v3846 = vpop.permute.xlu0 %3845
  %vm3863 = vcmask 257248
  %3864 = vst.msk [vmem:[#allocation3] sm:$0xf] %vm3863, %v3816
  %3865 = vst.msk [vmem:[#allocation3 + $0x4] sm:$0xf] %vm3863, %v3818
  %3866 = vst.msk [vmem:[#allocation3 + $0x8] sm:$0xf] %vm3863, %v3820
  %3867 = vst.msk [vmem:[#allocation3 + $0xc] sm:$0xf] %vm3863, %v3822
  %3868 = vst.msk [vmem:[#allocation3 + $0x10] sm:$0xf] %vm3863, %v3824
  %3869 = vst.msk [vmem:[#allocation3 + $0x14] sm:$0xf] %vm3863, %v3826
  %3870 = vst.msk [vmem:[#allocation3 + $0x18] sm:$0xf] %vm3863, %v3828
  %3871 = vst.msk [vmem:[#allocation3 + $0x1c] sm:$0xf] %vm3863, %v3830
  %3872 = vst.msk [vmem:[#allocation3 + $0x20] sm:$0xf] %vm3863, %v3832
  %3873 = vst.msk [vmem:[#allocation3 + $0x24] sm:$0xf] %vm3863, %v3834
  %3874 = vst.msk [vmem:[#allocation3 + $0x28] sm:$0xf] %vm3863, %v3836
  %3875 = vst.msk [vmem:[#allocation3 + $0x2c] sm:$0xf] %vm3863, %v3838
  %3876 = vst.msk [vmem:[#allocation3 + $0x30] sm:$0xf] %vm3863, %v3840
  %3877 = vst.msk [vmem:[#allocation3 + $0x34] sm:$0xf] %vm3863, %v3842
  %3878 = vst.msk [vmem:[#allocation3 + $0x38] sm:$0xf] %vm3863, %v3844
  %3879 = vst.msk [vmem:[#allocation3 + $0x3c] sm:$0xf] %vm3863, %v3846
  %v3880 = vld [vmem:[%s3653 + $0x2] sm:$0xff]
  %v3881 = vld [vmem:[%s3653 + $0x12] sm:$0xff]
  %v3882 = vld [vmem:[%s3653 + $0x22] sm:$0xff]
  %v3883 = vld [vmem:[%s3653 + $0x32] sm:$0xff]
  %v3884 = vld [vmem:[%s3653 + $0x42] sm:$0xff]
  %v3885 = vld [vmem:[%s3653 + $0x52] sm:$0xff]
  %v3886 = vld [vmem:[%s3653 + $0x62] sm:$0xff]
  %v3887 = vld [vmem:[%s3653 + $0x72] sm:$0xff]
  %v3888 = vld [vmem:[%s3653 + $0xa2] sm:$0xff]
  %v3889 = vld [vmem:[%s3653 + $0xb2] sm:$0xff]
  %v3890 = vld [vmem:[%s3653 + $0xc2] sm:$0xff]
  %v3891 = vld [vmem:[%s3653 + $0xd2] sm:$0xff]
  %v3892 = vld [vmem:[%s3653 + $0xe2] sm:$0xff]
  %v3893 = vld [vmem:[%s3653 + $0xf2] sm:$0xff]
  %v3894 = vld [vmem:[%s3653 + $0x102] sm:$0xff]
  %v3895 = vld [vmem:[%s3653 + $0x112] sm:$0xff]
  %v3896 = vpack.c.bf16 %v3880, %v3880
  %v3897 = vpack.c.bf16 %v3881, %v3881
  %v3898 = vpack.c.bf16 %v3882, %v3882
  %v3899 = vpack.c.bf16 %v3883, %v3883
  %v3900 = vpack.c.bf16 %v3884, %v3884
  %v3901 = vpack.c.bf16 %v3885, %v3885
  %v3902 = vpack.c.bf16 %v3886, %v3886
  %v3903 = vpack.c.bf16 %v3887, %v3887
  %v3904 = vpack.c.bf16 %v3888, %v3888
  %v3905 = vpack.c.bf16 %v3889, %v3889
  %v3906 = vpack.c.bf16 %v3890, %v3890
  %v3907 = vpack.c.bf16 %v3891, %v3891
  %v3908 = vpack.c.bf16 %v3892, %v3892
  %v3909 = vpack.c.bf16 %v3893, %v3893
  %v3910 = vpack.c.bf16 %v3894, %v3894
  %v3911 = vpack.c.bf16 %v3895, %v3895
  %3928 = vrot.lane.b32.xlu0 %v3896, 32
  %v3929 = vpop.permute.xlu0 %3928
  %3930 = vrot.lane.b32.xlu0 %v3897, 32
  %v3931 = vpop.permute.xlu0 %3930
  %3932 = vrot.lane.b32.xlu0 %v3898, 32
  %v3933 = vpop.permute.xlu0 %3932
  %3934 = vrot.lane.b32.xlu0 %v3899, 32
  %v3935 = vpop.permute.xlu0 %3934
  %3936 = vrot.lane.b32.xlu0 %v3900, 32
  %v3937 = vpop.permute.xlu0 %3936
  %3938 = vrot.lane.b32.xlu0 %v3901, 32
  %v3939 = vpop.permute.xlu0 %3938
  %3940 = vrot.lane.b32.xlu0 %v3902, 32
  %v3941 = vpop.permute.xlu0 %3940
  %3942 = vrot.lane.b32.xlu0 %v3903, 32
  %v3943 = vpop.permute.xlu0 %3942
  %3944 = vrot.lane.b32.xlu0 %v3904, 32
  %v3945 = vpop.permute.xlu0 %3944
  %3946 = vrot.lane.b32.xlu0 %v3905, 32
  %v3947 = vpop.permute.xlu0 %3946
  %3948 = vrot.lane.b32.xlu0 %v3906, 32
  %v3949 = vpop.permute.xlu0 %3948
  %3950 = vrot.lane.b32.xlu0 %v3907, 32
  %v3951 = vpop.permute.xlu0 %3950
  %3952 = vrot.lane.b32.xlu0 %v3908, 32
  %v3953 = vpop.permute.xlu0 %3952
  %3954 = vrot.lane.b32.xlu0 %v3909, 32
  %v3955 = vpop.permute.xlu0 %3954
  %3956 = vrot.lane.b32.xlu0 %v3910, 32
  %v3957 = vpop.permute.xlu0 %3956
  %3958 = vrot.lane.b32.xlu0 %v3911, 32
  %v3959 = vpop.permute.xlu0 %3958
  %vm3976 = vcmask 290048
  %3977 = vst.msk [vmem:[#allocation3] sm:$0xf] %vm3976, %v3929
  %3978 = vst.msk [vmem:[#allocation3 + $0x4] sm:$0xf] %vm3976, %v3931
  %3979 = vst.msk [vmem:[#allocation3 + $0x8] sm:$0xf] %vm3976, %v3933
  %3980 = vst.msk [vmem:[#allocation3 + $0xc] sm:$0xf] %vm3976, %v3935
  %3981 = vst.msk [vmem:[#allocation3 + $0x10] sm:$0xf] %vm3976, %v3937
  %3982 = vst.msk [vmem:[#allocation3 + $0x14] sm:$0xf] %vm3976, %v3939
  %3983 = vst.msk [vmem:[#allocation3 + $0x18] sm:$0xf] %vm3976, %v3941
  %3984 = vst.msk [vmem:[#allocation3 + $0x1c] sm:$0xf] %vm3976, %v3943
  %3985 = vst.msk [vmem:[#allocation3 + $0x20] sm:$0xf] %vm3976, %v3945
  %3986 = vst.msk [vmem:[#allocation3 + $0x24] sm:$0xf] %vm3976, %v3947
  %3987 = vst.msk [vmem:[#allocation3 + $0x28] sm:$0xf] %vm3976, %v3949
  %3988 = vst.msk [vmem:[#allocation3 + $0x2c] sm:$0xf] %vm3976, %v3951
  %3989 = vst.msk [vmem:[#allocation3 + $0x30] sm:$0xf] %vm3976, %v3953
  %3990 = vst.msk [vmem:[#allocation3 + $0x34] sm:$0xf] %vm3976, %v3955
  %3991 = vst.msk [vmem:[#allocation3 + $0x38] sm:$0xf] %vm3976, %v3957
  %3992 = vst.msk [vmem:[#allocation3 + $0x3c] sm:$0xf] %vm3976, %v3959
  %v3993 = vld [vmem:[#allocation3] sm:$0xf]
  %v3994 = vld [vmem:[#allocation3 + $0x4] sm:$0xf]
  %v3995 = vld [vmem:[#allocation3 + $0x8] sm:$0xf]
  %v3996 = vld [vmem:[#allocation3 + $0xc] sm:$0xf]
  %v3997 = vld [vmem:[#allocation3 + $0x10] sm:$0xf]
  %v3998 = vld [vmem:[#allocation3 + $0x14] sm:$0xf]
  %v3999 = vld [vmem:[#allocation3 + $0x18] sm:$0xf]
  %v4000 = vld [vmem:[#allocation3 + $0x1c] sm:$0xf]
  %v4001 = vld [vmem:[#allocation3 + $0x20] sm:$0xf]
  %v4002 = vld [vmem:[#allocation3 + $0x24] sm:$0xf]
  %v4003 = vld [vmem:[#allocation3 + $0x28] sm:$0xf]
  %v4004 = vld [vmem:[#allocation3 + $0x2c] sm:$0xf]
  %v4005 = vld [vmem:[#allocation3 + $0x30] sm:$0xf]
  %v4006 = vld [vmem:[#allocation3 + $0x34] sm:$0xf]
  %v4007 = vld [vmem:[#allocation3 + $0x38] sm:$0xf]
  %v4008 = vld [vmem:[#allocation3 + $0x3c] sm:$0xf]
  %v4009 = vld [vmem:[%s1] sm:$0xf]
  %v4010 = vld [vmem:[%s1 + $0x4] sm:$0xf]
  %v4011 = vld [vmem:[%s1 + $0x8] sm:$0xf]
  %v4012 = vld [vmem:[%s1 + $0xc] sm:$0xf]
  %v4013 = vld [vmem:[%s1 + $0x10] sm:$0x3]
  %v4030 = vunpack.c.l.b16 %v3993
  %v4031 = vunpack.c.l.b16 %v3994
  %v4032 = vunpack.c.l.b16 %v3995
  %v4033 = vunpack.c.l.b16 %v3996
  %v4034 = vunpack.c.l.b16 %v3997
  %v4035 = vunpack.c.l.b16 %v3998
  %v4036 = vunpack.c.l.b16 %v3999
  %v4037 = vunpack.c.l.b16 %v4000
  %v4038 = vunpack.c.l.b16 %v4001
  %v4039 = vunpack.c.l.b16 %v4002
  %v4040 = vunpack.c.l.b16 %v4003
  %v4041 = vunpack.c.l.b16 %v4004
  %v4042 = vunpack.c.l.b16 %v4005
  %v4043 = vunpack.c.l.b16 %v4006
  %v4044 = vunpack.c.l.b16 %v4007
  %v4045 = vunpack.c.l.b16 %v4008
  %v4046 = vpack.c.b16 %v4031, %v4030
  %v4047 = vpack.c.b16 %v4033, %v4032
  %v4048 = vpack.c.b16 %v4035, %v4034
  %v4049 = vpack.c.b16 %v4037, %v4036
  %v4050 = vpack.c.b16 %v4039, %v4038
  %v4051 = vpack.c.b16 %v4041, %v4040
  %v4052 = vpack.c.b16 %v4043, %v4042
  %v4053 = vpack.c.b16 %v4045, %v4044
  %v4059 = vunpack.c.l.b16 %v4009
  %v4060 = vunpack.c.l.b16 %v4010
  %v4061 = vunpack.c.l.b16 %v4011
  %v4062 = vunpack.c.l.b16 %v4012
  %v4063 = vunpack.c.l.b16 %v4013
  %v4064 = vpack.c.b16 %v4060, %v4059
  %v4065 = vpack.c.b16 %v4062, %v4061
  %v4066 = vpack.c.b16 %v4063, %v4063
  %vm4069 = vcmask 293888
  %v4071 = vsel %vm4069, %v4046, 0
  %v4074 = vsel %vm4069, %v4047, 0
  %v4077 = vsel %vm4069, %v4048, 0
  %v4080 = vsel %vm4069, %v4049, 0
  %v4083 = vsel %vm4069, %v4050, 0
  %v4086 = vsel %vm4069, %v4051, 0
  %v4089 = vsel %vm4069, %v4052, 0
  %v4092 = vsel %vm4069, %v4053, 0
  %vm4094 = vcmask 1041408
  %v4096 = vsel %vm4094, %v4066, 0
  %4098 = vmatpush.bf16.msra.mxu0 0
  %4099 = vmatpush.bf16.msra.mxu0 0
  %4100 = vmatpush.bf16.msra.mxu0 0
  %4101 = vmatpush.bf16.msra.mxu0 0
  %4102 = vmatpush.bf16.msra.mxu0 0
  %4103 = vmatpush.bf16.msra.mxu0 %v4096
  %4104 = vmatpush.bf16.msra.mxu0 %v4065
  %4105 = vmatpush.bf16.msra.mxu0 %v4064
  %4106 = vmatmul.bf16.gmra.mxu0 %v4071
  %v4107 = vpop.f32.mrf.mxu0
  %v4108 = vadd.f32 0.0, %v4107
  %v4109 = vpop.f32.mrf.mxu0
  %v4110 = vadd.f32 0.0, %v4109
  %4111 = vmatmul.bf16.gmra.mxu0 %v4074
  %v4112 = vpop.f32.mrf.mxu0
  %v4113 = vadd.f32 0.0, %v4112
  %v4114 = vpop.f32.mrf.mxu0
  %v4115 = vadd.f32 0.0, %v4114
  %4116 = vmatmul.bf16.gmra.mxu0 %v4077
  %v4117 = vpop.f32.mrf.mxu0
  %v4118 = vadd.f32 0.0, %v4117
  %v4119 = vpop.f32.mrf.mxu0
  %v4120 = vadd.f32 0.0, %v4119
  %4121 = vmatmul.bf16.gmra.mxu0 %v4080
  %v4122 = vpop.f32.mrf.mxu0
  %v4123 = vadd.f32 0.0, %v4122
  %v4124 = vpop.f32.mrf.mxu0
  %v4125 = vadd.f32 0.0, %v4124
  %4126 = vmatmul.bf16.gmra.mxu0 %v4083
  %v4127 = vpop.f32.mrf.mxu0
  %v4128 = vadd.f32 0.0, %v4127
  %v4129 = vpop.f32.mrf.mxu0
  %v4130 = vadd.f32 0.0, %v4129
  %4131 = vmatmul.bf16.gmra.mxu0 %v4086
  %v4132 = vpop.f32.mrf.mxu0
  %v4133 = vadd.f32 0.0, %v4132
  %v4134 = vpop.f32.mrf.mxu0
  %v4135 = vadd.f32 0.0, %v4134
  %4136 = vmatmul.bf16.gmra.mxu0 %v4089
  %v4137 = vpop.f32.mrf.mxu0
  %v4138 = vadd.f32 0.0, %v4137
  %v4139 = vpop.f32.mrf.mxu0
  %v4140 = vadd.f32 0.0, %v4139
  %4141 = vmatmul.bf16.gmra.mxu0 %v4092
  %v4142 = vpop.f32.mrf.mxu0
  %v4143 = vadd.f32 0.0, %v4142
  %v4144 = vpop.f32.mrf.mxu0
  %v4145 = vadd.f32 0.0, %v4144
  %4146 = vdwg.mxu0
  %vm4147 = vcmask 64512
  %v4148 = vsel %vm4147, %v4108, 0.0
  %v4149 = vsel %vm4147, %v4110, 0.0
  %v4150 = vadd.f32 %v4148, %v4149
  %v4151 = vsel %vm4147, %v4113, 0.0
  %v4152 = vadd.f32 %v4150, %v4151
  %v4153 = vsel %vm4147, %v4115, 0.0
  %v4154 = vadd.f32 %v4152, %v4153
  %v4155 = vsel %vm4147, %v4118, 0.0
  %v4156 = vadd.f32 %v4154, %v4155
  %v4157 = vsel %vm4147, %v4120, 0.0
  %v4158 = vadd.f32 %v4156, %v4157
  %v4159 = vsel %vm4147, %v4123, 0.0
  %v4160 = vadd.f32 %v4158, %v4159
  %v4161 = vsel %vm4147, %v4125, 0.0
  %v4162 = vadd.f32 %v4160, %v4161
  %v4163 = vsel %vm4147, %v4128, 0.0
  %v4164 = vadd.f32 %v4162, %v4163
  %v4165 = vsel %vm4147, %v4130, 0.0
  %v4166 = vadd.f32 %v4164, %v4165
  %v4167 = vsel %vm4147, %v4133, 0.0
  %v4168 = vadd.f32 %v4166, %v4167
  %v4169 = vsel %vm4147, %v4135, 0.0
  %v4170 = vadd.f32 %v4168, %v4169
  %v4171 = vsel %vm4147, %v4138, 0.0
  %v4172 = vadd.f32 %v4170, %v4171
  %v4173 = vsel %vm4147, %v4140, 0.0
  %v4174 = vadd.f32 %v4172, %v4173
  %v4175 = vsel %vm4147, %v4143, 0.0
  %v4176 = vadd.f32 %v4174, %v4175
  %v4177 = vsel %vm4147, %v4145, 0.0
  %v4178 = vadd.f32 %v4176, %v4177
  %v4179 = vrot.slane %v4178, 4
  %v4180 = vadd.f32 %v4178, %v4179
  %v4181 = vrot.slane %v4180, 2
  %v4182 = vadd.f32 %v4180, %v4181
  %v4183 = vrot.slane %v4182, 1
  %v4184 = vadd.f32 %v4182, %v4183
  %v4185 = vmul.f32 %v4184, 0.0078125
  %v4186 = vmul.f32 %v4108, %v4108
  %v4187 = vmul.f32 %v4110, %v4110
  %v4188 = vmul.f32 %v4113, %v4113
  %v4189 = vmul.f32 %v4115, %v4115
  %v4190 = vmul.f32 %v4118, %v4118
  %v4191 = vmul.f32 %v4120, %v4120
  %v4192 = vmul.f32 %v4123, %v4123
  %v4193 = vmul.f32 %v4125, %v4125
  %v4194 = vmul.f32 %v4128, %v4128
  %v4195 = vmul.f32 %v4130, %v4130
  %v4196 = vmul.f32 %v4133, %v4133
  %v4197 = vmul.f32 %v4135, %v4135
  %v4198 = vmul.f32 %v4138, %v4138
  %v4199 = vmul.f32 %v4140, %v4140
  %v4200 = vmul.f32 %v4143, %v4143
  %v4201 = vmul.f32 %v4145, %v4145
  %v4202 = vsel %vm4147, %v4186, 0.0
  %v4203 = vsel %vm4147, %v4187, 0.0
  %v4204 = vadd.f32 %v4202, %v4203
  %v4205 = vsel %vm4147, %v4188, 0.0
  %v4206 = vadd.f32 %v4204, %v4205
  %v4207 = vsel %vm4147, %v4189, 0.0
  %v4208 = vadd.f32 %v4206, %v4207
  %v4209 = vsel %vm4147, %v4190, 0.0
  %v4210 = vadd.f32 %v4208, %v4209
  %v4211 = vsel %vm4147, %v4191, 0.0
  %v4212 = vadd.f32 %v4210, %v4211
  %v4213 = vsel %vm4147, %v4192, 0.0
  %v4214 = vadd.f32 %v4212, %v4213
  %v4215 = vsel %vm4147, %v4193, 0.0
  %v4216 = vadd.f32 %v4214, %v4215
  %v4217 = vsel %vm4147, %v4194, 0.0
  %v4218 = vadd.f32 %v4216, %v4217
  %v4219 = vsel %vm4147, %v4195, 0.0
  %v4220 = vadd.f32 %v4218, %v4219
  %v4221 = vsel %vm4147, %v4196, 0.0
  %v4222 = vadd.f32 %v4220, %v4221
  %v4223 = vsel %vm4147, %v4197, 0.0
  %v4224 = vadd.f32 %v4222, %v4223
  %v4225 = vsel %vm4147, %v4198, 0.0
  %v4226 = vadd.f32 %v4224, %v4225
  %v4227 = vsel %vm4147, %v4199, 0.0
  %v4228 = vadd.f32 %v4226, %v4227
  %v4229 = vsel %vm4147, %v4200, 0.0
  %v4230 = vadd.f32 %v4228, %v4229
  %v4231 = vsel %vm4147, %v4201, 0.0
  %v4232 = vadd.f32 %v4230, %v4231
  %v4233 = vrot.slane %v4232, 4
  %v4234 = vadd.f32 %v4232, %v4233
  %v4235 = vrot.slane %v4234, 2
  %v4236 = vadd.f32 %v4234, %v4235
  %v4237 = vrot.slane %v4236, 1
  %v4238 = vadd.f32 %v4236, %v4237
  %v4239 = vmul.f32 %v4238, 0.0078125
  %v4240 = vmul.f32 %v4185, %v4185
  %v4241 = vsub.f32 %v4239, %v4240
  %v4242 = vmax.f32 %v4241, 0.0
  %v4243 = vld [vmem:[%s3] sm:$0x1]
  %v4244 = vadd.f32 %v4242, 1e-05
  %v4245 = vrsqrt.pop %v4244
  %v4246 = vmul.f32 %v4245, %v4244
  %v4247 = vmul.f32 %v4246, %v4245
  %v4248 = vmul.f32 0.5, %v4247
  %v4249 = vsub.f32 1.5, %v4248
  %v4250 = vmul.f32 %v4245, %v4249
  %vm4251 = vweird.f32 %v4244
  %vm4252 = vweird.f32 %v4245
  %vm4253 = vmor %vm4251, %vm4252
  %v4254 = vsel %vm4253, %v4245, %v4250
  %v4255 = vmul.f32 %v4243, %v4254
  %v4256 = vld [vmem:[%s4] sm:$0x1]
  %v4257 = vmul.f32 %v4185, %v4255
  %v4258 = vsub.f32 %v4256, %v4257
  %v4260 = vperm.slane %v4255, 0
  %v4262 = vmul.f32 %v4108, %v4260
  %v4263 = vmul.f32 %v4110, %v4260
  %v4264 = vmul.f32 %v4113, %v4260
  %v4265 = vmul.f32 %v4115, %v4260
  %v4266 = vmul.f32 %v4118, %v4260
  %v4267 = vmul.f32 %v4120, %v4260
  %v4268 = vmul.f32 %v4123, %v4260
  %v4269 = vmul.f32 %v4125, %v4260
  %v4270 = vmul.f32 %v4128, %v4260
  %v4271 = vmul.f32 %v4130, %v4260
  %v4272 = vmul.f32 %v4133, %v4260
  %v4273 = vmul.f32 %v4135, %v4260
  %v4274 = vmul.f32 %v4138, %v4260
  %v4275 = vmul.f32 %v4140, %v4260
  %v4276 = vmul.f32 %v4143, %v4260
  %v4277 = vmul.f32 %v4145, %v4260
  %v4279 = vperm.slane %v4258, 0
  %v4281 = vadd.f32 %v4262, %v4279
  %v4282 = vadd.f32 %v4263, %v4279
  %v4283 = vadd.f32 %v4264, %v4279
  %v4284 = vadd.f32 %v4265, %v4279
  %v4285 = vadd.f32 %v4266, %v4279
  %v4286 = vadd.f32 %v4267, %v4279
  %v4287 = vadd.f32 %v4268, %v4279
  %v4288 = vadd.f32 %v4269, %v4279
  %v4289 = vadd.f32 %v4270, %v4279
  %v4290 = vadd.f32 %v4271, %v4279
  %v4291 = vadd.f32 %v4272, %v4279
  %v4292 = vadd.f32 %v4273, %v4279
  %v4293 = vadd.f32 %v4274, %v4279
  %v4294 = vadd.f32 %v4275, %v4279
  %v4295 = vadd.f32 %v4276, %v4279
  %v4296 = vadd.f32 %v4277, %v4279
  %v4297 = vmax.f32 %v4281, 0.0
  %v4298 = vmax.f32 %v4282, 0.0
  %v4299 = vmax.f32 %v4283, 0.0
  %v4300 = vmax.f32 %v4284, 0.0
  %v4301 = vmax.f32 %v4285, 0.0
  %v4302 = vmax.f32 %v4286, 0.0
  %v4303 = vmax.f32 %v4287, 0.0
  %v4304 = vmax.f32 %v4288, 0.0
  %v4305 = vmax.f32 %v4289, 0.0
  %v4306 = vmax.f32 %v4290, 0.0
  %v4307 = vmax.f32 %v4291, 0.0
  %v4308 = vmax.f32 %v4292, 0.0
  %v4309 = vmax.f32 %v4293, 0.0
  %v4310 = vmax.f32 %v4294, 0.0
  %v4311 = vmax.f32 %v4295, 0.0
  %v4312 = vmax.f32 %v4296, 0.0
  %4313 = vst.msk [vmem:[#allocation4] sm:$0xff] %vm4147, 0.0
  %vm4314 = vcmask 58368
  %4315 = vst.msk [vmem:[#allocation4 + $0x8] sm:$0x3] %vm4314, 0.0
  %4316 = vst.msk [vmem:[#allocation4 + $0xa0] sm:$0xff] %vm4147, 0.0
  %4317 = vst.msk [vmem:[#allocation4 + $0xa8] sm:$0x3] %vm4314, 0.0
  %s4318 = scalar_lea.vmem [#allocation4], 144
  %4319 = vst.msk [vmem:[%s4318] sm:$0xff] %vm4147, 0.0
  %4320 = vst.msk [vmem:[%s4318 + $0x8] sm:$0x3] %vm4314, 0.0
  %4321 = vst.msk [vmem:[%s4318 + $0xa0] sm:$0xff] %vm4147, 0.0
  %4322 = vst.msk [vmem:[%s4318 + $0xa8] sm:$0x3] %vm4314, 0.0
  %s4323 = scalar_lea.vmem [#allocation4], 16
  %vm4324 = vcmask 57344
  %4325 = vst.msk [vmem:[%s4323] sm:$0x1] %vm4324, 0.0
  %4326 = vst.msk [vmem:[%s4323 + $0x10] sm:$0x1] %vm4324, 0.0
  %4327 = vst.msk [vmem:[%s4323 + $0x20] sm:$0x1] %vm4324, 0.0
  %4328 = vst.msk [vmem:[%s4323 + $0x30] sm:$0x1] %vm4324, 0.0
  %4329 = vst.msk [vmem:[%s4323 + $0x40] sm:$0x1] %vm4324, 0.0
  %4330 = vst.msk [vmem:[%s4323 + $0x50] sm:$0x1] %vm4324, 0.0
  %4331 = vst.msk [vmem:[%s4323 + $0x60] sm:$0x1] %vm4324, 0.0
  %4332 = vst.msk [vmem:[%s4323 + $0x70] sm:$0x1] %vm4324, 0.0
  %4333 = vst.msk [vmem:[%s4323 + $0xa0] sm:$0x1] %vm4324, 0.0
  %4334 = vst.msk [vmem:[%s4323 + $0xb0] sm:$0x1] %vm4324, 0.0
  %4335 = vst.msk [vmem:[%s4323 + $0xc0] sm:$0x1] %vm4324, 0.0
  %4336 = vst.msk [vmem:[%s4323 + $0xd0] sm:$0x1] %vm4324, 0.0
  %4337 = vst.msk [vmem:[%s4323 + $0xe0] sm:$0x1] %vm4324, 0.0
  %4338 = vst.msk [vmem:[%s4323 + $0xf0] sm:$0x1] %vm4324, 0.0
  %4339 = vst.msk [vmem:[%s4323 + $0x100] sm:$0x1] %vm4324, 0.0
  %4340 = vst.msk [vmem:[%s4323 + $0x110] sm:$0x1] %vm4324, 0.0
  %4341 = vst.msk [vmem:[%s4323 + $0x9] sm:$0x1] %vm4324, 0.0
  %4342 = vst.msk [vmem:[%s4323 + $0x19] sm:$0x1] %vm4324, 0.0
  %4343 = vst.msk [vmem:[%s4323 + $0x29] sm:$0x1] %vm4324, 0.0
  %4344 = vst.msk [vmem:[%s4323 + $0x39] sm:$0x1] %vm4324, 0.0
  %4345 = vst.msk [vmem:[%s4323 + $0x49] sm:$0x1] %vm4324, 0.0
  %4346 = vst.msk [vmem:[%s4323 + $0x59] sm:$0x1] %vm4324, 0.0
  %4347 = vst.msk [vmem:[%s4323 + $0x69] sm:$0x1] %vm4324, 0.0
  %4348 = vst.msk [vmem:[%s4323 + $0x79] sm:$0x1] %vm4324, 0.0
  %4349 = vst.msk [vmem:[%s4323 + $0xa9] sm:$0x1] %vm4324, 0.0
  %4350 = vst.msk [vmem:[%s4323 + $0xb9] sm:$0x1] %vm4324, 0.0
  %4351 = vst.msk [vmem:[%s4323 + $0xc9] sm:$0x1] %vm4324, 0.0
  %4352 = vst.msk [vmem:[%s4323 + $0xd9] sm:$0x1] %vm4324, 0.0
  %4353 = vst.msk [vmem:[%s4323 + $0xe9] sm:$0x1] %vm4324, 0.0
  %4354 = vst.msk [vmem:[%s4323 + $0xf9] sm:$0x1] %vm4324, 0.0
  %4355 = vst.msk [vmem:[%s4323 + $0x109] sm:$0x1] %vm4324, 0.0
  %4356 = vst.msk [vmem:[%s4323 + $0x119] sm:$0x1] %vm4324, 0.0
  %4357 = vst.msk [vmem:[%s4323 + $0x1] sm:$0xff] %vm4147, %v4297
  %4358 = vst.msk [vmem:[%s4323 + $0x11] sm:$0xff] %vm4147, %v4298
  %4359 = vst.msk [vmem:[%s4323 + $0x21] sm:$0xff] %vm4147, %v4299
  %4360 = vst.msk [vmem:[%s4323 + $0x31] sm:$0xff] %vm4147, %v4300
  %4361 = vst.msk [vmem:[%s4323 + $0x41] sm:$0xff] %vm4147, %v4301
  %4362 = vst.msk [vmem:[%s4323 + $0x51] sm:$0xff] %vm4147, %v4302
  %4363 = vst.msk [vmem:[%s4323 + $0x61] sm:$0xff] %vm4147, %v4303
  %4364 = vst.msk [vmem:[%s4323 + $0x71] sm:$0xff] %vm4147, %v4304
  %4365 = vst.msk [vmem:[%s4323 + $0xa1] sm:$0xff] %vm4147, %v4305
  %4366 = vst.msk [vmem:[%s4323 + $0xb1] sm:$0xff] %vm4147, %v4306
  %4367 = vst.msk [vmem:[%s4323 + $0xc1] sm:$0xff] %vm4147, %v4307
  %4368 = vst.msk [vmem:[%s4323 + $0xd1] sm:$0xff] %vm4147, %v4308
  %4369 = vst.msk [vmem:[%s4323 + $0xe1] sm:$0xff] %vm4147, %v4309
  %4370 = vst.msk [vmem:[%s4323 + $0xf1] sm:$0xff] %vm4147, %v4310
  %4371 = vst.msk [vmem:[%s4323 + $0x101] sm:$0xff] %vm4147, %v4311
  %4372 = vst.msk [vmem:[%s4323 + $0x111] sm:$0xff] %vm4147, %v4312
  %v4373 = vld [vmem:[#allocation4] sm:$0xff]
  %v4374 = vld [vmem:[#allocation4 + $0x10] sm:$0xff]
  %v4375 = vld [vmem:[#allocation4 + $0x20] sm:$0xff]
  %v4376 = vld [vmem:[#allocation4 + $0x30] sm:$0xff]
  %v4377 = vld [vmem:[#allocation4 + $0x40] sm:$0xff]
  %v4378 = vld [vmem:[#allocation4 + $0x50] sm:$0xff]
  %v4379 = vld [vmem:[#allocation4 + $0x60] sm:$0xff]
  %v4380 = vld [vmem:[#allocation4 + $0x70] sm:$0xff]
  %v4381 = vld [vmem:[#allocation4 + $0xa0] sm:$0xff]
  %v4382 = vld [vmem:[#allocation4 + $0xb0] sm:$0xff]
  %v4383 = vld [vmem:[#allocation4 + $0xc0] sm:$0xff]
  %v4384 = vld [vmem:[#allocation4 + $0xd0] sm:$0xff]
  %v4385 = vld [vmem:[#allocation4 + $0xe0] sm:$0xff]
  %v4386 = vld [vmem:[#allocation4 + $0xf0] sm:$0xff]
  %v4387 = vld [vmem:[#allocation4 + $0x100] sm:$0xff]
  %v4388 = vld [vmem:[#allocation4 + $0x110] sm:$0xff]
  %v4389 = vpack.c.bf16 %v4373, %v4373
  %v4390 = vpack.c.bf16 %v4374, %v4374
  %v4391 = vpack.c.bf16 %v4375, %v4375
  %v4392 = vpack.c.bf16 %v4376, %v4376
  %v4393 = vpack.c.bf16 %v4377, %v4377
  %v4394 = vpack.c.bf16 %v4378, %v4378
  %v4395 = vpack.c.bf16 %v4379, %v4379
  %v4396 = vpack.c.bf16 %v4380, %v4380
  %v4397 = vpack.c.bf16 %v4381, %v4381
  %v4398 = vpack.c.bf16 %v4382, %v4382
  %v4399 = vpack.c.bf16 %v4383, %v4383
  %v4400 = vpack.c.bf16 %v4384, %v4384
  %v4401 = vpack.c.bf16 %v4385, %v4385
  %v4402 = vpack.c.bf16 %v4386, %v4386
  %v4403 = vpack.c.bf16 %v4387, %v4387
  %v4404 = vpack.c.bf16 %v4388, %v4388
  %vm4405 = vcmask 60416
  %4406 = vst.msk [vmem:[#allocation5] sm:$0xf] %vm4405, %v4389
  %4407 = vst.msk [vmem:[#allocation5 + $0x4] sm:$0xf] %vm4405, %v4390
  %4408 = vst.msk [vmem:[#allocation5 + $0x8] sm:$0xf] %vm4405, %v4391
  %4409 = vst.msk [vmem:[#allocation5 + $0xc] sm:$0xf] %vm4405, %v4392
  %4410 = vst.msk [vmem:[#allocation5 + $0x10] sm:$0xf] %vm4405, %v4393
  %4411 = vst.msk [vmem:[#allocation5 + $0x14] sm:$0xf] %vm4405, %v4394
  %4412 = vst.msk [vmem:[#allocation5 + $0x18] sm:$0xf] %vm4405, %v4395
  %4413 = vst.msk [vmem:[#allocation5 + $0x1c] sm:$0xf] %vm4405, %v4396
  %4414 = vst.msk [vmem:[#allocation5 + $0x20] sm:$0xf] %vm4405, %v4397
  %4415 = vst.msk [vmem:[#allocation5 + $0x24] sm:$0xf] %vm4405, %v4398
  %4416 = vst.msk [vmem:[#allocation5 + $0x28] sm:$0xf] %vm4405, %v4399
  %4417 = vst.msk [vmem:[#allocation5 + $0x2c] sm:$0xf] %vm4405, %v4400
  %4418 = vst.msk [vmem:[#allocation5 + $0x30] sm:$0xf] %vm4405, %v4401
  %4419 = vst.msk [vmem:[#allocation5 + $0x34] sm:$0xf] %vm4405, %v4402
  %4420 = vst.msk [vmem:[#allocation5 + $0x38] sm:$0xf] %vm4405, %v4403
  %4421 = vst.msk [vmem:[#allocation5 + $0x3c] sm:$0xf] %vm4405, %v4404
  %v4422 = vld [vmem:[#allocation4 + $0x1] sm:$0xff]
  %v4423 = vld [vmem:[#allocation4 + $0x11] sm:$0xff]
  %v4424 = vld [vmem:[#allocation4 + $0x21] sm:$0xff]
  %v4425 = vld [vmem:[#allocation4 + $0x31] sm:$0xff]
  %v4426 = vld [vmem:[#allocation4 + $0x41] sm:$0xff]
  %v4427 = vld [vmem:[#allocation4 + $0x51] sm:$0xff]
  %v4428 = vld [vmem:[#allocation4 + $0x61] sm:$0xff]
  %v4429 = vld [vmem:[#allocation4 + $0x71] sm:$0xff]
  %v4430 = vld [vmem:[#allocation4 + $0xa1] sm:$0xff]
  %v4431 = vld [vmem:[#allocation4 + $0xb1] sm:$0xff]
  %v4432 = vld [vmem:[#allocation4 + $0xc1] sm:$0xff]
  %v4433 = vld [vmem:[#allocation4 + $0xd1] sm:$0xff]
  %v4434 = vld [vmem:[#allocation4 + $0xe1] sm:$0xff]
  %v4435 = vld [vmem:[#allocation4 + $0xf1] sm:$0xff]
  %v4436 = vld [vmem:[#allocation4 + $0x101] sm:$0xff]
  %v4437 = vld [vmem:[#allocation4 + $0x111] sm:$0xff]
  %v4438 = vpack.c.bf16 %v4422, %v4422
  %v4439 = vpack.c.bf16 %v4423, %v4423
  %v4440 = vpack.c.bf16 %v4424, %v4424
  %v4441 = vpack.c.bf16 %v4425, %v4425
  %v4442 = vpack.c.bf16 %v4426, %v4426
  %v4443 = vpack.c.bf16 %v4427, %v4427
  %v4444 = vpack.c.bf16 %v4428, %v4428
  %v4445 = vpack.c.bf16 %v4429, %v4429
  %v4446 = vpack.c.bf16 %v4430, %v4430
  %v4447 = vpack.c.bf16 %v4431, %v4431
  %v4448 = vpack.c.bf16 %v4432, %v4432
  %v4449 = vpack.c.bf16 %v4433, %v4433
  %v4450 = vpack.c.bf16 %v4434, %v4434
  %v4451 = vpack.c.bf16 %v4435, %v4435
  %v4452 = vpack.c.bf16 %v4436, %v4436
  %v4453 = vpack.c.bf16 %v4437, %v4437
  %4470 = vrot.lane.b32.xlu0 %v4438, 8
  %v4471 = vpop.permute.xlu0 %4470
  %4472 = vrot.lane.b32.xlu0 %v4439, 8
  %v4473 = vpop.permute.xlu0 %4472
  %4474 = vrot.lane.b32.xlu0 %v4440, 8
  %v4475 = vpop.permute.xlu0 %4474
  %4476 = vrot.lane.b32.xlu0 %v4441, 8
  %v4477 = vpop.permute.xlu0 %4476
  %4478 = vrot.lane.b32.xlu0 %v4442, 8
  %v4479 = vpop.permute.xlu0 %4478
  %4480 = vrot.lane.b32.xlu0 %v4443, 8
  %v4481 = vpop.permute.xlu0 %4480
  %4482 = vrot.lane.b32.xlu0 %v4444, 8
  %v4483 = vpop.permute.xlu0 %4482
  %4484 = vrot.lane.b32.xlu0 %v4445, 8
  %v4485 = vpop.permute.xlu0 %4484
  %4486 = vrot.lane.b32.xlu0 %v4446, 8
  %v4487 = vpop.permute.xlu0 %4486
  %4488 = vrot.lane.b32.xlu0 %v4447, 8
  %v4489 = vpop.permute.xlu0 %4488
  %4490 = vrot.lane.b32.xlu0 %v4448, 8
  %v4491 = vpop.permute.xlu0 %4490
  %4492 = vrot.lane.b32.xlu0 %v4449, 8
  %v4493 = vpop.permute.xlu0 %4492
  %4494 = vrot.lane.b32.xlu0 %v4450, 8
  %v4495 = vpop.permute.xlu0 %4494
  %4496 = vrot.lane.b32.xlu0 %v4451, 8
  %v4497 = vpop.permute.xlu0 %4496
  %4498 = vrot.lane.b32.xlu0 %v4452, 8
  %v4499 = vpop.permute.xlu0 %4498
  %4500 = vrot.lane.b32.xlu0 %v4453, 8
  %v4501 = vpop.permute.xlu0 %4500
  %vm4518 = vcmask 126016
  %4519 = vst.msk [vmem:[#allocation5] sm:$0xf] %vm4518, %v4471
  %4520 = vst.msk [vmem:[#allocation5 + $0x4] sm:$0xf] %vm4518, %v4473
  %4521 = vst.msk [vmem:[#allocation5 + $0x8] sm:$0xf] %vm4518, %v4475
  %4522 = vst.msk [vmem:[#allocation5 + $0xc] sm:$0xf] %vm4518, %v4477
  %4523 = vst.msk [vmem:[#allocation5 + $0x10] sm:$0xf] %vm4518, %v4479
  %4524 = vst.msk [vmem:[#allocation5 + $0x14] sm:$0xf] %vm4518, %v4481
  %4525 = vst.msk [vmem:[#allocation5 + $0x18] sm:$0xf] %vm4518, %v4483
  %4526 = vst.msk [vmem:[#allocation5 + $0x1c] sm:$0xf] %vm4518, %v4485
  %4527 = vst.msk [vmem:[#allocation5 + $0x20] sm:$0xf] %vm4518, %v4487
  %4528 = vst.msk [vmem:[#allocation5 + $0x24] sm:$0xf] %vm4518, %v4489
  %4529 = vst.msk [vmem:[#allocation5 + $0x28] sm:$0xf] %vm4518, %v4491
  %4530 = vst.msk [vmem:[#allocation5 + $0x2c] sm:$0xf] %vm4518, %v4493
  %4531 = vst.msk [vmem:[#allocation5 + $0x30] sm:$0xf] %vm4518, %v4495
  %4532 = vst.msk [vmem:[#allocation5 + $0x34] sm:$0xf] %vm4518, %v4497
  %4533 = vst.msk [vmem:[#allocation5 + $0x38] sm:$0xf] %vm4518, %v4499
  %4534 = vst.msk [vmem:[#allocation5 + $0x3c] sm:$0xf] %vm4518, %v4501
  %v4535 = vld [vmem:[#allocation4 + $0x2] sm:$0xff]
  %v4536 = vld [vmem:[#allocation4 + $0x12] sm:$0xff]
  %v4537 = vld [vmem:[#allocation4 + $0x22] sm:$0xff]
  %v4538 = vld [vmem:[#allocation4 + $0x32] sm:$0xff]
  %v4539 = vld [vmem:[#allocation4 + $0x42] sm:$0xff]
  %v4540 = vld [vmem:[#allocation4 + $0x52] sm:$0xff]
  %v4541 = vld [vmem:[#allocation4 + $0x62] sm:$0xff]
  %v4542 = vld [vmem:[#allocation4 + $0x72] sm:$0xff]
  %v4543 = vld [vmem:[#allocation4 + $0xa2] sm:$0xff]
  %v4544 = vld [vmem:[#allocation4 + $0xb2] sm:$0xff]
  %v4545 = vld [vmem:[#allocation4 + $0xc2] sm:$0xff]
  %v4546 = vld [vmem:[#allocation4 + $0xd2] sm:$0xff]
  %v4547 = vld [vmem:[#allocation4 + $0xe2] sm:$0xff]
  %v4548 = vld [vmem:[#allocation4 + $0xf2] sm:$0xff]
  %v4549 = vld [vmem:[#allocation4 + $0x102] sm:$0xff]
  %v4550 = vld [vmem:[#allocation4 + $0x112] sm:$0xff]
  %v4551 = vpack.c.bf16 %v4535, %v4535
  %v4552 = vpack.c.bf16 %v4536, %v4536
  %v4553 = vpack.c.bf16 %v4537, %v4537
  %v4554 = vpack.c.bf16 %v4538, %v4538
  %v4555 = vpack.c.bf16 %v4539, %v4539
  %v4556 = vpack.c.bf16 %v4540, %v4540
  %v4557 = vpack.c.bf16 %v4541, %v4541
  %v4558 = vpack.c.bf16 %v4542, %v4542
  %v4559 = vpack.c.bf16 %v4543, %v4543
  %v4560 = vpack.c.bf16 %v4544, %v4544
  %v4561 = vpack.c.bf16 %v4545, %v4545
  %v4562 = vpack.c.bf16 %v4546, %v4546
  %v4563 = vpack.c.bf16 %v4547, %v4547
  %v4564 = vpack.c.bf16 %v4548, %v4548
  %v4565 = vpack.c.bf16 %v4549, %v4549
  %v4566 = vpack.c.bf16 %v4550, %v4550
  %4583 = vrot.lane.b32.xlu0 %v4551, 16
  %v4584 = vpop.permute.xlu0 %4583
  %4585 = vrot.lane.b32.xlu0 %v4552, 16
  %v4586 = vpop.permute.xlu0 %4585
  %4587 = vrot.lane.b32.xlu0 %v4553, 16
  %v4588 = vpop.permute.xlu0 %4587
  %4589 = vrot.lane.b32.xlu0 %v4554, 16
  %v4590 = vpop.permute.xlu0 %4589
  %4591 = vrot.lane.b32.xlu0 %v4555, 16
  %v4592 = vpop.permute.xlu0 %4591
  %4593 = vrot.lane.b32.xlu0 %v4556, 16
  %v4594 = vpop.permute.xlu0 %4593
  %4595 = vrot.lane.b32.xlu0 %v4557, 16
  %v4596 = vpop.permute.xlu0 %4595
  %4597 = vrot.lane.b32.xlu0 %v4558, 16
  %v4598 = vpop.permute.xlu0 %4597
  %4599 = vrot.lane.b32.xlu0 %v4559, 16
  %v4600 = vpop.permute.xlu0 %4599
  %4601 = vrot.lane.b32.xlu0 %v4560, 16
  %v4602 = vpop.permute.xlu0 %4601
  %4603 = vrot.lane.b32.xlu0 %v4561, 16
  %v4604 = vpop.permute.xlu0 %4603
  %4605 = vrot.lane.b32.xlu0 %v4562, 16
  %v4606 = vpop.permute.xlu0 %4605
  %4607 = vrot.lane.b32.xlu0 %v4563, 16
  %v4608 = vpop.permute.xlu0 %4607
  %4609 = vrot.lane.b32.xlu0 %v4564, 16
  %v4610 = vpop.permute.xlu0 %4609
  %4611 = vrot.lane.b32.xlu0 %v4565, 16
  %v4612 = vpop.permute.xlu0 %4611
  %4613 = vrot.lane.b32.xlu0 %v4566, 16
  %v4614 = vpop.permute.xlu0 %4613
  %vm4631 = vcmask 191616
  %4632 = vst.msk [vmem:[#allocation5] sm:$0xf] %vm4631, %v4584
  %4633 = vst.msk [vmem:[#allocation5 + $0x4] sm:$0xf] %vm4631, %v4586
  %4634 = vst.msk [vmem:[#allocation5 + $0x8] sm:$0xf] %vm4631, %v4588
  %4635 = vst.msk [vmem:[#allocation5 + $0xc] sm:$0xf] %vm4631, %v4590
  %4636 = vst.msk [vmem:[#allocation5 + $0x10] sm:$0xf] %vm4631, %v4592
  %4637 = vst.msk [vmem:[#allocation5 + $0x14] sm:$0xf] %vm4631, %v4594
  %4638 = vst.msk [vmem:[#allocation5 + $0x18] sm:$0xf] %vm4631, %v4596
  %4639 = vst.msk [vmem:[#allocation5 + $0x1c] sm:$0xf] %vm4631, %v4598
  %4640 = vst.msk [vmem:[#allocation5 + $0x20] sm:$0xf] %vm4631, %v4600
  %4641 = vst.msk [vmem:[#allocation5 + $0x24] sm:$0xf] %vm4631, %v4602
  %4642 = vst.msk [vmem:[#allocation5 + $0x28] sm:$0xf] %vm4631, %v4604
  %4643 = vst.msk [vmem:[#allocation5 + $0x2c] sm:$0xf] %vm4631, %v4606
  %4644 = vst.msk [vmem:[#allocation5 + $0x30] sm:$0xf] %vm4631, %v4608
  %4645 = vst.msk [vmem:[#allocation5 + $0x34] sm:$0xf] %vm4631, %v4610
  %4646 = vst.msk [vmem:[#allocation5 + $0x38] sm:$0xf] %vm4631, %v4612
  %4647 = vst.msk [vmem:[#allocation5 + $0x3c] sm:$0xf] %vm4631, %v4614
  %v4648 = vld [vmem:[%s4323] sm:$0xff]
  %v4649 = vld [vmem:[%s4323 + $0x10] sm:$0xff]
  %v4650 = vld [vmem:[%s4323 + $0x20] sm:$0xff]
  %v4651 = vld [vmem:[%s4323 + $0x30] sm:$0xff]
  %v4652 = vld [vmem:[%s4323 + $0x40] sm:$0xff]
  %v4653 = vld [vmem:[%s4323 + $0x50] sm:$0xff]
  %v4654 = vld [vmem:[%s4323 + $0x60] sm:$0xff]
  %v4655 = vld [vmem:[%s4323 + $0x70] sm:$0xff]
  %v4656 = vld [vmem:[%s4323 + $0xa0] sm:$0xff]
  %v4657 = vld [vmem:[%s4323 + $0xb0] sm:$0xff]
  %v4658 = vld [vmem:[%s4323 + $0xc0] sm:$0xff]
  %v4659 = vld [vmem:[%s4323 + $0xd0] sm:$0xff]
  %v4660 = vld [vmem:[%s4323 + $0xe0] sm:$0xff]
  %v4661 = vld [vmem:[%s4323 + $0xf0] sm:$0xff]
  %v4662 = vld [vmem:[%s4323 + $0x100] sm:$0xff]
  %v4663 = vld [vmem:[%s4323 + $0x110] sm:$0xff]
  %v4664 = vpack.c.bf16 %v4648, %v4648
  %v4665 = vpack.c.bf16 %v4649, %v4649
  %v4666 = vpack.c.bf16 %v4650, %v4650
  %v4667 = vpack.c.bf16 %v4651, %v4651
  %v4668 = vpack.c.bf16 %v4652, %v4652
  %v4669 = vpack.c.bf16 %v4653, %v4653
  %v4670 = vpack.c.bf16 %v4654, %v4654
  %v4671 = vpack.c.bf16 %v4655, %v4655
  %v4672 = vpack.c.bf16 %v4656, %v4656
  %v4673 = vpack.c.bf16 %v4657, %v4657
  %v4674 = vpack.c.bf16 %v4658, %v4658
  %v4675 = vpack.c.bf16 %v4659, %v4659
  %v4676 = vpack.c.bf16 %v4660, %v4660
  %v4677 = vpack.c.bf16 %v4661, %v4661
  %v4678 = vpack.c.bf16 %v4662, %v4662
  %v4679 = vpack.c.bf16 %v4663, %v4663
  %4696 = vrot.lane.b32.xlu0 %v4664, 24
  %v4697 = vpop.permute.xlu0 %4696
  %4698 = vrot.lane.b32.xlu0 %v4665, 24
  %v4699 = vpop.permute.xlu0 %4698
  %4700 = vrot.lane.b32.xlu0 %v4666, 24
  %v4701 = vpop.permute.xlu0 %4700
  %4702 = vrot.lane.b32.xlu0 %v4667, 24
  %v4703 = vpop.permute.xlu0 %4702
  %4704 = vrot.lane.b32.xlu0 %v4668, 24
  %v4705 = vpop.permute.xlu0 %4704
  %4706 = vrot.lane.b32.xlu0 %v4669, 24
  %v4707 = vpop.permute.xlu0 %4706
  %4708 = vrot.lane.b32.xlu0 %v4670, 24
  %v4709 = vpop.permute.xlu0 %4708
  %4710 = vrot.lane.b32.xlu0 %v4671, 24
  %v4711 = vpop.permute.xlu0 %4710
  %4712 = vrot.lane.b32.xlu0 %v4672, 24
  %v4713 = vpop.permute.xlu0 %4712
  %4714 = vrot.lane.b32.xlu0 %v4673, 24
  %v4715 = vpop.permute.xlu0 %4714
  %4716 = vrot.lane.b32.xlu0 %v4674, 24
  %v4717 = vpop.permute.xlu0 %4716
  %4718 = vrot.lane.b32.xlu0 %v4675, 24
  %v4719 = vpop.permute.xlu0 %4718
  %4720 = vrot.lane.b32.xlu0 %v4676, 24
  %v4721 = vpop.permute.xlu0 %4720
  %4722 = vrot.lane.b32.xlu0 %v4677, 24
  %v4723 = vpop.permute.xlu0 %4722
  %4724 = vrot.lane.b32.xlu0 %v4678, 24
  %v4725 = vpop.permute.xlu0 %4724
  %4726 = vrot.lane.b32.xlu0 %v4679, 24
  %v4727 = vpop.permute.xlu0 %4726
  %vm4744 = vcmask 257216
  %4745 = vst.msk [vmem:[#allocation5] sm:$0xf] %vm4744, %v4697
  %4746 = vst.msk [vmem:[#allocation5 + $0x4] sm:$0xf] %vm4744, %v4699
  %4747 = vst.msk [vmem:[#allocation5 + $0x8] sm:$0xf] %vm4744, %v4701
  %4748 = vst.msk [vmem:[#allocation5 + $0xc] sm:$0xf] %vm4744, %v4703
  %4749 = vst.msk [vmem:[#allocation5 + $0x10] sm:$0xf] %vm4744, %v4705
  %4750 = vst.msk [vmem:[#allocation5 + $0x14] sm:$0xf] %vm4744, %v4707
  %4751 = vst.msk [vmem:[#allocation5 + $0x18] sm:$0xf] %vm4744, %v4709
  %4752 = vst.msk [vmem:[#allocation5 + $0x1c] sm:$0xf] %vm4744, %v4711
  %4753 = vst.msk [vmem:[#allocation5 + $0x20] sm:$0xf] %vm4744, %v4713
  %4754 = vst.msk [vmem:[#allocation5 + $0x24] sm:$0xf] %vm4744, %v4715
  %4755 = vst.msk [vmem:[#allocation5 + $0x28] sm:$0xf] %vm4744, %v4717
  %4756 = vst.msk [vmem:[#allocation5 + $0x2c] sm:$0xf] %vm4744, %v4719
  %4757 = vst.msk [vmem:[#allocation5 + $0x30] sm:$0xf] %vm4744, %v4721
  %4758 = vst.msk [vmem:[#allocation5 + $0x34] sm:$0xf] %vm4744, %v4723
  %4759 = vst.msk [vmem:[#allocation5 + $0x38] sm:$0xf] %vm4744, %v4725
  %4760 = vst.msk [vmem:[#allocation5 + $0x3c] sm:$0xf] %vm4744, %v4727
  %v4761 = vld [vmem:[%s4323 + $0x1] sm:$0xff]
  %v4762 = vld [vmem:[%s4323 + $0x11] sm:$0xff]
  %v4763 = vld [vmem:[%s4323 + $0x21] sm:$0xff]
  %v4764 = vld [vmem:[%s4323 + $0x31] sm:$0xff]
  %v4765 = vld [vmem:[%s4323 + $0x41] sm:$0xff]
  %v4766 = vld [vmem:[%s4323 + $0x51] sm:$0xff]
  %v4767 = vld [vmem:[%s4323 + $0x61] sm:$0xff]
  %v4768 = vld [vmem:[%s4323 + $0x71] sm:$0xff]
  %v4769 = vld [vmem:[%s4323 + $0xa1] sm:$0xff]
  %v4770 = vld [vmem:[%s4323 + $0xb1] sm:$0xff]
  %v4771 = vld [vmem:[%s4323 + $0xc1] sm:$0xff]
  %v4772 = vld [vmem:[%s4323 + $0xd1] sm:$0xff]
  %v4773 = vld [vmem:[%s4323 + $0xe1] sm:$0xff]
  %v4774 = vld [vmem:[%s4323 + $0xf1] sm:$0xff]
  %v4775 = vld [vmem:[%s4323 + $0x101] sm:$0xff]
  %v4776 = vld [vmem:[%s4323 + $0x111] sm:$0xff]
  %v4777 = vpack.c.bf16 %v4761, %v4761
  %v4778 = vpack.c.bf16 %v4762, %v4762
  %v4779 = vpack.c.bf16 %v4763, %v4763
  %v4780 = vpack.c.bf16 %v4764, %v4764
  %v4781 = vpack.c.bf16 %v4765, %v4765
  %v4782 = vpack.c.bf16 %v4766, %v4766
  %v4783 = vpack.c.bf16 %v4767, %v4767
  %v4784 = vpack.c.bf16 %v4768, %v4768
  %v4785 = vpack.c.bf16 %v4769, %v4769
  %v4786 = vpack.c.bf16 %v4770, %v4770
  %v4787 = vpack.c.bf16 %v4771, %v4771
  %v4788 = vpack.c.bf16 %v4772, %v4772
  %v4789 = vpack.c.bf16 %v4773, %v4773
  %v4790 = vpack.c.bf16 %v4774, %v4774
  %v4791 = vpack.c.bf16 %v4775, %v4775
  %v4792 = vpack.c.bf16 %v4776, %v4776
  %4809 = vrot.lane.b32.xlu0 %v4777, 32
  %v4810 = vpop.permute.xlu0 %4809
  %4811 = vrot.lane.b32.xlu0 %v4778, 32
  %v4812 = vpop.permute.xlu0 %4811
  %4813 = vrot.lane.b32.xlu0 %v4779, 32
  %v4814 = vpop.permute.xlu0 %4813
  %4815 = vrot.lane.b32.xlu0 %v4780, 32
  %v4816 = vpop.permute.xlu0 %4815
  %4817 = vrot.lane.b32.xlu0 %v4781, 32
  %v4818 = vpop.permute.xlu0 %4817
  %4819 = vrot.lane.b32.xlu0 %v4782, 32
  %v4820 = vpop.permute.xlu0 %4819
  %4821 = vrot.lane.b32.xlu0 %v4783, 32
  %v4822 = vpop.permute.xlu0 %4821
  %4823 = vrot.lane.b32.xlu0 %v4784, 32
  %v4824 = vpop.permute.xlu0 %4823
  %4825 = vrot.lane.b32.xlu0 %v4785, 32
  %v4826 = vpop.permute.xlu0 %4825
  %4827 = vrot.lane.b32.xlu0 %v4786, 32
  %v4828 = vpop.permute.xlu0 %4827
  %4829 = vrot.lane.b32.xlu0 %v4787, 32
  %v4830 = vpop.permute.xlu0 %4829
  %4831 = vrot.lane.b32.xlu0 %v4788, 32
  %v4832 = vpop.permute.xlu0 %4831
  %4833 = vrot.lane.b32.xlu0 %v4789, 32
  %v4834 = vpop.permute.xlu0 %4833
  %4835 = vrot.lane.b32.xlu0 %v4790, 32
  %v4836 = vpop.permute.xlu0 %4835
  %4837 = vrot.lane.b32.xlu0 %v4791, 32
  %v4838 = vpop.permute.xlu0 %4837
  %4839 = vrot.lane.b32.xlu0 %v4792, 32
  %v4840 = vpop.permute.xlu0 %4839
  %vm4857 = vcmask 322816
  %4858 = vst.msk [vmem:[#allocation5] sm:$0xf] %vm4857, %v4810
  %4859 = vst.msk [vmem:[#allocation5 + $0x4] sm:$0xf] %vm4857, %v4812
  %4860 = vst.msk [vmem:[#allocation5 + $0x8] sm:$0xf] %vm4857, %v4814
  %4861 = vst.msk [vmem:[#allocation5 + $0xc] sm:$0xf] %vm4857, %v4816
  %4862 = vst.msk [vmem:[#allocation5 + $0x10] sm:$0xf] %vm4857, %v4818
  %4863 = vst.msk [vmem:[#allocation5 + $0x14] sm:$0xf] %vm4857, %v4820
  %4864 = vst.msk [vmem:[#allocation5 + $0x18] sm:$0xf] %vm4857, %v4822
  %4865 = vst.msk [vmem:[#allocation5 + $0x1c] sm:$0xf] %vm4857, %v4824
  %4866 = vst.msk [vmem:[#allocation5 + $0x20] sm:$0xf] %vm4857, %v4826
  %4867 = vst.msk [vmem:[#allocation5 + $0x24] sm:$0xf] %vm4857, %v4828
  %4868 = vst.msk [vmem:[#allocation5 + $0x28] sm:$0xf] %vm4857, %v4830
  %4869 = vst.msk [vmem:[#allocation5 + $0x2c] sm:$0xf] %vm4857, %v4832
  %4870 = vst.msk [vmem:[#allocation5 + $0x30] sm:$0xf] %vm4857, %v4834
  %4871 = vst.msk [vmem:[#allocation5 + $0x34] sm:$0xf] %vm4857, %v4836
  %4872 = vst.msk [vmem:[#allocation5 + $0x38] sm:$0xf] %vm4857, %v4838
  %4873 = vst.msk [vmem:[#allocation5 + $0x3c] sm:$0xf] %vm4857, %v4840
  %v4874 = vld [vmem:[%s4323 + $0x2] sm:$0xff]
  %v4875 = vld [vmem:[%s4323 + $0x12] sm:$0xff]
  %v4876 = vld [vmem:[%s4323 + $0x22] sm:$0xff]
  %v4877 = vld [vmem:[%s4323 + $0x32] sm:$0xff]
  %v4878 = vld [vmem:[%s4323 + $0x42] sm:$0xff]
  %v4879 = vld [vmem:[%s4323 + $0x52] sm:$0xff]
  %v4880 = vld [vmem:[%s4323 + $0x62] sm:$0xff]
  %v4881 = vld [vmem:[%s4323 + $0x72] sm:$0xff]
  %v4882 = vld [vmem:[%s4323 + $0xa2] sm:$0xff]
  %v4883 = vld [vmem:[%s4323 + $0xb2] sm:$0xff]
  %v4884 = vld [vmem:[%s4323 + $0xc2] sm:$0xff]
  %v4885 = vld [vmem:[%s4323 + $0xd2] sm:$0xff]
  %v4886 = vld [vmem:[%s4323 + $0xe2] sm:$0xff]
  %v4887 = vld [vmem:[%s4323 + $0xf2] sm:$0xff]
  %v4888 = vld [vmem:[%s4323 + $0x102] sm:$0xff]
  %v4889 = vld [vmem:[%s4323 + $0x112] sm:$0xff]
  %v4890 = vpack.c.bf16 %v4874, %v4874
  %v4891 = vpack.c.bf16 %v4875, %v4875
  %v4892 = vpack.c.bf16 %v4876, %v4876
  %v4893 = vpack.c.bf16 %v4877, %v4877
  %v4894 = vpack.c.bf16 %v4878, %v4878
  %v4895 = vpack.c.bf16 %v4879, %v4879
  %v4896 = vpack.c.bf16 %v4880, %v4880
  %v4897 = vpack.c.bf16 %v4881, %v4881
  %v4898 = vpack.c.bf16 %v4882, %v4882
  %v4899 = vpack.c.bf16 %v4883, %v4883
  %v4900 = vpack.c.bf16 %v4884, %v4884
  %v4901 = vpack.c.bf16 %v4885, %v4885
  %v4902 = vpack.c.bf16 %v4886, %v4886
  %v4903 = vpack.c.bf16 %v4887, %v4887
  %v4904 = vpack.c.bf16 %v4888, %v4888
  %v4905 = vpack.c.bf16 %v4889, %v4889
  %4922 = vrot.lane.b32.xlu0 %v4890, 40
  %v4923 = vpop.permute.xlu0 %4922
  %4924 = vrot.lane.b32.xlu0 %v4891, 40
  %v4925 = vpop.permute.xlu0 %4924
  %4926 = vrot.lane.b32.xlu0 %v4892, 40
  %v4927 = vpop.permute.xlu0 %4926
  %4928 = vrot.lane.b32.xlu0 %v4893, 40
  %v4929 = vpop.permute.xlu0 %4928
  %4930 = vrot.lane.b32.xlu0 %v4894, 40
  %v4931 = vpop.permute.xlu0 %4930
  %4932 = vrot.lane.b32.xlu0 %v4895, 40
  %v4933 = vpop.permute.xlu0 %4932
  %4934 = vrot.lane.b32.xlu0 %v4896, 40
  %v4935 = vpop.permute.xlu0 %4934
  %4936 = vrot.lane.b32.xlu0 %v4897, 40
  %v4937 = vpop.permute.xlu0 %4936
  %4938 = vrot.lane.b32.xlu0 %v4898, 40
  %v4939 = vpop.permute.xlu0 %4938
  %4940 = vrot.lane.b32.xlu0 %v4899, 40
  %v4941 = vpop.permute.xlu0 %4940
  %4942 = vrot.lane.b32.xlu0 %v4900, 40
  %v4943 = vpop.permute.xlu0 %4942
  %4944 = vrot.lane.b32.xlu0 %v4901, 40
  %v4945 = vpop.permute.xlu0 %4944
  %4946 = vrot.lane.b32.xlu0 %v4902, 40
  %v4947 = vpop.permute.xlu0 %4946
  %4948 = vrot.lane.b32.xlu0 %v4903, 40
  %v4949 = vpop.permute.xlu0 %4948
  %4950 = vrot.lane.b32.xlu0 %v4904, 40
  %v4951 = vpop.permute.xlu0 %4950
  %4952 = vrot.lane.b32.xlu0 %v4905, 40
  %v4953 = vpop.permute.xlu0 %4952
  %vm4970 = vcmask 388416
  %4971 = vst.msk [vmem:[#allocation5] sm:$0xf] %vm4970, %v4923
  %4972 = vst.msk [vmem:[#allocation5 + $0x4] sm:$0xf] %vm4970, %v4925
  %4973 = vst.msk [vmem:[#allocation5 + $0x8] sm:$0xf] %vm4970, %v4927
  %4974 = vst.msk [vmem:[#allocation5 + $0xc] sm:$0xf] %vm4970, %v4929
  %4975 = vst.msk [vmem:[#allocation5 + $0x10] sm:$0xf] %vm4970, %v4931
  %4976 = vst.msk [vmem:[#allocation5 + $0x14] sm:$0xf] %vm4970, %v4933
  %4977 = vst.msk [vmem:[#allocation5 + $0x18] sm:$0xf] %vm4970, %v4935
  %4978 = vst.msk [vmem:[#allocation5 + $0x1c] sm:$0xf] %vm4970, %v4937
  %4979 = vst.msk [vmem:[#allocation5 + $0x20] sm:$0xf] %vm4970, %v4939
  %4980 = vst.msk [vmem:[#allocation5 + $0x24] sm:$0xf] %vm4970, %v4941
  %4981 = vst.msk [vmem:[#allocation5 + $0x28] sm:$0xf] %vm4970, %v4943
  %4982 = vst.msk [vmem:[#allocation5 + $0x2c] sm:$0xf] %vm4970, %v4945
  %4983 = vst.msk [vmem:[#allocation5 + $0x30] sm:$0xf] %vm4970, %v4947
  %4984 = vst.msk [vmem:[#allocation5 + $0x34] sm:$0xf] %vm4970, %v4949
  %4985 = vst.msk [vmem:[#allocation5 + $0x38] sm:$0xf] %vm4970, %v4951
  %4986 = vst.msk [vmem:[#allocation5 + $0x3c] sm:$0xf] %vm4970, %v4953
  %s4987 = scalar_lea.vmem [#allocation4], 32
  %v4988 = vld [vmem:[%s4987] sm:$0xff]
  %v4989 = vld [vmem:[%s4987 + $0x10] sm:$0xff]
  %v4990 = vld [vmem:[%s4987 + $0x20] sm:$0xff]
  %v4991 = vld [vmem:[%s4987 + $0x30] sm:$0xff]
  %v4992 = vld [vmem:[%s4987 + $0x40] sm:$0xff]
  %v4993 = vld [vmem:[%s4987 + $0x50] sm:$0xff]
  %v4994 = vld [vmem:[%s4987 + $0x60] sm:$0xff]
  %v4995 = vld [vmem:[%s4987 + $0x70] sm:$0xff]
  %v4996 = vld [vmem:[%s4987 + $0xa0] sm:$0xff]
  %v4997 = vld [vmem:[%s4987 + $0xb0] sm:$0xff]
  %v4998 = vld [vmem:[%s4987 + $0xc0] sm:$0xff]
  %v4999 = vld [vmem:[%s4987 + $0xd0] sm:$0xff]
  %v5000 = vld [vmem:[%s4987 + $0xe0] sm:$0xff]
  %v5001 = vld [vmem:[%s4987 + $0xf0] sm:$0xff]
  %v5002 = vld [vmem:[%s4987 + $0x100] sm:$0xff]
  %v5003 = vld [vmem:[%s4987 + $0x110] sm:$0xff]
  %v5004 = vpack.c.bf16 %v4988, %v4988
  %v5005 = vpack.c.bf16 %v4989, %v4989
  %v5006 = vpack.c.bf16 %v4990, %v4990
  %v5007 = vpack.c.bf16 %v4991, %v4991
  %v5008 = vpack.c.bf16 %v4992, %v4992
  %v5009 = vpack.c.bf16 %v4993, %v4993
  %v5010 = vpack.c.bf16 %v4994, %v4994
  %v5011 = vpack.c.bf16 %v4995, %v4995
  %v5012 = vpack.c.bf16 %v4996, %v4996
  %v5013 = vpack.c.bf16 %v4997, %v4997
  %v5014 = vpack.c.bf16 %v4998, %v4998
  %v5015 = vpack.c.bf16 %v4999, %v4999
  %v5016 = vpack.c.bf16 %v5000, %v5000
  %v5017 = vpack.c.bf16 %v5001, %v5001
  %v5018 = vpack.c.bf16 %v5002, %v5002
  %v5019 = vpack.c.bf16 %v5003, %v5003
  %5036 = vrot.lane.b32.xlu0 %v5004, 48
  %v5037 = vpop.permute.xlu0 %5036
  %5038 = vrot.lane.b32.xlu0 %v5005, 48
  %v5039 = vpop.permute.xlu0 %5038
  %5040 = vrot.lane.b32.xlu0 %v5006, 48
  %v5041 = vpop.permute.xlu0 %5040
  %5042 = vrot.lane.b32.xlu0 %v5007, 48
  %v5043 = vpop.permute.xlu0 %5042
  %5044 = vrot.lane.b32.xlu0 %v5008, 48
  %v5045 = vpop.permute.xlu0 %5044
  %5046 = vrot.lane.b32.xlu0 %v5009, 48
  %v5047 = vpop.permute.xlu0 %5046
  %5048 = vrot.lane.b32.xlu0 %v5010, 48
  %v5049 = vpop.permute.xlu0 %5048
  %5050 = vrot.lane.b32.xlu0 %v5011, 48
  %v5051 = vpop.permute.xlu0 %5050
  %5052 = vrot.lane.b32.xlu0 %v5012, 48
  %v5053 = vpop.permute.xlu0 %5052
  %5054 = vrot.lane.b32.xlu0 %v5013, 48
  %v5055 = vpop.permute.xlu0 %5054
  %5056 = vrot.lane.b32.xlu0 %v5014, 48
  %v5057 = vpop.permute.xlu0 %5056
  %5058 = vrot.lane.b32.xlu0 %v5015, 48
  %v5059 = vpop.permute.xlu0 %5058
  %5060 = vrot.lane.b32.xlu0 %v5016, 48
  %v5061 = vpop.permute.xlu0 %5060
  %5062 = vrot.lane.b32.xlu0 %v5017, 48
  %v5063 = vpop.permute.xlu0 %5062
  %5064 = vrot.lane.b32.xlu0 %v5018, 48
  %v5065 = vpop.permute.xlu0 %5064
  %5066 = vrot.lane.b32.xlu0 %v5019, 48
  %v5067 = vpop.permute.xlu0 %5066
  %vm5084 = vcmask 454016
  %5085 = vst.msk [vmem:[#allocation5] sm:$0xf] %vm5084, %v5037
  %5086 = vst.msk [vmem:[#allocation5 + $0x4] sm:$0xf] %vm5084, %v5039
  %5087 = vst.msk [vmem:[#allocation5 + $0x8] sm:$0xf] %vm5084, %v5041
  %5088 = vst.msk [vmem:[#allocation5 + $0xc] sm:$0xf] %vm5084, %v5043
  %5089 = vst.msk [vmem:[#allocation5 + $0x10] sm:$0xf] %vm5084, %v5045
  %5090 = vst.msk [vmem:[#allocation5 + $0x14] sm:$0xf] %vm5084, %v5047
  %5091 = vst.msk [vmem:[#allocation5 + $0x18] sm:$0xf] %vm5084, %v5049
  %5092 = vst.msk [vmem:[#allocation5 + $0x1c] sm:$0xf] %vm5084, %v5051
  %5093 = vst.msk [vmem:[#allocation5 + $0x20] sm:$0xf] %vm5084, %v5053
  %5094 = vst.msk [vmem:[#allocation5 + $0x24] sm:$0xf] %vm5084, %v5055
  %5095 = vst.msk [vmem:[#allocation5 + $0x28] sm:$0xf] %vm5084, %v5057
  %5096 = vst.msk [vmem:[#allocation5 + $0x2c] sm:$0xf] %vm5084, %v5059
  %5097 = vst.msk [vmem:[#allocation5 + $0x30] sm:$0xf] %vm5084, %v5061
  %5098 = vst.msk [vmem:[#allocation5 + $0x34] sm:$0xf] %vm5084, %v5063
  %5099 = vst.msk [vmem:[#allocation5 + $0x38] sm:$0xf] %vm5084, %v5065
  %5100 = vst.msk [vmem:[#allocation5 + $0x3c] sm:$0xf] %vm5084, %v5067
  %v5101 = vld [vmem:[%s4987 + $0x1] sm:$0xff]
  %v5102 = vld [vmem:[%s4987 + $0x11] sm:$0xff]
  %v5103 = vld [vmem:[%s4987 + $0x21] sm:$0xff]
  %v5104 = vld [vmem:[%s4987 + $0x31] sm:$0xff]
  %v5105 = vld [vmem:[%s4987 + $0x41] sm:$0xff]
  %v5106 = vld [vmem:[%s4987 + $0x51] sm:$0xff]
  %v5107 = vld [vmem:[%s4987 + $0x61] sm:$0xff]
  %v5108 = vld [vmem:[%s4987 + $0x71] sm:$0xff]
  %v5109 = vld [vmem:[%s4987 + $0xa1] sm:$0xff]
  %v5110 = vld [vmem:[%s4987 + $0xb1] sm:$0xff]
  %v5111 = vld [vmem:[%s4987 + $0xc1] sm:$0xff]
  %v5112 = vld [vmem:[%s4987 + $0xd1] sm:$0xff]
  %v5113 = vld [vmem:[%s4987 + $0xe1] sm:$0xff]
  %v5114 = vld [vmem:[%s4987 + $0xf1] sm:$0xff]
  %v5115 = vld [vmem:[%s4987 + $0x101] sm:$0xff]
  %v5116 = vld [vmem:[%s4987 + $0x111] sm:$0xff]
  %v5117 = vpack.c.bf16 %v5101, %v5101
  %v5118 = vpack.c.bf16 %v5102, %v5102
  %v5119 = vpack.c.bf16 %v5103, %v5103
  %v5120 = vpack.c.bf16 %v5104, %v5104
  %v5121 = vpack.c.bf16 %v5105, %v5105
  %v5122 = vpack.c.bf16 %v5106, %v5106
  %v5123 = vpack.c.bf16 %v5107, %v5107
  %v5124 = vpack.c.bf16 %v5108, %v5108
  %v5125 = vpack.c.bf16 %v5109, %v5109
  %v5126 = vpack.c.bf16 %v5110, %v5110
  %v5127 = vpack.c.bf16 %v5111, %v5111
  %v5128 = vpack.c.bf16 %v5112, %v5112
  %v5129 = vpack.c.bf16 %v5113, %v5113
  %v5130 = vpack.c.bf16 %v5114, %v5114
  %v5131 = vpack.c.bf16 %v5115, %v5115
  %v5132 = vpack.c.bf16 %v5116, %v5116
  %5149 = vrot.lane.b32.xlu0 %v5117, 56
  %v5150 = vpop.permute.xlu0 %5149
  %5151 = vrot.lane.b32.xlu0 %v5118, 56
  %v5152 = vpop.permute.xlu0 %5151
  %5153 = vrot.lane.b32.xlu0 %v5119, 56
  %v5154 = vpop.permute.xlu0 %5153
  %5155 = vrot.lane.b32.xlu0 %v5120, 56
  %v5156 = vpop.permute.xlu0 %5155
  %5157 = vrot.lane.b32.xlu0 %v5121, 56
  %v5158 = vpop.permute.xlu0 %5157
  %5159 = vrot.lane.b32.xlu0 %v5122, 56
  %v5160 = vpop.permute.xlu0 %5159
  %5161 = vrot.lane.b32.xlu0 %v5123, 56
  %v5162 = vpop.permute.xlu0 %5161
  %5163 = vrot.lane.b32.xlu0 %v5124, 56
  %v5164 = vpop.permute.xlu0 %5163
  %5165 = vrot.lane.b32.xlu0 %v5125, 56
  %v5166 = vpop.permute.xlu0 %5165
  %5167 = vrot.lane.b32.xlu0 %v5126, 56
  %v5168 = vpop.permute.xlu0 %5167
  %5169 = vrot.lane.b32.xlu0 %v5127, 56
  %v5170 = vpop.permute.xlu0 %5169
  %5171 = vrot.lane.b32.xlu0 %v5128, 56
  %v5172 = vpop.permute.xlu0 %5171
  %5173 = vrot.lane.b32.xlu0 %v5129, 56
  %v5174 = vpop.permute.xlu0 %5173
  %5175 = vrot.lane.b32.xlu0 %v5130, 56
  %v5176 = vpop.permute.xlu0 %5175
  %5177 = vrot.lane.b32.xlu0 %v5131, 56
  %v5178 = vpop.permute.xlu0 %5177
  %5179 = vrot.lane.b32.xlu0 %v5132, 56
  %v5180 = vpop.permute.xlu0 %5179
  %vm5197 = vcmask 519616
  %5198 = vst.msk [vmem:[#allocation5] sm:$0xf] %vm5197, %v5150
  %5199 = vst.msk [vmem:[#allocation5 + $0x4] sm:$0xf] %vm5197, %v5152
  %5200 = vst.msk [vmem:[#allocation5 + $0x8] sm:$0xf] %vm5197, %v5154
  %5201 = vst.msk [vmem:[#allocation5 + $0xc] sm:$0xf] %vm5197, %v5156
  %5202 = vst.msk [vmem:[#allocation5 + $0x10] sm:$0xf] %vm5197, %v5158
  %5203 = vst.msk [vmem:[#allocation5 + $0x14] sm:$0xf] %vm5197, %v5160
  %5204 = vst.msk [vmem:[#allocation5 + $0x18] sm:$0xf] %vm5197, %v5162
  %5205 = vst.msk [vmem:[#allocation5 + $0x1c] sm:$0xf] %vm5197, %v5164
  %5206 = vst.msk [vmem:[#allocation5 + $0x20] sm:$0xf] %vm5197, %v5166
  %5207 = vst.msk [vmem:[#allocation5 + $0x24] sm:$0xf] %vm5197, %v5168
  %5208 = vst.msk [vmem:[#allocation5 + $0x28] sm:$0xf] %vm5197, %v5170
  %5209 = vst.msk [vmem:[#allocation5 + $0x2c] sm:$0xf] %vm5197, %v5172
  %5210 = vst.msk [vmem:[#allocation5 + $0x30] sm:$0xf] %vm5197, %v5174
  %5211 = vst.msk [vmem:[#allocation5 + $0x34] sm:$0xf] %vm5197, %v5176
  %5212 = vst.msk [vmem:[#allocation5 + $0x38] sm:$0xf] %vm5197, %v5178
  %5213 = vst.msk [vmem:[#allocation5 + $0x3c] sm:$0xf] %vm5197, %v5180
  %v5214 = vld [vmem:[%s4987 + $0x2] sm:$0xff]
  %v5215 = vld [vmem:[%s4987 + $0x12] sm:$0xff]
  %v5216 = vld [vmem:[%s4987 + $0x22] sm:$0xff]
  %v5217 = vld [vmem:[%s4987 + $0x32] sm:$0xff]
  %v5218 = vld [vmem:[%s4987 + $0x42] sm:$0xff]
  %v5219 = vld [vmem:[%s4987 + $0x52] sm:$0xff]
  %v5220 = vld [vmem:[%s4987 + $0x62] sm:$0xff]
  %v5221 = vld [vmem:[%s4987 + $0x72] sm:$0xff]
  %v5222 = vld [vmem:[%s4987 + $0xa2] sm:$0xff]
  %v5223 = vld [vmem:[%s4987 + $0xb2] sm:$0xff]
  %v5224 = vld [vmem:[%s4987 + $0xc2] sm:$0xff]
  %v5225 = vld [vmem:[%s4987 + $0xd2] sm:$0xff]
  %v5226 = vld [vmem:[%s4987 + $0xe2] sm:$0xff]
  %v5227 = vld [vmem:[%s4987 + $0xf2] sm:$0xff]
  %v5228 = vld [vmem:[%s4987 + $0x102] sm:$0xff]
  %v5229 = vld [vmem:[%s4987 + $0x112] sm:$0xff]
  %v5230 = vpack.c.bf16 %v5214, %v5214
  %v5231 = vpack.c.bf16 %v5215, %v5215
  %v5232 = vpack.c.bf16 %v5216, %v5216
  %v5233 = vpack.c.bf16 %v5217, %v5217
  %v5234 = vpack.c.bf16 %v5218, %v5218
  %v5235 = vpack.c.bf16 %v5219, %v5219
  %v5236 = vpack.c.bf16 %v5220, %v5220
  %v5237 = vpack.c.bf16 %v5221, %v5221
  %v5238 = vpack.c.bf16 %v5222, %v5222
  %v5239 = vpack.c.bf16 %v5223, %v5223
  %v5240 = vpack.c.bf16 %v5224, %v5224
  %v5241 = vpack.c.bf16 %v5225, %v5225
  %v5242 = vpack.c.bf16 %v5226, %v5226
  %v5243 = vpack.c.bf16 %v5227, %v5227
  %v5244 = vpack.c.bf16 %v5228, %v5228
  %v5245 = vpack.c.bf16 %v5229, %v5229
  %5262 = vrot.lane.b32.xlu0 %v5230, 64
  %v5263 = vpop.permute.xlu0 %5262
  %5264 = vrot.lane.b32.xlu0 %v5231, 64
  %v5265 = vpop.permute.xlu0 %5264
  %5266 = vrot.lane.b32.xlu0 %v5232, 64
  %v5267 = vpop.permute.xlu0 %5266
  %5268 = vrot.lane.b32.xlu0 %v5233, 64
  %v5269 = vpop.permute.xlu0 %5268
  %5270 = vrot.lane.b32.xlu0 %v5234, 64
  %v5271 = vpop.permute.xlu0 %5270
  %5272 = vrot.lane.b32.xlu0 %v5235, 64
  %v5273 = vpop.permute.xlu0 %5272
  %5274 = vrot.lane.b32.xlu0 %v5236, 64
  %v5275 = vpop.permute.xlu0 %5274
  %5276 = vrot.lane.b32.xlu0 %v5237, 64
  %v5277 = vpop.permute.xlu0 %5276
  %5278 = vrot.lane.b32.xlu0 %v5238, 64
  %v5279 = vpop.permute.xlu0 %5278
  %5280 = vrot.lane.b32.xlu0 %v5239, 64
  %v5281 = vpop.permute.xlu0 %5280
  %5282 = vrot.lane.b32.xlu0 %v5240, 64
  %v5283 = vpop.permute.xlu0 %5282
  %5284 = vrot.lane.b32.xlu0 %v5241, 64
  %v5285 = vpop.permute.xlu0 %5284
  %5286 = vrot.lane.b32.xlu0 %v5242, 64
  %v5287 = vpop.permute.xlu0 %5286
  %5288 = vrot.lane.b32.xlu0 %v5243, 64
  %v5289 = vpop.permute.xlu0 %5288
  %5290 = vrot.lane.b32.xlu0 %v5244, 64
  %v5291 = vpop.permute.xlu0 %5290
  %5292 = vrot.lane.b32.xlu0 %v5245, 64
  %v5293 = vpop.permute.xlu0 %5292
  %vm5310 = vcmask 585216
  %5311 = vst.msk [vmem:[#allocation5] sm:$0xf] %vm5310, %v5263
  %5312 = vst.msk [vmem:[#allocation5 + $0x4] sm:$0xf] %vm5310, %v5265
  %5313 = vst.msk [vmem:[#allocation5 + $0x8] sm:$0xf] %vm5310, %v5267
  %5314 = vst.msk [vmem:[#allocation5 + $0xc] sm:$0xf] %vm5310, %v5269
  %5315 = vst.msk [vmem:[#allocation5 + $0x10] sm:$0xf] %vm5310, %v5271
  %5316 = vst.msk [vmem:[#allocation5 + $0x14] sm:$0xf] %vm5310, %v5273
  %5317 = vst.msk [vmem:[#allocation5 + $0x18] sm:$0xf] %vm5310, %v5275
  %5318 = vst.msk [vmem:[#allocation5 + $0x1c] sm:$0xf] %vm5310, %v5277
  %5319 = vst.msk [vmem:[#allocation5 + $0x20] sm:$0xf] %vm5310, %v5279
  %5320 = vst.msk [vmem:[#allocation5 + $0x24] sm:$0xf] %vm5310, %v5281
  %5321 = vst.msk [vmem:[#allocation5 + $0x28] sm:$0xf] %vm5310, %v5283
  %5322 = vst.msk [vmem:[#allocation5 + $0x2c] sm:$0xf] %vm5310, %v5285
  %5323 = vst.msk [vmem:[#allocation5 + $0x30] sm:$0xf] %vm5310, %v5287
  %5324 = vst.msk [vmem:[#allocation5 + $0x34] sm:$0xf] %vm5310, %v5289
  %5325 = vst.msk [vmem:[#allocation5 + $0x38] sm:$0xf] %vm5310, %v5291
  %5326 = vst.msk [vmem:[#allocation5 + $0x3c] sm:$0xf] %vm5310, %v5293
  %v5327 = vld [vmem:[#allocation5] sm:$0xf]
  %v5328 = vld [vmem:[#allocation5 + $0x4] sm:$0xf]
  %v5329 = vld [vmem:[#allocation5 + $0x8] sm:$0xf]
  %v5330 = vld [vmem:[#allocation5 + $0xc] sm:$0xf]
  %v5331 = vld [vmem:[#allocation5 + $0x10] sm:$0xf]
  %v5332 = vld [vmem:[#allocation5 + $0x14] sm:$0xf]
  %v5333 = vld [vmem:[#allocation5 + $0x18] sm:$0xf]
  %v5334 = vld [vmem:[#allocation5 + $0x1c] sm:$0xf]
  %v5335 = vld [vmem:[#allocation5 + $0x20] sm:$0xf]
  %v5336 = vld [vmem:[#allocation5 + $0x24] sm:$0xf]
  %v5337 = vld [vmem:[#allocation5 + $0x28] sm:$0xf]
  %v5338 = vld [vmem:[#allocation5 + $0x2c] sm:$0xf]
  %v5339 = vld [vmem:[#allocation5 + $0x30] sm:$0xf]
  %v5340 = vld [vmem:[#allocation5 + $0x34] sm:$0xf]
  %v5341 = vld [vmem:[#allocation5 + $0x38] sm:$0xf]
  %v5342 = vld [vmem:[#allocation5 + $0x3c] sm:$0xf]
  %v5343 = vld [vmem:[%s2] sm:$0xf]
  %v5344 = vld [vmem:[%s2 + $0x4] sm:$0xf]
  %v5345 = vld [vmem:[%s2 + $0x8] sm:$0xf]
  %v5346 = vld [vmem:[%s2 + $0xc] sm:$0xf]
  %v5347 = vld [vmem:[%s2 + $0x10] sm:$0xf]
  %v5348 = vld [vmem:[%s2 + $0x14] sm:$0xf]
  %v5349 = vld [vmem:[%s2 + $0x18] sm:$0xf]
  %v5350 = vld [vmem:[%s2 + $0x1c] sm:$0xf]
  %v5351 = vld [vmem:[%s2 + $0x20] sm:$0xf]
  %v5368 = vunpack.c.l.b16 %v5327
  %v5369 = vunpack.c.l.b16 %v5328
  %v5370 = vunpack.c.l.b16 %v5329
  %v5371 = vunpack.c.l.b16 %v5330
  %v5372 = vunpack.c.l.b16 %v5331
  %v5373 = vunpack.c.l.b16 %v5332
  %v5374 = vunpack.c.l.b16 %v5333
  %v5375 = vunpack.c.l.b16 %v5334
  %v5376 = vunpack.c.l.b16 %v5335
  %v5377 = vunpack.c.l.b16 %v5336
  %v5378 = vunpack.c.l.b16 %v5337
  %v5379 = vunpack.c.l.b16 %v5338
  %v5380 = vunpack.c.l.b16 %v5339
  %v5381 = vunpack.c.l.b16 %v5340
  %v5382 = vunpack.c.l.b16 %v5341
  %v5383 = vunpack.c.l.b16 %v5342
  %v5384 = vpack.c.b16 %v5369, %v5368
  %v5385 = vpack.c.b16 %v5371, %v5370
  %v5386 = vpack.c.b16 %v5373, %v5372
  %v5387 = vpack.c.b16 %v5375, %v5374
  %v5388 = vpack.c.b16 %v5377, %v5376
  %v5389 = vpack.c.b16 %v5379, %v5378
  %v5390 = vpack.c.b16 %v5381, %v5380
  %v5391 = vpack.c.b16 %v5383, %v5382
  %v5401 = vunpack.c.l.b16 %v5343
  %v5402 = vunpack.c.l.b16 %v5344
  %v5403 = vunpack.c.l.b16 %v5345
  %v5404 = vunpack.c.l.b16 %v5346
  %v5405 = vunpack.c.l.b16 %v5347
  %v5406 = vunpack.c.l.b16 %v5348
  %v5407 = vunpack.c.l.b16 %v5349
  %v5408 = vunpack.c.l.b16 %v5350
  %v5409 = vunpack.c.l.b16 %v5351
  %v5410 = vpack.c.b16 %v5402, %v5401
  %v5411 = vpack.c.b16 %v5404, %v5403
  %v5412 = vpack.c.b16 %v5406, %v5405
  %v5413 = vpack.c.b16 %v5408, %v5407
  %v5414 = vpack.c.b16 %v5409, %v5409
  %vm5419 = vcmask 588800
  %v5421 = vsel %vm5419, %v5384, 0
  %v5424 = vsel %vm5419, %v5385, 0
  %v5427 = vsel %vm5419, %v5386, 0
  %v5430 = vsel %vm5419, %v5387, 0
  %v5433 = vsel %vm5419, %v5388, 0
  %v5436 = vsel %vm5419, %v5389, 0
  %v5439 = vsel %vm5419, %v5390, 0
  %v5442 = vsel %vm5419, %v5391, 0
  %vm5444 = vcmask 1043456
  %v5446 = vsel %vm5444, %v5414, 0
  %5448 = vmatpush.bf16.msra.mxu0 0
  %5449 = vmatpush.bf16.msra.mxu0 0
  %5450 = vmatpush.bf16.msra.mxu0 0
  %5451 = vmatpush.bf16.msra.mxu0 %v5446
  %5452 = vmatpush.bf16.msra.mxu0 %v5413
  %5453 = vmatpush.bf16.msra.mxu0 %v5412
  %5454 = vmatpush.bf16.msra.mxu0 %v5411
  %5455 = vmatpush.bf16.msra.mxu0 %v5410
  %5456 = vmatmul.bf16.gmra.mxu0 %v5421
  %v5457 = vpop.f32.mrf.mxu0
  %v5458 = vadd.f32 0.0, %v5457
  %v5459 = vpop.f32.mrf.mxu0
  %v5460 = vadd.f32 0.0, %v5459
  %5461 = vmatmul.bf16.gmra.mxu0 %v5424
  %v5462 = vpop.f32.mrf.mxu0
  %v5463 = vadd.f32 0.0, %v5462
  %v5464 = vpop.f32.mrf.mxu0
  %v5465 = vadd.f32 0.0, %v5464
  %5466 = vmatmul.bf16.gmra.mxu0 %v5427
  %v5467 = vpop.f32.mrf.mxu0
  %v5468 = vadd.f32 0.0, %v5467
  %v5469 = vpop.f32.mrf.mxu0
  %v5470 = vadd.f32 0.0, %v5469
  %5471 = vmatmul.bf16.gmra.mxu0 %v5430
  %v5472 = vpop.f32.mrf.mxu0
  %v5473 = vadd.f32 0.0, %v5472
  %v5474 = vpop.f32.mrf.mxu0
  %v5475 = vadd.f32 0.0, %v5474
  %5476 = vmatmul.bf16.gmra.mxu0 %v5433
  %v5477 = vpop.f32.mrf.mxu0
  %v5478 = vadd.f32 0.0, %v5477
  %v5479 = vpop.f32.mrf.mxu0
  %v5480 = vadd.f32 0.0, %v5479
  %5481 = vmatmul.bf16.gmra.mxu0 %v5436
  %v5482 = vpop.f32.mrf.mxu0
  %v5483 = vadd.f32 0.0, %v5482
  %v5484 = vpop.f32.mrf.mxu0
  %v5485 = vadd.f32 0.0, %v5484
  %5486 = vmatmul.bf16.gmra.mxu0 %v5439
  %v5487 = vpop.f32.mrf.mxu0
  %v5488 = vadd.f32 0.0, %v5487
  %v5489 = vpop.f32.mrf.mxu0
  %v5490 = vadd.f32 0.0, %v5489
  %5491 = vmatmul.bf16.gmra.mxu0 %v5442
  %v5492 = vpop.f32.mrf.mxu0
  %v5493 = vadd.f32 0.0, %v5492
  %v5494 = vpop.f32.mrf.mxu0
  %v5495 = vadd.f32 0.0, %v5494
  %5496 = vdwg.mxu0
  %v5497 = vsel %vm4147, %v5458, 0.0
  %v5498 = vsel %vm4147, %v5460, 0.0
  %v5499 = vadd.f32 %v5497, %v5498
  %v5500 = vsel %vm4147, %v5463, 0.0
  %v5501 = vadd.f32 %v5499, %v5500
  %v5502 = vsel %vm4147, %v5465, 0.0
  %v5503 = vadd.f32 %v5501, %v5502
  %v5504 = vsel %vm4147, %v5468, 0.0
  %v5505 = vadd.f32 %v5503, %v5504
  %v5506 = vsel %vm4147, %v5470, 0.0
  %v5507 = vadd.f32 %v5505, %v5506
  %v5508 = vsel %vm4147, %v5473, 0.0
  %v5509 = vadd.f32 %v5507, %v5508
  %v5510 = vsel %vm4147, %v5475, 0.0
  %v5511 = vadd.f32 %v5509, %v5510
  %v5512 = vsel %vm4147, %v5478, 0.0
  %v5513 = vadd.f32 %v5511, %v5512
  %v5514 = vsel %vm4147, %v5480, 0.0
  %v5515 = vadd.f32 %v5513, %v5514
  %v5516 = vsel %vm4147, %v5483, 0.0
  %v5517 = vadd.f32 %v5515, %v5516
  %v5518 = vsel %vm4147, %v5485, 0.0
  %v5519 = vadd.f32 %v5517, %v5518
  %v5520 = vsel %vm4147, %v5488, 0.0
  %v5521 = vadd.f32 %v5519, %v5520
  %v5522 = vsel %vm4147, %v5490, 0.0
  %v5523 = vadd.f32 %v5521, %v5522
  %v5524 = vsel %vm4147, %v5493, 0.0
  %v5525 = vadd.f32 %v5523, %v5524
  %v5526 = vsel %vm4147, %v5495, 0.0
  %v5527 = vadd.f32 %v5525, %v5526
  %v5528 = vrot.slane %v5527, 4
  %v5529 = vadd.f32 %v5527, %v5528
  %v5530 = vrot.slane %v5529, 2
  %v5531 = vadd.f32 %v5529, %v5530
  %v5532 = vrot.slane %v5531, 1
  %v5533 = vadd.f32 %v5531, %v5532
  %v5534 = vmul.f32 %v5533, 0.0078125
  %v5535 = vmul.f32 %v5458, %v5458
  %v5536 = vmul.f32 %v5460, %v5460
  %v5537 = vmul.f32 %v5463, %v5463
  %v5538 = vmul.f32 %v5465, %v5465
  %v5539 = vmul.f32 %v5468, %v5468
  %v5540 = vmul.f32 %v5470, %v5470
  %v5541 = vmul.f32 %v5473, %v5473
  %v5542 = vmul.f32 %v5475, %v5475
  %v5543 = vmul.f32 %v5478, %v5478
  %v5544 = vmul.f32 %v5480, %v5480
  %v5545 = vmul.f32 %v5483, %v5483
  %v5546 = vmul.f32 %v5485, %v5485
  %v5547 = vmul.f32 %v5488, %v5488
  %v5548 = vmul.f32 %v5490, %v5490
  %v5549 = vmul.f32 %v5493, %v5493
  %v5550 = vmul.f32 %v5495, %v5495
  %v5551 = vsel %vm4147, %v5535, 0.0
  %v5552 = vsel %vm4147, %v5536, 0.0
  %v5553 = vadd.f32 %v5551, %v5552
  %v5554 = vsel %vm4147, %v5537, 0.0
  %v5555 = vadd.f32 %v5553, %v5554
  %v5556 = vsel %vm4147, %v5538, 0.0
  %v5557 = vadd.f32 %v5555, %v5556
  %v5558 = vsel %vm4147, %v5539, 0.0
  %v5559 = vadd.f32 %v5557, %v5558
  %v5560 = vsel %vm4147, %v5540, 0.0
  %v5561 = vadd.f32 %v5559, %v5560
  %v5562 = vsel %vm4147, %v5541, 0.0
  %v5563 = vadd.f32 %v5561, %v5562
  %v5564 = vsel %vm4147, %v5542, 0.0
  %v5565 = vadd.f32 %v5563, %v5564
  %v5566 = vsel %vm4147, %v5543, 0.0
  %v5567 = vadd.f32 %v5565, %v5566
  %v5568 = vsel %vm4147, %v5544, 0.0
  %v5569 = vadd.f32 %v5567, %v5568
  %v5570 = vsel %vm4147, %v5545, 0.0
  %v5571 = vadd.f32 %v5569, %v5570
  %v5572 = vsel %vm4147, %v5546, 0.0
  %v5573 = vadd.f32 %v5571, %v5572
  %v5574 = vsel %vm4147, %v5547, 0.0
  %v5575 = vadd.f32 %v5573, %v5574
  %v5576 = vsel %vm4147, %v5548, 0.0
  %v5577 = vadd.f32 %v5575, %v5576
  %v5578 = vsel %vm4147, %v5549, 0.0
  %v5579 = vadd.f32 %v5577, %v5578
  %v5580 = vsel %vm4147, %v5550, 0.0
  %v5581 = vadd.f32 %v5579, %v5580
  %v5582 = vrot.slane %v5581, 4
  %v5583 = vadd.f32 %v5581, %v5582
  %v5584 = vrot.slane %v5583, 2
  %v5585 = vadd.f32 %v5583, %v5584
  %v5586 = vrot.slane %v5585, 1
  %v5587 = vadd.f32 %v5585, %v5586
  %v5588 = vmul.f32 %v5587, 0.0078125
  %v5589 = vmul.f32 %v5534, %v5534
  %v5590 = vsub.f32 %v5588, %v5589
  %v5591 = vmax.f32 %v5590, 0.0
  %v5592 = vld [vmem:[%s5] sm:$0x1]
  %v5593 = vadd.f32 %v5591, 1e-05
  %v5594 = vrsqrt.pop %v5593
  %v5595 = vmul.f32 %v5594, %v5593
  %v5596 = vmul.f32 %v5595, %v5594
  %v5597 = vmul.f32 0.5, %v5596
  %v5598 = vsub.f32 1.5, %v5597
  %v5599 = vmul.f32 %v5594, %v5598
  %vm5600 = vweird.f32 %v5593
  %vm5601 = vweird.f32 %v5594
  %vm5602 = vmor %vm5600, %vm5601
  %v5603 = vsel %vm5602, %v5594, %v5599
  %v5604 = vmul.f32 %v5592, %v5603
  %v5605 = vld [vmem:[%s6] sm:$0x1]
  %v5606 = vmul.f32 %v5534, %v5604
  %v5607 = vsub.f32 %v5605, %v5606
  %v5609 = vperm.slane %v5604, 0
  %v5611 = vmul.f32 %v5458, %v5609
  %v5612 = vmul.f32 %v5460, %v5609
  %v5613 = vmul.f32 %v5463, %v5609
  %v5614 = vmul.f32 %v5465, %v5609
  %v5615 = vmul.f32 %v5468, %v5609
  %v5616 = vmul.f32 %v5470, %v5609
  %v5617 = vmul.f32 %v5473, %v5609
  %v5618 = vmul.f32 %v5475, %v5609
  %v5619 = vmul.f32 %v5478, %v5609
  %v5620 = vmul.f32 %v5480, %v5609
  %v5621 = vmul.f32 %v5483, %v5609
  %v5622 = vmul.f32 %v5485, %v5609
  %v5623 = vmul.f32 %v5488, %v5609
  %v5624 = vmul.f32 %v5490, %v5609
  %v5625 = vmul.f32 %v5493, %v5609
  %v5626 = vmul.f32 %v5495, %v5609
  %v5628 = vperm.slane %v5607, 0
  %v5630 = vadd.f32 %v5611, %v5628
  %v5631 = vadd.f32 %v5612, %v5628
  %v5632 = vadd.f32 %v5613, %v5628
  %v5633 = vadd.f32 %v5614, %v5628
  %v5634 = vadd.f32 %v5615, %v5628
  %v5635 = vadd.f32 %v5616, %v5628
  %v5636 = vadd.f32 %v5617, %v5628
  %v5637 = vadd.f32 %v5618, %v5628
  %v5638 = vadd.f32 %v5619, %v5628
  %v5639 = vadd.f32 %v5620, %v5628
  %v5640 = vadd.f32 %v5621, %v5628
  %v5641 = vadd.f32 %v5622, %v5628
  %v5642 = vadd.f32 %v5623, %v5628
  %v5643 = vadd.f32 %v5624, %v5628
  %v5644 = vadd.f32 %v5625, %v5628
  %v5645 = vadd.f32 %v5626, %v5628
  %v5646 = vmax.f32 %v5630, 0.0
  %v5647 = vmax.f32 %v5631, 0.0
  %v5648 = vmax.f32 %v5632, 0.0
  %v5649 = vmax.f32 %v5633, 0.0
  %v5650 = vmax.f32 %v5634, 0.0
  %v5651 = vmax.f32 %v5635, 0.0
  %v5652 = vmax.f32 %v5636, 0.0
  %v5653 = vmax.f32 %v5637, 0.0
  %v5654 = vmax.f32 %v5638, 0.0
  %v5655 = vmax.f32 %v5639, 0.0
  %v5656 = vmax.f32 %v5640, 0.0
  %v5657 = vmax.f32 %v5641, 0.0
  %v5658 = vmax.f32 %v5642, 0.0
  %v5659 = vmax.f32 %v5643, 0.0
  %v5660 = vmax.f32 %v5644, 0.0
  %v5661 = vmax.f32 %v5645, 0.0
  %5662 = vst.msk [vmem:[%s7] sm:$0xff] %vm4147, %v5646
  %5663 = vst.msk [vmem:[%s7 + $0x8] sm:$0xff] %vm4147, %v5647
  %5664 = vst.msk [vmem:[%s7 + $0x10] sm:$0xff] %vm4147, %v5648
  %5665 = vst.msk [vmem:[%s7 + $0x18] sm:$0xff] %vm4147, %v5649
  %5666 = vst.msk [vmem:[%s7 + $0x20] sm:$0xff] %vm4147, %v5650
  %5667 = vst.msk [vmem:[%s7 + $0x28] sm:$0xff] %vm4147, %v5651
  %5668 = vst.msk [vmem:[%s7 + $0x30] sm:$0xff] %vm4147, %v5652
  %5669 = vst.msk [vmem:[%s7 + $0x38] sm:$0xff] %vm4147, %v5653
  %5670 = vst.msk [vmem:[%s7 + $0x40] sm:$0xff] %vm4147, %v5654
  %5671 = vst.msk [vmem:[%s7 + $0x48] sm:$0xff] %vm4147, %v5655
  %5672 = vst.msk [vmem:[%s7 + $0x50] sm:$0xff] %vm4147, %v5656
  %5673 = vst.msk [vmem:[%s7 + $0x58] sm:$0xff] %vm4147, %v5657
  %5674 = vst.msk [vmem:[%s7 + $0x60] sm:$0xff] %vm4147, %v5658
  %5675 = vst.msk [vmem:[%s7 + $0x68] sm:$0xff] %vm4147, %v5659
  %5676 = vst.msk [vmem:[%s7 + $0x70] sm:$0xff] %vm4147, %v5660
  %5677 = vst.msk [vmem:[%s7 + $0x78] sm:$0xff] %vm4147, %v5661
  // Predicated region
  $region30: #{tpu_custom_call.1} parent=0 // pred_check
    _
  $region31: #{tpu_custom_call.1} parent=0 // pred_check_branch
    %5679 = sbr.rel (0) target = $region33
  $region32: #{tpu_custom_call.1} parent=0 // pred_region
    _
  $region33: #{tpu_custom_call.1} parent=0 // pred_fallthru
    _
  // Predicated region
  $region34: #{tpu_custom_call.1} parent=0 // pred_check
    _
  $region35: #{tpu_custom_call.1} parent=0 // pred_check_branch
    %5681 = sbr.rel (0) target = $region37
  $region36: #{tpu_custom_call.1} parent=0 // pred_region
    _
  $region37: #{tpu_custom_call.1} parent=0 // pred_fallthru
    _

</llo_original>
